<compile_context>
chip_gen: v5e
topology: v5e:2x2
jax: 0.10.0
libtpu: 0.0.40
codegen_flags: <defaults>
</compile_context>

<pallas_src>
import functools

import jax
import jax.numpy as jnp
from jax import lax
from jax.experimental import pallas as pl
from jax.experimental.pallas import tpu as pltpu


_FEAT_DIM = 2048     # sharedNet output features
_COMP_DIM = 256      # self.compress output
_CLS_PAD = 128       # lane-dense padded classifier width (>= num_classes)
_IN_DTYPE = jnp.bfloat16   # image DMA dtype (upcast to f32 in-kernel)


def _round_up(x, m):
    return ((x + m - 1) // m) * m


# ----------------------------------------------------------------------------
# Fused kernel (one grid step = one batch tile of source AND target rows)
# ----------------------------------------------------------------------------

def _fused_kernel(src_ref, tgt_ref, bw_ref, bb_ref, cw_ref, cb_ref,
                  clsw_ref, clsb_ref, beta_ref,
                  clf_ref, loss_ref,
                  gram_acc, sum_s_acc, sum_t_acc,
                  *, n_src, n_tgt, tile_n, n_ch, hw, with_coral):
    """src_ref/tgt_ref : (tile_n, C*HW) bf16    image tiles
       bw_ref          : (C, 2048)      f32     backbone stand-in (mean scale folded)
       bb_ref          : (1, 2048)      f32
       cw_ref          : (2048, 256)    bf16    compress
       cb_ref          : (1, 256)       f32
       clsw_ref        : (256, 128)     bf16    cls_fc, zero-padded to 128 cols
       clsb_ref        : (1, 128)       f32
       beta_ref        : (1, 1)         f32     SMEM
       clf_ref         : (tile_n, 128)  f32     out (source rows only)
       loss_ref        : (1, 1)         f32     out (written at last grid step)
       gram_acc        : (256, 256)     f32     VMEM scratch accumulator
       sum_s_acc/sum_t_acc : (1, 256)   f32     VMEM scratch accumulators
    """
    i = pl.program_id(0)

    def embed(x_ref):
        # Backbone stand-in: per-channel global sum-pool (static lane slices)
        # + rank-1 VPU broadcast-FMA to 2048 features (K=3 matmul avoided),
        # ReLU, then compress on the MXU with bf16 operands / f32 accumulate.
        acc = jnp.zeros((tile_n, _FEAT_DIM), jnp.float32)
        for ch in range(n_ch):
            xc = x_ref[:, pl.ds(ch * hw, hw)].astype(jnp.float32)   # (tile_n, hw)
            pooled_c = jnp.sum(xc, axis=1, keepdims=True)           # (tile_n, 1) f32
            acc = acc + pooled_c * bw_ref[pl.ds(ch, 1), :]          # rank-1 FMA
        feat = jnp.maximum(acc + bb_ref[...], 0.0)                  # (tile_n, 2048)
        comp = jnp.dot(feat.astype(jnp.bfloat16), cw_ref[...],
                       preferred_element_type=jnp.float32) + cb_ref[...]
        return comp                                                  # (tile_n, 256) f32

    comp_s = embed(src_ref)

    # Classifier on SOURCE rows only (reference: clf = cls_fc(compress(source))).
    # Lane-dense 128-wide output; the num_classes slice happens outside.
    clf_ref[...] = jnp.dot(comp_s.astype(jnp.bfloat16), clsw_ref[...],
                           preferred_element_type=jnp.float32) + clsb_ref[...]

    if with_coral:
        comp_t = embed(tgt_ref)

        @pl.when(i == 0)
        def _init():
            gram_acc[...] = jnp.zeros_like(gram_acc)
            sum_s_acc[...] = jnp.zeros_like(sum_s_acc)
            sum_t_acc[...] = jnp.zeros_like(sum_t_acc)

        beta = beta_ref[0, 0]
        d = comp_s.shape[-1]
        dn = (((0,), (0,)), ((), ()))            # contract over the row axis

        # Zero padded rows so they don't pollute the covariance statistics.
        rows = i * tile_n + lax.broadcasted_iota(jnp.int32, (tile_n, 1), 0)
        cs_m = comp_s * (rows < n_src).astype(jnp.float32)
        ct_m = comp_t * (rows < n_tgt).astype(jnp.float32)

        sum_s_acc[...] += jnp.sum(cs_m, axis=0, keepdims=True)
        sum_t_acc[...] += jnp.sum(ct_m, axis=0, keepdims=True)

        # ONE fused gram per step: [cs/(ns-1) ; -(1+beta)*ct/(nt-1)]^T @ [cs ; ct]
        # bf16 operands (single MXU pass on v6e/v7x), f32 accumulation.
        s_coef = 1.0 / (float(n_src) - 1.0)
        t_coef = -(1.0 + beta) / (float(n_tgt) - 1.0)
        lhs = jnp.concatenate([cs_m * s_coef, ct_m * t_coef],
                              axis=0).astype(jnp.bfloat16)           # (2*tile_n, d)
        rhs = jnp.concatenate([cs_m, ct_m], axis=0).astype(jnp.bfloat16)
        gram_acc[...] += lax.dot_general(lhs, rhs, dn,
                                         preferred_element_type=jnp.float32)

        @pl.when(i == pl.num_programs(0) - 1)
        def _finalize():
            sum_s = sum_s_acc[...]
            sum_t = sum_t_acc[...]
            mean_s = lax.dot_general(sum_s, sum_s, dn,
                                     preferred_element_type=jnp.float32)
            mean_t = lax.dot_general(sum_t, sum_t, dn,
                                     preferred_element_type=jnp.float32)
            diff = (gram_acc[...]
                    - mean_s * (1.0 / (float(n_src) * (float(n_src) - 1.0)))
                    + mean_t * ((1.0 + beta) / (float(n_tgt) * (float(n_tgt) - 1.0))))
            ssq = jnp.sum(diff * diff, axis=(0, 1), keepdims=True)    # (1, 1)
            # Matches PyTorch reference: (cs-(1+b)ct).pow(2).sum().sqrt() / (4*d*d)
            loss_ref[...] = jnp.sqrt(ssq) * (1.0 / (4.0 * float(d) * float(d)))
    else:
        loss_ref[...] = jnp.zeros_like(loss_ref)


# ----------------------------------------------------------------------------
# Parameters
# ----------------------------------------------------------------------------

def init_params(key, in_channels, num_classes, spatial_size):
    """Weights stored as (in, out) (PyTorch weight.T); MXU operands in bf16."""
    k1, k2, k3, k4, k5, k6 = jax.random.split(key, 6)

    # Backbone stand-in; 1/(H*W) mean-pool scale folded into the weight.
    backbone_w = (jax.random.normal(k1, (in_channels, _FEAT_DIM), jnp.float32)
                  * 0.05 / float(spatial_size))
    backbone_b = jax.random.normal(k2, (_FEAT_DIM,), jnp.float32) * 0.01

    # self.compress = nn.Linear(2048, 256)
    compress_w = (jax.random.normal(k3, (_FEAT_DIM, _COMP_DIM), jnp.float32)
                  * (1.0 / jnp.sqrt(float(_FEAT_DIM))))
    compress_b = jax.random.normal(k4, (_COMP_DIM,), jnp.float32) * 0.01

    # self.cls_fc = nn.Linear(256, num_classes); weight ~ N(0, 0.005)
    cls_w = jax.random.normal(k5, (_COMP_DIM, num_classes), jnp.float32) * 0.005
    cls_b = jax.random.normal(k6, (num_classes,), jnp.float32) * 0.01

    # Lane-dense padding of the classifier to 128 output columns (padding stays 0).
    cls_w_pad = jnp.zeros((_COMP_DIM, _CLS_PAD), jnp.float32).at[:, :num_classes].set(cls_w)
    cls_b_pad = jnp.zeros((_CLS_PAD,), jnp.float32).at[:num_classes].set(cls_b)

    return {
        "backbone_w": backbone_w.astype(jnp.float32),                      # (C, 2048) VPU FMA
        "backbone_b": backbone_b.reshape(1, _FEAT_DIM).astype(jnp.float32),
        "compress_w": compress_w.astype(jnp.bfloat16),
        "compress_b": compress_b.reshape(1, _COMP_DIM).astype(jnp.float32),
        "cls_w": cls_w_pad.astype(jnp.bfloat16),
        "cls_b": cls_b_pad.reshape(1, _CLS_PAD).astype(jnp.float32),
    }


# ----------------------------------------------------------------------------
# Forward wrapper
# ----------------------------------------------------------------------------

def _pad_rows(x, n_rows):
    if x.shape[0] == n_rows:
        return x
    return jnp.zeros((n_rows,) + x.shape[1:], x.dtype).at[:x.shape[0]].set(x)


def relaxed_deep_coral_forward(params, source, target, beta, num_classes,
                               is_train=True):
    """Mirrors Relaxed_DeepCORAL.forward(source, target, beta)."""
    B, C, H, W = source.shape
    hw = H * W
    chw = C * hw

    # 2-D (N, C*HW) bf16 layout: no sublane padding of the C axis, half the
    # input HBM traffic; channels are split back inside the kernel with
    # static lane slices.  Spatial sums are done in f32 in-kernel.
    src2d = source.reshape(B, chw).astype(_IN_DTYPE)

    if is_train:
        Bt = int(target.shape[0])
        tgt2d = target.reshape(Bt, chw).astype(_IN_DTYPE)
    else:
        Bt = 0
        tgt2d = None

    # Batch tile: multiple of 16 (bf16 sublane alignment for the gram operands).
    tile_n = min(128, _round_up(max(B, Bt, 1), 16))
    n_tiles = -(-max(B, Bt, 1) // tile_n)
    n_pad = n_tiles * tile_n

    src_p = _pad_rows(src2d, n_pad)
    if is_train:
        tgt_p = _pad_rows(tgt2d, n_pad)
        tgt_map = lambda i: (i, 0)
    else:
        tgt_p = jnp.zeros((tile_n, chw), _IN_DTYPE)   # unused dummy tile
        tgt_map = lambda i: (0, 0)

    beta_arr = jnp.asarray(beta, jnp.float32).reshape(1, 1)

    kernel = functools.partial(
        _fused_kernel, n_src=B, n_tgt=Bt, tile_n=tile_n, n_ch=C, hw=hw,
        with_coral=bool(is_train))

    grid_spec = pltpu.PrefetchScalarGridSpec(
        num_scalar_prefetch=0,
        grid=(n_tiles,),
        in_specs=[
            pl.BlockSpec((tile_n, chw), lambda i: (i, 0)),            # source tile
            pl.BlockSpec((tile_n, chw), tgt_map),                     # target tile
            pl.BlockSpec((C, _FEAT_DIM), lambda i: (0, 0)),           # backbone_w
            pl.BlockSpec((1, _FEAT_DIM), lambda i: (0, 0)),           # backbone_b
            pl.BlockSpec((_FEAT_DIM, _COMP_DIM), lambda i: (0, 0)),   # compress_w
            pl.BlockSpec((1, _COMP_DIM), lambda i: (0, 0)),           # compress_b
            pl.BlockSpec((_COMP_DIM, _CLS_PAD), lambda i: (0, 0)),    # cls_w
            pl.BlockSpec((1, _CLS_PAD), lambda i: (0, 0)),            # cls_b
            pl.BlockSpec(memory_space=pltpu.MemorySpace.SMEM),        # beta scalar
        ],
        out_specs=(
            pl.BlockSpec((tile_n, _CLS_PAD), lambda i: (i, 0)),       # clf (lane-dense)
            pl.BlockSpec((1, 1), lambda i: (0, 0)),                   # loss (resident)
        ),
        scratch_shapes=[
            pltpu.VMEM((_COMP_DIM, _COMP_DIM), jnp.float32),          # gram accumulator
            pltpu.VMEM((1, _COMP_DIM), jnp.float32),                  # source row-sum
            pltpu.VMEM((1, _COMP_DIM), jnp.float32),                  # target row-sum
        ],
    )

    clf_pad, loss = pl.pallas_call(
        kernel,
        out_shape=(
            jax.ShapeDtypeStruct((n_pad, _CLS_PAD), jnp.float32),
            jax.ShapeDtypeStruct((1, 1), jnp.float32),
        ),
        grid_spec=grid_spec,
        compiler_params=pltpu.CompilerParams(
            # Batch axis carries the CORAL accumulators -> reduction axis.
            # TODO(synk): on v7x the per-row stage could additionally be split
            # across the 2 TensorCores with a cross-core combine of the gram.
            dimension_semantics=("arbitrary",),
            # Well below v7x's 64 MiB physical VMEM with headroom; actual usage
            # at these tile sizes is a few MiB.
            vmem_limit_bytes=48 * 1024 * 1024,
        ),
    )(src_p, tgt_p,
      params["backbone_w"], params["backbone_b"],
      params["compress_w"], params["compress_b"],
      params["cls_w"], params["cls_b"], beta_arr)

    clf = clf_pad[:B, :num_classes]
    coral_loss = loss[0, 0] if is_train else jnp.float32(0.0)
    return clf, coral_loss


# ----------------------------------------------------------------------------
# Main
# ----------------------------------------------------------------------------

if __name__ == "__main__":
    key = jax.random.PRNGKey(0)
    k_param, k_src, k_tgt = jax.random.split(key, 3)

    B, C, H, W = 2, 3, 16, 16          # small NCHW images (ResNet-style 3 channels)
    num_classes = 10
    beta = 0.5

    params = init_params(k_param, C, num_classes, H * W)
    source = jax.random.normal(k_src, (B, C, H, W), jnp.float32)
    target = jax.random.normal(k_tgt, (B, C, H, W), jnp.float32)

    fwd = jax.jit(lambda p, s, t: relaxed_deep_coral_forward(
        p, s, t, beta, num_classes, is_train=True))

    clf, coral_loss = fwd(params, source, target)
    jax.block_until_ready((clf, coral_loss))

    assert clf.shape == (B, num_classes)
    assert coral_loss.shape == ()
    assert bool(jnp.isfinite(coral_loss))
    print("KERNEL_OK")
</pallas_src>

<mosaic_0001>
module attributes {stable_mosaic.version = 11 : i64} {
  func.func @_fused_kernel(%arg0: i32, %arg1: memref<16x768xbf16, #tpu.memory_space<vmem>>, %arg2: memref<16x768xbf16, #tpu.memory_space<vmem>>, %arg3: memref<3x2048xf32, #tpu.memory_space<vmem>>, %arg4: memref<1x2048xf32, #tpu.memory_space<vmem>>, %arg5: memref<2048x256xbf16, #tpu.memory_space<vmem>>, %arg6: memref<1x256xf32, #tpu.memory_space<vmem>>, %arg7: memref<256x128xbf16, #tpu.memory_space<vmem>>, %arg8: memref<1x128xf32, #tpu.memory_space<vmem>>, %arg9: memref<1x1xf32, #tpu.memory_space<smem>>, %arg10: memref<16x128xf32, #tpu.memory_space<vmem>>, %arg11: memref<1x1xf32, #tpu.memory_space<vmem>>, %arg12: memref<256x256xf32, #tpu.memory_space<vmem>>, %arg13: memref<1x256xf32, #tpu.memory_space<vmem>>, %arg14: memref<1x256xf32, #tpu.memory_space<vmem>>) attributes {dimension_semantics = [#tpu.dimension_semantics<arbitrary>], iteration_bounds = array<i64: 1>, scalar_prefetch = 0 : i64, scratch_operands = 3 : i64, tpu.core_type = #tpu.core_type<tc>, window_params = [{transform_indices = @transform_0, window_bounds = array<i64: 16, 768>}, {transform_indices = @transform_1, window_bounds = array<i64: 16, 768>}, {pipeline_mode = #tpu.pipeline_mode<synchronous>, transform_indices = @transform_2, window_bounds = array<i64: 3, 2048>}, {pipeline_mode = #tpu.pipeline_mode<synchronous>, transform_indices = @transform_3, window_bounds = array<i64: 1, 2048>}, {pipeline_mode = #tpu.pipeline_mode<synchronous>, transform_indices = @transform_4, window_bounds = array<i64: 2048, 256>}, {pipeline_mode = #tpu.pipeline_mode<synchronous>, transform_indices = @transform_5, window_bounds = array<i64: 1, 256>}, {pipeline_mode = #tpu.pipeline_mode<synchronous>, transform_indices = @transform_6, window_bounds = array<i64: 256, 128>}, {pipeline_mode = #tpu.pipeline_mode<synchronous>, transform_indices = @transform_7, window_bounds = array<i64: 1, 128>}, {transform_indices = @transform_8, window_bounds = array<i64: 1, 1>}, {transform_indices = @transform_9, window_bounds = array<i64: 16, 128>}, {pipeline_mode = #tpu.pipeline_mode<synchronous>, transform_indices = @transform_10, window_bounds = array<i64: 1, 1>}]} {
    %cst = arith.constant 0.000000e+00 : f32
    %0 = vector.broadcast %cst : f32 to vector<16x2048xf32>
    %c0 = arith.constant 0 : index
    %c0_0 = arith.constant 0 : index
    %1 = vector.load %arg1[%c0, %c0_0] : memref<16x768xbf16, #tpu.memory_space<vmem>>, vector<16x256xbf16>
    %2 = arith.extf %1 : vector<16x256xbf16> to vector<16x256xf32>
    %cst_1 = arith.constant dense<0.000000e+00> : vector<16xf32>
    %3 = vector.multi_reduction <add>, %2, %cst_1 [1] : vector<16x256xf32> to vector<16xf32>
    %4 = vector.shape_cast %3 : vector<16xf32> to vector<16x1xf32>
    %c0_2 = arith.constant 0 : index
    %c0_3 = arith.constant 0 : index
    %5 = vector.load %arg3[%c0_2, %c0_3] : memref<3x2048xf32, #tpu.memory_space<vmem>>, vector<1x2048xf32>
    %6 = vector.broadcast %4 : vector<16x1xf32> to vector<16x2048xf32>
    %7 = vector.broadcast %5 : vector<1x2048xf32> to vector<16x2048xf32>
    %8 = arith.mulf %6, %7 : vector<16x2048xf32>
    %9 = arith.addf %0, %8 : vector<16x2048xf32>
    %c0_4 = arith.constant 0 : index
    %c256 = arith.constant 256 : index
    %10 = vector.load %arg1[%c0_4, %c256] : memref<16x768xbf16, #tpu.memory_space<vmem>>, vector<16x256xbf16>
    %11 = arith.extf %10 : vector<16x256xbf16> to vector<16x256xf32>
    %cst_5 = arith.constant dense<0.000000e+00> : vector<16xf32>
    %12 = vector.multi_reduction <add>, %11, %cst_5 [1] : vector<16x256xf32> to vector<16xf32>
    %13 = vector.shape_cast %12 : vector<16xf32> to vector<16x1xf32>
    %c1 = arith.constant 1 : index
    %c0_6 = arith.constant 0 : index
    %14 = vector.load %arg3[%c1, %c0_6] : memref<3x2048xf32, #tpu.memory_space<vmem>>, vector<1x2048xf32>
    %15 = vector.broadcast %13 : vector<16x1xf32> to vector<16x2048xf32>
    %16 = vector.broadcast %14 : vector<1x2048xf32> to vector<16x2048xf32>
    %17 = arith.mulf %15, %16 : vector<16x2048xf32>
    %18 = arith.addf %9, %17 : vector<16x2048xf32>
    %c0_7 = arith.constant 0 : index
    %c512 = arith.constant 512 : index
    %19 = vector.load %arg1[%c0_7, %c512] : memref<16x768xbf16, #tpu.memory_space<vmem>>, vector<16x256xbf16>
    %20 = arith.extf %19 : vector<16x256xbf16> to vector<16x256xf32>
    %cst_8 = arith.constant dense<0.000000e+00> : vector<16xf32>
    %21 = vector.multi_reduction <add>, %20, %cst_8 [1] : vector<16x256xf32> to vector<16xf32>
    %22 = vector.shape_cast %21 : vector<16xf32> to vector<16x1xf32>
    %c2 = arith.constant 2 : index
    %c0_9 = arith.constant 0 : index
    %23 = vector.load %arg3[%c2, %c0_9] : memref<3x2048xf32, #tpu.memory_space<vmem>>, vector<1x2048xf32>
    %24 = vector.broadcast %22 : vector<16x1xf32> to vector<16x2048xf32>
    %25 = vector.broadcast %23 : vector<1x2048xf32> to vector<16x2048xf32>
    %26 = arith.mulf %24, %25 : vector<16x2048xf32>
    %27 = arith.addf %18, %26 : vector<16x2048xf32>
    %c0_10 = arith.constant 0 : index
    %c0_11 = arith.constant 0 : index
    %28 = vector.load %arg4[%c0_10, %c0_11] : memref<1x2048xf32, #tpu.memory_space<vmem>>, vector<1x2048xf32>
    %29 = vector.broadcast %28 : vector<1x2048xf32> to vector<16x2048xf32>
    %30 = arith.addf %27, %29 : vector<16x2048xf32>
    %cst_12 = arith.constant 0.000000e+00 : f32
    %31 = vector.broadcast %cst_12 : f32 to vector<16x2048xf32>
    %32 = arith.maximumf %30, %31 : vector<16x2048xf32>
    %33 = arith.truncf %32 : vector<16x2048xf32> to vector<16x2048xbf16>
    %c0_13 = arith.constant 0 : index
    %c0_14 = arith.constant 0 : index
    %34 = vector.load %arg5[%c0_13, %c0_14] : memref<2048x256xbf16, #tpu.memory_space<vmem>>, vector<2048x256xbf16>
    %cst_15 = arith.constant dense<0.000000e+00> : vector<16x256xf32>
    %35 = tpu.matmul %33, %34, %cst_15 {dimension_numbers = #tpu.dot_dimension_numbers<[1], [0], [0], [1], [0, 0, 1, 1], [], []>} : vector<16x2048xbf16>, vector<2048x256xbf16>, vector<16x256xf32> -> vector<16x256xf32>
    %c0_16 = arith.constant 0 : index
    %c0_17 = arith.constant 0 : index
    %36 = vector.load %arg6[%c0_16, %c0_17] : memref<1x256xf32, #tpu.memory_space<vmem>>, vector<1x256xf32>
    %37 = vector.broadcast %36 : vector<1x256xf32> to vector<16x256xf32>
    %38 = arith.addf %35, %37 : vector<16x256xf32>
    %39 = arith.truncf %38 : vector<16x256xf32> to vector<16x256xbf16>
    %c0_18 = arith.constant 0 : index
    %c0_19 = arith.constant 0 : index
    %40 = vector.load %arg7[%c0_18, %c0_19] : memref<256x128xbf16, #tpu.memory_space<vmem>>, vector<256x128xbf16>
    %cst_20 = arith.constant dense<0.000000e+00> : vector<16x128xf32>
    %41 = tpu.matmul %39, %40, %cst_20 {dimension_numbers = #tpu.dot_dimension_numbers<[1], [0], [0], [1], [0, 0, 1, 1], [], []>} : vector<16x256xbf16>, vector<256x128xbf16>, vector<16x128xf32> -> vector<16x128xf32>
    %c0_21 = arith.constant 0 : index
    %c0_22 = arith.constant 0 : index
    %42 = vector.load %arg8[%c0_21, %c0_22] : memref<1x128xf32, #tpu.memory_space<vmem>>, vector<1x128xf32>
    %43 = vector.broadcast %42 : vector<1x128xf32> to vector<16x128xf32>
    %44 = arith.addf %41, %43 : vector<16x128xf32>
    %c0_23 = arith.constant 0 : index
    %c0_24 = arith.constant 0 : index
    %45 = vector.load %arg10[%c0_23, %c0_24] : memref<16x128xf32, #tpu.memory_space<vmem>>, vector<16x128xf32>
    tpu.vector_store %arg10[%c0_23, %c0_24], %44 {strides = array<i32>} : memref<16x128xf32, #tpu.memory_space<vmem>>, vector<16x128xf32>,
    %cst_25 = arith.constant 0.000000e+00 : f32
    %46 = vector.broadcast %cst_25 : f32 to vector<16x2048xf32>
    %c0_26 = arith.constant 0 : index
    %c0_27 = arith.constant 0 : index
    %47 = vector.load %arg2[%c0_26, %c0_27] : memref<16x768xbf16, #tpu.memory_space<vmem>>, vector<16x256xbf16>
    %48 = arith.extf %47 : vector<16x256xbf16> to vector<16x256xf32>
    %cst_28 = arith.constant dense<0.000000e+00> : vector<16xf32>
    %49 = vector.multi_reduction <add>, %48, %cst_28 [1] : vector<16x256xf32> to vector<16xf32>
    %50 = vector.shape_cast %49 : vector<16xf32> to vector<16x1xf32>
    %c0_29 = arith.constant 0 : index
    %c0_30 = arith.constant 0 : index
    %51 = vector.load %arg3[%c0_29, %c0_30] : memref<3x2048xf32, #tpu.memory_space<vmem>>, vector<1x2048xf32>
    %52 = vector.broadcast %50 : vector<16x1xf32> to vector<16x2048xf32>
    %53 = vector.broadcast %51 : vector<1x2048xf32> to vector<16x2048xf32>
    %54 = arith.mulf %52, %53 : vector<16x2048xf32>
    %55 = arith.addf %46, %54 : vector<16x2048xf32>
    %c0_31 = arith.constant 0 : index
    %c256_32 = arith.constant 256 : index
    %56 = vector.load %arg2[%c0_31, %c256_32] : memref<16x768xbf16, #tpu.memory_space<vmem>>, vector<16x256xbf16>
    %57 = arith.extf %56 : vector<16x256xbf16> to vector<16x256xf32>
    %cst_33 = arith.constant dense<0.000000e+00> : vector<16xf32>
    %58 = vector.multi_reduction <add>, %57, %cst_33 [1] : vector<16x256xf32> to vector<16xf32>
    %59 = vector.shape_cast %58 : vector<16xf32> to vector<16x1xf32>
    %c1_34 = arith.constant 1 : index
    %c0_35 = arith.constant 0 : index
    %60 = vector.load %arg3[%c1_34, %c0_35] : memref<3x2048xf32, #tpu.memory_space<vmem>>, vector<1x2048xf32>
    %61 = vector.broadcast %59 : vector<16x1xf32> to vector<16x2048xf32>
    %62 = vector.broadcast %60 : vector<1x2048xf32> to vector<16x2048xf32>
    %63 = arith.mulf %61, %62 : vector<16x2048xf32>
    %64 = arith.addf %55, %63 : vector<16x2048xf32>
    %c0_36 = arith.constant 0 : index
    %c512_37 = arith.constant 512 : index
    %65 = vector.load %arg2[%c0_36, %c512_37] : memref<16x768xbf16, #tpu.memory_space<vmem>>, vector<16x256xbf16>
    %66 = arith.extf %65 : vector<16x256xbf16> to vector<16x256xf32>
    %cst_38 = arith.constant dense<0.000000e+00> : vector<16xf32>
    %67 = vector.multi_reduction <add>, %66, %cst_38 [1] : vector<16x256xf32> to vector<16xf32>
    %68 = vector.shape_cast %67 : vector<16xf32> to vector<16x1xf32>
    %c2_39 = arith.constant 2 : index
    %c0_40 = arith.constant 0 : index
    %69 = vector.load %arg3[%c2_39, %c0_40] : memref<3x2048xf32, #tpu.memory_space<vmem>>, vector<1x2048xf32>
    %70 = vector.broadcast %68 : vector<16x1xf32> to vector<16x2048xf32>
    %71 = vector.broadcast %69 : vector<1x2048xf32> to vector<16x2048xf32>
    %72 = arith.mulf %70, %71 : vector<16x2048xf32>
    %73 = arith.addf %64, %72 : vector<16x2048xf32>
    %c0_41 = arith.constant 0 : index
    %c0_42 = arith.constant 0 : index
    %74 = vector.load %arg4[%c0_41, %c0_42] : memref<1x2048xf32, #tpu.memory_space<vmem>>, vector<1x2048xf32>
    %75 = vector.broadcast %74 : vector<1x2048xf32> to vector<16x2048xf32>
    %76 = arith.addf %73, %75 : vector<16x2048xf32>
    %cst_43 = arith.constant 0.000000e+00 : f32
    %77 = vector.broadcast %cst_43 : f32 to vector<16x2048xf32>
    %78 = arith.maximumf %76, %77 : vector<16x2048xf32>
    %79 = arith.truncf %78 : vector<16x2048xf32> to vector<16x2048xbf16>
    %c0_44 = arith.constant 0 : index
    %c0_45 = arith.constant 0 : index
    %80 = vector.load %arg5[%c0_44, %c0_45] : memref<2048x256xbf16, #tpu.memory_space<vmem>>, vector<2048x256xbf16>
    %cst_46 = arith.constant dense<0.000000e+00> : vector<16x256xf32>
    %81 = tpu.matmul %79, %80, %cst_46 {dimension_numbers = #tpu.dot_dimension_numbers<[1], [0], [0], [1], [0, 0, 1, 1], [], []>} : vector<16x2048xbf16>, vector<2048x256xbf16>, vector<16x256xf32> -> vector<16x256xf32>
    %c0_47 = arith.constant 0 : index
    %c0_48 = arith.constant 0 : index
    %82 = vector.load %arg6[%c0_47, %c0_48] : memref<1x256xf32, #tpu.memory_space<vmem>>, vector<1x256xf32>
    %83 = vector.broadcast %82 : vector<1x256xf32> to vector<16x256xf32>
    %84 = arith.addf %81, %83 : vector<16x256xf32>
    %c0_i32 = arith.constant 0 : i32
    %85 = arith.cmpi eq, %arg0, %c0_i32 : i32
    %86 = arith.extui %85 : i1 to i32
    %c0_i32_49 = arith.constant 0 : i32
    %87 = arith.cmpi ne, %86, %c0_i32_49 : i32
    scf.if %87 {
      %cst_74 = arith.constant 0.000000e+00 : f32
      %133 = vector.broadcast %cst_74 : f32 to vector<256x256xf32>
      %c0_75 = arith.constant 0 : index
      %c0_76 = arith.constant 0 : index
      %134 = vector.load %arg12[%c0_75, %c0_76] : memref<256x256xf32, #tpu.memory_space<vmem>>, vector<256x256xf32>
      tpu.vector_store %arg12[%c0_75, %c0_76], %133 {strides = array<i32>} : memref<256x256xf32, #tpu.memory_space<vmem>>, vector<256x256xf32>,
      %cst_77 = arith.constant 0.000000e+00 : f32
      %135 = vector.broadcast %cst_77 : f32 to vector<1x256xf32>
      %c0_78 = arith.constant 0 : index
      %c0_79 = arith.constant 0 : index
      %136 = vector.load %arg13[%c0_78, %c0_79] : memref<1x256xf32, #tpu.memory_space<vmem>>, vector<1x256xf32>
      tpu.vector_store %arg13[%c0_78, %c0_79], %135 {strides = array<i32>} : memref<1x256xf32, #tpu.memory_space<vmem>>, vector<1x256xf32>,
      %cst_80 = arith.constant 0.000000e+00 : f32
      %137 = vector.broadcast %cst_80 : f32 to vector<1x256xf32>
      %c0_81 = arith.constant 0 : index
      %c0_82 = arith.constant 0 : index
      %138 = vector.load %arg14[%c0_81, %c0_82] : memref<1x256xf32, #tpu.memory_space<vmem>>, vector<1x256xf32>
      tpu.vector_store %arg14[%c0_81, %c0_82], %137 {strides = array<i32>} : memref<1x256xf32, #tpu.memory_space<vmem>>, vector<1x256xf32>,
    } else {
    }
    %c0_50 = arith.constant 0 : index
    %c0_51 = arith.constant 0 : index
    %88 = memref.load %arg9[%c0_50, %c0_51] : memref<1x1xf32, #tpu.memory_space<smem>>
    %c16_i32 = arith.constant 16 : i32
    %89 = arith.muli %arg0, %c16_i32 : i32
    %90 = tpu.iota {dimensions = array<i32: 0>} : vector<16x1xi32>
    %91 = vector.broadcast %89 : i32 to vector<16x1xi32>
    %92 = arith.addi %91, %90 : vector<16x1xi32>
    %c2_i32 = arith.constant 2 : i32
    %93 = vector.broadcast %c2_i32 : i32 to vector<16x1xi32>
    %94 = arith.cmpi slt, %92, %93 : vector<16x1xi32>
    %95 = arith.extui %94 : vector<16x1xi1> to vector<16x1xi32>
    %96 = arith.sitofp %95 : vector<16x1xi32> to vector<16x1xf32>
    %97 = vector.broadcast %96 : vector<16x1xf32> to vector<16x256xf32>
    %98 = arith.mulf %38, %97 : vector<16x256xf32>
    %c2_i32_52 = arith.constant 2 : i32
    %99 = vector.broadcast %c2_i32_52 : i32 to vector<16x1xi32>
    %100 = arith.cmpi slt, %92, %99 : vector<16x1xi32>
    %101 = arith.extui %100 : vector<16x1xi1> to vector<16x1xi32>
    %102 = arith.sitofp %101 : vector<16x1xi32> to vector<16x1xf32>
    %103 = vector.broadcast %102 : vector<16x1xf32> to vector<16x256xf32>
    %104 = arith.mulf %84, %103 : vector<16x256xf32>
    %c0_53 = arith.constant 0 : index
    %c0_54 = arith.constant 0 : index
    %105 = vector.load %arg13[%c0_53, %c0_54] : memref<1x256xf32, #tpu.memory_space<vmem>>, vector<1x256xf32>
    %cst_55 = arith.constant dense<0.000000e+00> : vector<256xf32>
    %106 = vector.multi_reduction <add>, %98, %cst_55 [0] : vector<16x256xf32> to vector<256xf32>
    %107 = vector.shape_cast %106 : vector<256xf32> to vector<1x256xf32>
    %108 = arith.addf %105, %107 : vector<1x256xf32>
    %c0_56 = arith.constant 0 : index
    %c0_57 = arith.constant 0 : index
    %109 = vector.load %arg13[%c0_56, %c0_57] : memref<1x256xf32, #tpu.memory_space<vmem>>, vector<1x256xf32>
    tpu.vector_store %arg13[%c0_56, %c0_57], %108 {strides = array<i32>} : memref<1x256xf32, #tpu.memory_space<vmem>>, vector<1x256xf32>,
    %c0_58 = arith.constant 0 : index
    %c0_59 = arith.constant 0 : index
    %110 = vector.load %arg14[%c0_58, %c0_59] : memref<1x256xf32, #tpu.memory_space<vmem>>, vector<1x256xf32>
    %cst_60 = arith.constant dense<0.000000e+00> : vector<256xf32>
    %111 = vector.multi_reduction <add>, %104, %cst_60 [0] : vector<16x256xf32> to vector<256xf32>
    %112 = vector.shape_cast %111 : vector<256xf32> to vector<1x256xf32>
    %113 = arith.addf %110, %112 : vector<1x256xf32>
    %c0_61 = arith.constant 0 : index
    %c0_62 = arith.constant 0 : index
    %114 = vector.load %arg14[%c0_61, %c0_62] : memref<1x256xf32, #tpu.memory_space<vmem>>, vector<1x256xf32>
    tpu.vector_store %arg14[%c0_61, %c0_62], %113 {strides = array<i32>} : memref<1x256xf32, #tpu.memory_space<vmem>>, vector<1x256xf32>,
    %cst_63 = arith.constant 1.000000e+00 : f32
    %115 = arith.addf %cst_63, %88 : f32
    %cst_64 = arith.constant 0.000000e+00 : f32
    %116 = arith.subf %cst_64, %115 : f32
    %cst_65 = arith.constant 1.000000e+00 : f32
    %117 = arith.divf %116, %cst_65 : f32
    %cst_66 = arith.constant 1.000000e+00 : f32
    %118 = vector.broadcast %cst_66 : f32 to vector<16x256xf32>
    %119 = arith.mulf %98, %118 : vector<16x256xf32>
    %120 = vector.broadcast %117 : f32 to vector<16x256xf32>
    %121 = arith.mulf %104, %120 : vector<16x256xf32>
    %122 = tpu.concatenate %119, %121 in 0 : vector<16x256xf32>, vector<16x256xf32> -> vector<32x256xf32>
    %123 = arith.truncf %122 : vector<32x256xf32> to vector<32x256xbf16>
    %124 = tpu.concatenate %98, %104 in 0 : vector<16x256xf32>, vector<16x256xf32> -> vector<32x256xf32>
    %125 = arith.truncf %124 : vector<32x256xf32> to vector<32x256xbf16>
    %c0_67 = arith.constant 0 : index
    %c0_68 = arith.constant 0 : index
    %126 = vector.load %arg12[%c0_67, %c0_68] : memref<256x256xf32, #tpu.memory_space<vmem>>, vector<256x256xf32>
    %cst_69 = arith.constant dense<0.000000e+00> : vector<256x256xf32>
    %127 = tpu.matmul %123, %125, %cst_69 {dimension_numbers = #tpu.dot_dimension_numbers<[0], [0], [1], [1], [0, 1, 1, 1], [], []>} : vector<32x256xbf16>, vector<32x256xbf16>, vector<256x256xf32> -> vector<256x256xf32>
    %128 = arith.addf %126, %127 : vector<256x256xf32>
    %c0_70 = arith.constant 0 : index
    %c0_71 = arith.constant 0 : index
    %129 = vector.load %arg12[%c0_70, %c0_71] : memref<256x256xf32, #tpu.memory_space<vmem>>, vector<256x256xf32>
    tpu.vector_store %arg12[%c0_70, %c0_71], %128 {strides = array<i32>} : memref<256x256xf32, #tpu.memory_space<vmem>>, vector<256x256xf32>,
    %c0_i32_72 = arith.constant 0 : i32
    %130 = arith.cmpi eq, %arg0, %c0_i32_72 : i32
    %131 = arith.extui %130 : i1 to i32
    %c0_i32_73 = arith.constant 0 : i32
    %132 = arith.cmpi ne, %131, %c0_i32_73 : i32
    scf.if %132 {
      %c0_74 = arith.constant 0 : index
      %c0_75 = arith.constant 0 : index
      %133 = vector.load %arg13[%c0_74, %c0_75] : memref<1x256xf32, #tpu.memory_space<vmem>>, vector<1x256xf32>
      %c0_76 = arith.constant 0 : index
      %c0_77 = arith.constant 0 : index
      %134 = vector.load %arg14[%c0_76, %c0_77] : memref<1x256xf32, #tpu.memory_space<vmem>>, vector<1x256xf32>
      %cst_78 = arith.constant dense<0.000000e+00> : vector<256x256xf32>
      %135 = tpu.matmul %133, %133, %cst_78 {dimension_numbers = #tpu.dot_dimension_numbers<[0], [0], [1], [1], [0, 1, 1, 1], [], []>} : vector<1x256xf32>, vector<1x256xf32>, vector<256x256xf32> -> vector<256x256xf32>
      %cst_79 = arith.constant dense<0.000000e+00> : vector<256x256xf32>
      %136 = tpu.matmul %134, %134, %cst_79 {dimension_numbers = #tpu.dot_dimension_numbers<[0], [0], [1], [1], [0, 1, 1, 1], [], []>} : vector<1x256xf32>, vector<1x256xf32>, vector<256x256xf32> -> vector<256x256xf32>
      %c0_80 = arith.constant 0 : index
      %c0_81 = arith.constant 0 : index
      %137 = vector.load %arg12[%c0_80, %c0_81] : memref<256x256xf32, #tpu.memory_space<vmem>>, vector<256x256xf32>
      %cst_82 = arith.constant 5.000000e-01 : f32
      %138 = vector.broadcast %cst_82 : f32 to vector<256x256xf32>
      %139 = arith.mulf %135, %138 : vector<256x256xf32>
      %140 = arith.subf %137, %139 : vector<256x256xf32>
      %cst_83 = arith.constant 1.000000e+00 : f32
      %141 = arith.addf %cst_83, %88 : f32
      %cst_84 = arith.constant 2.000000e+00 : f32
      %142 = arith.divf %141, %cst_84 : f32
      %143 = vector.broadcast %142 : f32 to vector<256x256xf32>
      %144 = arith.mulf %136, %143 : vector<256x256xf32>
      %145 = arith.addf %140, %144 : vector<256x256xf32>
      %146 = arith.mulf %145, %145 : vector<256x256xf32>
      %147 = vector.shape_cast %146 : vector<256x256xf32> to vector<1x256x256xf32>
      %cst_85 = arith.constant dense<0.000000e+00> : vector<1xf32>
      %148 = vector.multi_reduction <add>, %147, %cst_85 [1, 2] : vector<1x256x256xf32> to vector<1xf32>
      %149 = vector.shape_cast %148 : vector<1xf32> to vector<1x1x1xf32>
      %150 = vector.extract %149[0, 0, 0] : f32 from vector<1x1x1xf32>
      %151 = vector.broadcast %150 : f32 to vector<1x1xf32>
      %152 = math.sqrt %151 : vector<1x1xf32>
      %cst_86 = arith.constant 3.81469727E-6 : f32
      %153 = vector.broadcast %cst_86 : f32 to vector<1x1xf32>
      %154 = arith.mulf %152, %153 : vector<1x1xf32>
      %c0_87 = arith.constant 0 : index
      %c0_88 = arith.constant 0 : index
      %155 = vector.load %arg11[%c0_87, %c0_88] : memref<1x1xf32, #tpu.memory_space<vmem>>, vector<1x1xf32>
      tpu.vector_store %arg11[%c0_87, %c0_88], %154 {strides = array<i32>} : memref<1x1xf32, #tpu.memory_space<vmem>>, vector<1x1xf32>,
    } else {
    }
    return
  }
  func.func @transform_0(%arg0: i32) -> (i32, i32) {
    %c0_i32 = arith.constant 0 : i32
    %c0_i32_0 = arith.constant 0 : i32
    return %arg0, %c0_i32 : i32, i32
  }
  func.func @transform_1(%arg0: i32) -> (i32, i32) {
    %c0_i32 = arith.constant 0 : i32
    %c0_i32_0 = arith.constant 0 : i32
    return %arg0, %c0_i32 : i32, i32
  }
  func.func @transform_2(%arg0: i32) -> (i32, i32) {
    %c0_i32 = arith.constant 0 : i32
    %c0_i32_0 = arith.constant 0 : i32
    %c0_i32_1 = arith.constant 0 : i32
    return %c0_i32, %c0_i32_0 : i32, i32
  }
  func.func @transform_3(%arg0: i32) -> (i32, i32) {
    %c0_i32 = arith.constant 0 : i32
    %c0_i32_0 = arith.constant 0 : i32
    %c0_i32_1 = arith.constant 0 : i32
    return %c0_i32, %c0_i32_0 : i32, i32
  }
  func.func @transform_4(%arg0: i32) -> (i32, i32) {
    %c0_i32 = arith.constant 0 : i32
    %c0_i32_0 = arith.constant 0 : i32
    %c0_i32_1 = arith.constant 0 : i32
    return %c0_i32, %c0_i32_0 : i32, i32
  }
  func.func @transform_5(%arg0: i32) -> (i32, i32) {
    %c0_i32 = arith.constant 0 : i32
    %c0_i32_0 = arith.constant 0 : i32
    %c0_i32_1 = arith.constant 0 : i32
    return %c0_i32, %c0_i32_0 : i32, i32
  }
  func.func @transform_6(%arg0: i32) -> (i32, i32) {
    %c0_i32 = arith.constant 0 : i32
    %c0_i32_0 = arith.constant 0 : i32
    %c0_i32_1 = arith.constant 0 : i32
    return %c0_i32, %c0_i32_0 : i32, i32
  }
  func.func @transform_7(%arg0: i32) -> (i32, i32) {
    %c0_i32 = arith.constant 0 : i32
    %c0_i32_0 = arith.constant 0 : i32
    %c0_i32_1 = arith.constant 0 : i32
    return %c0_i32, %c0_i32_0 : i32, i32
  }
  func.func @transform_8(%arg0: i32) -> (i32, i32) {
    %c0_i32 = arith.constant 0 : i32
    %c0_i32_0 = arith.constant 0 : i32
    %c0_i32_1 = arith.constant 0 : i32
    return %c0_i32, %c0_i32_0 : i32, i32
  }
  func.func @transform_9(%arg0: i32) -> (i32, i32) {
    %c0_i32 = arith.constant 0 : i32
    %c0_i32_0 = arith.constant 0 : i32
    return %arg0, %c0_i32 : i32, i32
  }
  func.func @transform_10(%arg0: i32) -> (i32, i32) {
    %c0_i32 = arith.constant 0 : i32
    %c0_i32_0 = arith.constant 0 : i32
    %c0_i32_1 = arith.constant 0 : i32
    return %c0_i32, %c0_i32_0 : i32, i32
  }
}

</mosaic_0001>

<llo_original>
// kernel: _lambda_.1
$region0: #{_lambda_.1}
  #allocation0 [shape = 'u32[]', space=smem, size = 0x4, offset = 0x4, fixed_abs, tag = 'smem constant byte address 0x4 - core index']
  #allocation1 [shape = 'u32[72,128]{1,0:T(1,128)}', space=vmem, size = 0x9000, scoped, tag = 'internal scratch']
  #allocation2 [shape = 'f32[256,256]{1,0:T(8,128)}', space=vmem, size = 0x40000, scoped, tag = 'scratch operand']
  #allocation3 [shape = 'f32[1,256]{1,0:T(1,128)}', space=vmem, size = 0x400, scoped, tag = 'scratch operand']
  #allocation4 [shape = 'f32[1,256]{1,0:T(1,128)}', space=vmem, size = 0x400, scoped, tag = 'scratch operand']
  #allocation5 [shape = 'f32[1,1]{1,0:T(1,128)S(6)}', space=smem, size = 0x200, scoped, tag = 'scoped memory for _lambda_.1']
  %s0 = inlined_call_operand.vmem [shape: bf16[16,768], index: 0, kind: input, shape index: {}]
  %s1 = inlined_call_operand.vmem [shape: bf16[16,768], index: 1, kind: input, shape index: {}]
  %s2 = inlined_call_operand.vmem [shape: f32[3,2048], index: 2, kind: input, shape index: {}]
  %s3 = inlined_call_operand.vmem [shape: f32[1,2048], index: 3, kind: input, shape index: {}]
  %s4 = inlined_call_operand.hbm [shape: bf16[2048,256], index: 4, kind: input, shape index: {}]
  %s5 = inlined_call_operand.vmem [shape: f32[1,256], index: 5, kind: input, shape index: {}]
  %s6 = inlined_call_operand.vmem [shape: bf16[256,128], index: 6, kind: input, shape index: {}]
  %s7 = inlined_call_operand.vmem [shape: f32[1,128], index: 7, kind: input, shape index: {}]
  %s8 = inlined_call_operand.<no memory space> [shape: f32[1,1], index: 8, kind: input, shape index: {}]
  %s9 = inlined_call_operand.vmem [shape: f32[16,128], index: 9, kind: output, shape index: {0}]
  %s10 = inlined_call_operand.hbm [shape: f32[1,1], index: 10, kind: output, shape index: {1}]
  %11 = xla_tuple %s9, %s10
  %s12 = sld [smem:[#allocation0]]
  $region66: #{_lambda_.1} parent=0
    _
  %s14 = ssub.s32 1, %s12
  %s15 = scalar_select 0, %s14, %s12
  %16 = sst [smem:[#allocation5]] %s8
  $region1: #{_lambda_.1} parent=0
    #allocation6 [shape = 'u8[1048576]{0}', space=vmem, size = 0x100000, scoped, tag = 'input window, operand 4, single buffered']
    #allocation7 [shape = 's32[1]{0}', space=sflag, size = 0x4, scoped, tag = 'scoped memory for _lambda_.1']
    #allocation8 [shape = 's32[1]{0}', space=sflag, size = 0x4, scoped, tag = 'scoped memory for _lambda_.1']
    #allocation9 [shape = 'u8[512]{0}', space=vmem, size = 0x400, scoped, tag = 'output window, operand 1, single buffered']
    %17 = vsyncpa [#allocation7], 0
    %18 = vsyncpa [#allocation8], 0
    // Predicated region
    $region2: #{_lambda_.1} parent=1 // pred_check
      _
    $region3: #{_lambda_.1} parent=1 // pred_check_branch
      %20 = sbr.rel (0) target = $region5
    $region4: #{_lambda_.1} parent=1 // pred_region
      _
    $region5: #{_lambda_.1} parent=1 // pred_fallthru
      _
    // Predicated region
    $region6: #{_lambda_.1} parent=1 // pred_check
      _
    $region7: #{_lambda_.1} parent=1 // pred_check_branch
      %22 = sbr.rel (0) target = $region9
    $region8: #{_lambda_.1} parent=1 // pred_region
      _
    $region9: #{_lambda_.1} parent=1 // pred_fallthru
      _
    // Predicated region
    $region10: #{_lambda_.1} parent=1 // pred_check
      _
    $region11: #{_lambda_.1} parent=1 // pred_check_branch
      %24 = sbr.rel (0) target = $region13
    $region12: #{_lambda_.1} parent=1 // pred_region
      _
    $region13: #{_lambda_.1} parent=1 // pred_fallthru
      _
    // Predicated region
    $region14: #{_lambda_.1} parent=1 // pred_check
      _
    $region15: #{_lambda_.1} parent=1 // pred_check_branch
      %26 = sbr.rel (0) target = $region17
    $region16: #{_lambda_.1} parent=1 // pred_region
      _
    $region17: #{_lambda_.1} parent=1 // pred_fallthru
      _
    // Predicated region
    $region18: #{_lambda_.1} parent=1 // pred_check
      _
    $region19: #{_lambda_.1} parent=1 // pred_check_branch
      %28 = sbr.rel (0) target = $region21
    $region20: #{_lambda_.1} parent=1 // pred_region
      %30 = vsyncadd [#allocation7], 0
      %s31 = sshll.u32 %s4, 4
      %s32 = int_to_ptr.hbm [resolvable:$true] %s31
      %s33 = sshll.u32 [#allocation6], 4
      %s34 = int_to_ptr.vmem [resolvable:$true] %s33
      %39 = dma.hbm_to_vmem [thread:$0]  %s32, 32768, %s34, [#allocation7], 128, 128, 8
    $region21: #{_lambda_.1} parent=1 // pred_fallthru
      _
    // Predicated region
    $region22: #{_lambda_.1} parent=1 // pred_check
      _
    $region23: #{_lambda_.1} parent=1 // pred_check_branch
      %41 = sbr.rel (0) target = $region25
    $region24: #{_lambda_.1} parent=1 // pred_region
      _
    $region25: #{_lambda_.1} parent=1 // pred_fallthru
      _
    // Predicated region
    $region26: #{_lambda_.1} parent=1 // pred_check
      _
    $region27: #{_lambda_.1} parent=1 // pred_check_branch
      %43 = sbr.rel (0) target = $region29
    $region28: #{_lambda_.1} parent=1 // pred_region
      _
    $region29: #{_lambda_.1} parent=1 // pred_fallthru
      _
    // Predicated region
    $region30: #{_lambda_.1} parent=1 // pred_check
      _
    $region31: #{_lambda_.1} parent=1 // pred_check_branch
      %45 = sbr.rel (0) target = $region33
    $region32: #{_lambda_.1} parent=1 // pred_region
      _
    $region33: #{_lambda_.1} parent=1 // pred_fallthru
      _
    // Predicated region
    $region34: #{_lambda_.1} parent=1 // pred_check
      _
    $region35: #{_lambda_.1} parent=1 // pred_check_branch
      %47 = sbr.rel (0) target = $region37
    $region36: #{_lambda_.1} parent=1 // pred_region
      _
    $region37: #{_lambda_.1} parent=1 // pred_fallthru
      _
    // Predicated region
    $region38: #{_lambda_.1} parent=1 // pred_check
      _
    $region39: #{_lambda_.1} parent=1 // pred_check_branch
      %49 = sbr.rel (0) target = $region41
    $region40: #{_lambda_.1} parent=1 // pred_region
      %51 = dma.done [#allocation7], 32768
    $region41: #{_lambda_.1} parent=1 // pred_fallthru
      _
    %v53 = vld [vmem:[%s0] sm:$0xff]
    %v54 = vld [vmem:[%s0 + $0x18] sm:$0xff]
    %v55 = vunpack.c.l.bf16 %v53
    %v56 = vunpack.c.h.bf16 %v53
    %v57 = vunpack.c.l.bf16 %v54
    %v58 = vunpack.c.h.bf16 %v54
    %v59 = vadd.f32 %v55, %v56
    %60 = vadd.xlane.f32.xlu0 %v59
    %v61 = vpop.xlane.xlu0 %60
    %v62 = vadd.f32 %v57, %v58
    %63 = vadd.xlane.f32.xlu0 %v62
    %v64 = vpop.xlane.xlu0 %63
    %v65 = vld [vmem:[%s2] ss:$4 sm:$0xff]
    %s66 = scalar_lea.vmem %s2, 32
    %v67 = vld [vmem:[%s66] ss:$4 sm:$0xff]
    %v70 = vperm.slane %v65, 0
    %v71 = vperm.slane %v65, 1
    %v72 = vperm.slane %v65, 2
    %v73 = vperm.slane %v65, 3
    %v74 = vperm.slane %v65, 4
    %v75 = vperm.slane %v65, 5
    %v76 = vperm.slane %v65, 6
    %v77 = vperm.slane %v65, 7
    %v78 = vperm.slane %v67, 0
    %v79 = vperm.slane %v67, 1
    %v80 = vperm.slane %v67, 2
    %v81 = vperm.slane %v67, 3
    %v82 = vperm.slane %v67, 4
    %v83 = vperm.slane %v67, 5
    %v84 = vperm.slane %v67, 6
    %v85 = vperm.slane %v67, 7
    %v102 = vmul.f32 %v61, %v70
    %v103 = vmul.f32 %v61, %v71
    %v104 = vmul.f32 %v61, %v72
    %v105 = vmul.f32 %v61, %v73
    %v106 = vmul.f32 %v61, %v74
    %v107 = vmul.f32 %v61, %v75
    %v108 = vmul.f32 %v61, %v76
    %v109 = vmul.f32 %v61, %v77
    %v110 = vmul.f32 %v61, %v78
    %v111 = vmul.f32 %v61, %v79
    %v112 = vmul.f32 %v61, %v80
    %v113 = vmul.f32 %v61, %v81
    %v114 = vmul.f32 %v61, %v82
    %v115 = vmul.f32 %v61, %v83
    %v116 = vmul.f32 %v61, %v84
    %v117 = vmul.f32 %v61, %v85
    %v118 = vmul.f32 %v64, %v70
    %v119 = vmul.f32 %v64, %v71
    %v120 = vmul.f32 %v64, %v72
    %v121 = vmul.f32 %v64, %v73
    %v122 = vmul.f32 %v64, %v74
    %v123 = vmul.f32 %v64, %v75
    %v124 = vmul.f32 %v64, %v76
    %v125 = vmul.f32 %v64, %v77
    %v126 = vmul.f32 %v64, %v78
    %v127 = vmul.f32 %v64, %v79
    %v128 = vmul.f32 %v64, %v80
    %v129 = vmul.f32 %v64, %v81
    %v130 = vmul.f32 %v64, %v82
    %v131 = vmul.f32 %v64, %v83
    %v132 = vmul.f32 %v64, %v84
    %v133 = vmul.f32 %v64, %v85
    %v134 = vadd.f32 %v102, 0.0
    %v135 = vadd.f32 %v103, 0.0
    %v136 = vadd.f32 %v104, 0.0
    %v137 = vadd.f32 %v105, 0.0
    %v138 = vadd.f32 %v106, 0.0
    %v139 = vadd.f32 %v107, 0.0
    %v140 = vadd.f32 %v108, 0.0
    %v141 = vadd.f32 %v109, 0.0
    %v142 = vadd.f32 %v110, 0.0
    %v143 = vadd.f32 %v111, 0.0
    %v144 = vadd.f32 %v112, 0.0
    %v145 = vadd.f32 %v113, 0.0
    %v146 = vadd.f32 %v114, 0.0
    %v147 = vadd.f32 %v115, 0.0
    %v148 = vadd.f32 %v116, 0.0
    %v149 = vadd.f32 %v117, 0.0
    %v150 = vadd.f32 %v118, 0.0
    %v151 = vadd.f32 %v119, 0.0
    %v152 = vadd.f32 %v120, 0.0
    %v153 = vadd.f32 %v121, 0.0
    %v154 = vadd.f32 %v122, 0.0
    %v155 = vadd.f32 %v123, 0.0
    %v156 = vadd.f32 %v124, 0.0
    %v157 = vadd.f32 %v125, 0.0
    %v158 = vadd.f32 %v126, 0.0
    %v159 = vadd.f32 %v127, 0.0
    %v160 = vadd.f32 %v128, 0.0
    %v161 = vadd.f32 %v129, 0.0
    %v162 = vadd.f32 %v130, 0.0
    %v163 = vadd.f32 %v131, 0.0
    %v164 = vadd.f32 %v132, 0.0
    %v165 = vadd.f32 %v133, 0.0
    %v166 = vld [vmem:[%s0 + $0x8] sm:$0xff]
    %v167 = vld [vmem:[%s0 + $0x20] sm:$0xff]
    %v168 = vunpack.c.l.bf16 %v166
    %v169 = vunpack.c.h.bf16 %v166
    %v170 = vunpack.c.l.bf16 %v167
    %v171 = vunpack.c.h.bf16 %v167
    %v172 = vadd.f32 %v168, %v169
    %173 = vadd.xlane.f32.xlu0 %v172
    %v174 = vpop.xlane.xlu0 %173
    %v175 = vadd.f32 %v170, %v171
    %176 = vadd.xlane.f32.xlu0 %v175
    %v177 = vpop.xlane.xlu0 %176
    %s178 = scalar_lea.vmem %s2, 1
    %v179 = vld [vmem:[%s178] ss:$4 sm:$0xff]
    %s180 = scalar_lea.vmem %s2, 33
    %v181 = vld [vmem:[%s180] ss:$4 sm:$0xff]
    %v184 = vperm.slane %v179, 0
    %v185 = vperm.slane %v179, 1
    %v186 = vperm.slane %v179, 2
    %v187 = vperm.slane %v179, 3
    %v188 = vperm.slane %v179, 4
    %v189 = vperm.slane %v179, 5
    %v190 = vperm.slane %v179, 6
    %v191 = vperm.slane %v179, 7
    %v192 = vperm.slane %v181, 0
    %v193 = vperm.slane %v181, 1
    %v194 = vperm.slane %v181, 2
    %v195 = vperm.slane %v181, 3
    %v196 = vperm.slane %v181, 4
    %v197 = vperm.slane %v181, 5
    %v198 = vperm.slane %v181, 6
    %v199 = vperm.slane %v181, 7
    %v216 = vmul.f32 %v174, %v184
    %v217 = vmul.f32 %v174, %v185
    %v218 = vmul.f32 %v174, %v186
    %v219 = vmul.f32 %v174, %v187
    %v220 = vmul.f32 %v174, %v188
    %v221 = vmul.f32 %v174, %v189
    %v222 = vmul.f32 %v174, %v190
    %v223 = vmul.f32 %v174, %v191
    %v224 = vmul.f32 %v174, %v192
    %v225 = vmul.f32 %v174, %v193
    %v226 = vmul.f32 %v174, %v194
    %v227 = vmul.f32 %v174, %v195
    %v228 = vmul.f32 %v174, %v196
    %v229 = vmul.f32 %v174, %v197
    %v230 = vmul.f32 %v174, %v198
    %v231 = vmul.f32 %v174, %v199
    %v232 = vmul.f32 %v177, %v184
    %v233 = vmul.f32 %v177, %v185
    %v234 = vmul.f32 %v177, %v186
    %v235 = vmul.f32 %v177, %v187
    %v236 = vmul.f32 %v177, %v188
    %v237 = vmul.f32 %v177, %v189
    %v238 = vmul.f32 %v177, %v190
    %v239 = vmul.f32 %v177, %v191
    %v240 = vmul.f32 %v177, %v192
    %v241 = vmul.f32 %v177, %v193
    %v242 = vmul.f32 %v177, %v194
    %v243 = vmul.f32 %v177, %v195
    %v244 = vmul.f32 %v177, %v196
    %v245 = vmul.f32 %v177, %v197
    %v246 = vmul.f32 %v177, %v198
    %v247 = vmul.f32 %v177, %v199
    %v248 = vadd.f32 %v134, %v216
    %v249 = vadd.f32 %v135, %v217
    %v250 = vadd.f32 %v136, %v218
    %v251 = vadd.f32 %v137, %v219
    %v252 = vadd.f32 %v138, %v220
    %v253 = vadd.f32 %v139, %v221
    %v254 = vadd.f32 %v140, %v222
    %v255 = vadd.f32 %v141, %v223
    %v256 = vadd.f32 %v142, %v224
    %v257 = vadd.f32 %v143, %v225
    %v258 = vadd.f32 %v144, %v226
    %v259 = vadd.f32 %v145, %v227
    %v260 = vadd.f32 %v146, %v228
    %v261 = vadd.f32 %v147, %v229
    %v262 = vadd.f32 %v148, %v230
    %v263 = vadd.f32 %v149, %v231
    %v264 = vadd.f32 %v150, %v232
    %v265 = vadd.f32 %v151, %v233
    %v266 = vadd.f32 %v152, %v234
    %v267 = vadd.f32 %v153, %v235
    %v268 = vadd.f32 %v154, %v236
    %v269 = vadd.f32 %v155, %v237
    %v270 = vadd.f32 %v156, %v238
    %v271 = vadd.f32 %v157, %v239
    %v272 = vadd.f32 %v158, %v240
    %v273 = vadd.f32 %v159, %v241
    %v274 = vadd.f32 %v160, %v242
    %v275 = vadd.f32 %v161, %v243
    %v276 = vadd.f32 %v162, %v244
    %v277 = vadd.f32 %v163, %v245
    %v278 = vadd.f32 %v164, %v246
    %v279 = vadd.f32 %v165, %v247
    %v280 = vld [vmem:[%s0 + $0x10] sm:$0xff]
    %v281 = vld [vmem:[%s0 + $0x28] sm:$0xff]
    %v282 = vunpack.c.l.bf16 %v280
    %v283 = vunpack.c.h.bf16 %v280
    %v284 = vunpack.c.l.bf16 %v281
    %v285 = vunpack.c.h.bf16 %v281
    %v286 = vadd.f32 %v282, %v283
    %287 = vadd.xlane.f32.xlu0 %v286
    %v288 = vpop.xlane.xlu0 %287
    %v289 = vadd.f32 %v284, %v285
    %290 = vadd.xlane.f32.xlu0 %v289
    %v291 = vpop.xlane.xlu0 %290
    %s292 = scalar_lea.vmem %s2, 2
    %v293 = vld [vmem:[%s292] ss:$4 sm:$0xff]
    %s294 = scalar_lea.vmem %s2, 34
    %v295 = vld [vmem:[%s294] ss:$4 sm:$0xff]
    %v298 = vperm.slane %v293, 0
    %v299 = vperm.slane %v293, 1
    %v300 = vperm.slane %v293, 2
    %v301 = vperm.slane %v293, 3
    %v302 = vperm.slane %v293, 4
    %v303 = vperm.slane %v293, 5
    %v304 = vperm.slane %v293, 6
    %v305 = vperm.slane %v293, 7
    %v306 = vperm.slane %v295, 0
    %v307 = vperm.slane %v295, 1
    %v308 = vperm.slane %v295, 2
    %v309 = vperm.slane %v295, 3
    %v310 = vperm.slane %v295, 4
    %v311 = vperm.slane %v295, 5
    %v312 = vperm.slane %v295, 6
    %v313 = vperm.slane %v295, 7
    %v330 = vmul.f32 %v288, %v298
    %v331 = vmul.f32 %v288, %v299
    %v332 = vmul.f32 %v288, %v300
    %v333 = vmul.f32 %v288, %v301
    %v334 = vmul.f32 %v288, %v302
    %v335 = vmul.f32 %v288, %v303
    %v336 = vmul.f32 %v288, %v304
    %v337 = vmul.f32 %v288, %v305
    %v338 = vmul.f32 %v288, %v306
    %v339 = vmul.f32 %v288, %v307
    %v340 = vmul.f32 %v288, %v308
    %v341 = vmul.f32 %v288, %v309
    %v342 = vmul.f32 %v288, %v310
    %v343 = vmul.f32 %v288, %v311
    %v344 = vmul.f32 %v288, %v312
    %v345 = vmul.f32 %v288, %v313
    %v346 = vmul.f32 %v291, %v298
    %v347 = vmul.f32 %v291, %v299
    %v348 = vmul.f32 %v291, %v300
    %v349 = vmul.f32 %v291, %v301
    %v350 = vmul.f32 %v291, %v302
    %v351 = vmul.f32 %v291, %v303
    %v352 = vmul.f32 %v291, %v304
    %v353 = vmul.f32 %v291, %v305
    %v354 = vmul.f32 %v291, %v306
    %v355 = vmul.f32 %v291, %v307
    %v356 = vmul.f32 %v291, %v308
    %v357 = vmul.f32 %v291, %v309
    %v358 = vmul.f32 %v291, %v310
    %v359 = vmul.f32 %v291, %v311
    %v360 = vmul.f32 %v291, %v312
    %v361 = vmul.f32 %v291, %v313
    %v362 = vadd.f32 %v248, %v330
    %v363 = vadd.f32 %v249, %v331
    %v364 = vadd.f32 %v250, %v332
    %v365 = vadd.f32 %v251, %v333
    %v366 = vadd.f32 %v252, %v334
    %v367 = vadd.f32 %v253, %v335
    %v368 = vadd.f32 %v254, %v336
    %v369 = vadd.f32 %v255, %v337
    %v370 = vadd.f32 %v256, %v338
    %v371 = vadd.f32 %v257, %v339
    %v372 = vadd.f32 %v258, %v340
    %v373 = vadd.f32 %v259, %v341
    %v374 = vadd.f32 %v260, %v342
    %v375 = vadd.f32 %v261, %v343
    %v376 = vadd.f32 %v262, %v344
    %v377 = vadd.f32 %v263, %v345
    %v378 = vadd.f32 %v264, %v346
    %v379 = vadd.f32 %v265, %v347
    %v380 = vadd.f32 %v266, %v348
    %v381 = vadd.f32 %v267, %v349
    %v382 = vadd.f32 %v268, %v350
    %v383 = vadd.f32 %v269, %v351
    %v384 = vadd.f32 %v270, %v352
    %v385 = vadd.f32 %v271, %v353
    %v386 = vadd.f32 %v272, %v354
    %v387 = vadd.f32 %v273, %v355
    %v388 = vadd.f32 %v274, %v356
    %v389 = vadd.f32 %v275, %v357
    %v390 = vadd.f32 %v276, %v358
    %v391 = vadd.f32 %v277, %v359
    %v392 = vadd.f32 %v278, %v360
    %v393 = vadd.f32 %v279, %v361
    %v394 = vld [vmem:[%s3] sm:$0xff]
    %v395 = vld [vmem:[%s3 + $0x8] sm:$0xff]
    %v398 = vperm.slane %v394, 0
    %v399 = vperm.slane %v394, 1
    %v400 = vperm.slane %v394, 2
    %v401 = vperm.slane %v394, 3
    %v402 = vperm.slane %v394, 4
    %v403 = vperm.slane %v394, 5
    %v404 = vperm.slane %v394, 6
    %v405 = vperm.slane %v394, 7
    %v406 = vperm.slane %v395, 0
    %v407 = vperm.slane %v395, 1
    %v408 = vperm.slane %v395, 2
    %v409 = vperm.slane %v395, 3
    %v410 = vperm.slane %v395, 4
    %v411 = vperm.slane %v395, 5
    %v412 = vperm.slane %v395, 6
    %v413 = vperm.slane %v395, 7
    %v430 = vadd.f32 %v362, %v398
    %v431 = vadd.f32 %v363, %v399
    %v432 = vadd.f32 %v364, %v400
    %v433 = vadd.f32 %v365, %v401
    %v434 = vadd.f32 %v366, %v402
    %v435 = vadd.f32 %v367, %v403
    %v436 = vadd.f32 %v368, %v404
    %v437 = vadd.f32 %v369, %v405
    %v438 = vadd.f32 %v370, %v406
    %v439 = vadd.f32 %v371, %v407
    %v440 = vadd.f32 %v372, %v408
    %v441 = vadd.f32 %v373, %v409
    %v442 = vadd.f32 %v374, %v410
    %v443 = vadd.f32 %v375, %v411
    %v444 = vadd.f32 %v376, %v412
    %v445 = vadd.f32 %v377, %v413
    %v446 = vadd.f32 %v378, %v398
    %v447 = vadd.f32 %v379, %v399
    %v448 = vadd.f32 %v380, %v400
    %v449 = vadd.f32 %v381, %v401
    %v450 = vadd.f32 %v382, %v402
    %v451 = vadd.f32 %v383, %v403
    %v452 = vadd.f32 %v384, %v404
    %v453 = vadd.f32 %v385, %v405
    %v454 = vadd.f32 %v386, %v406
    %v455 = vadd.f32 %v387, %v407
    %v456 = vadd.f32 %v388, %v408
    %v457 = vadd.f32 %v389, %v409
    %v458 = vadd.f32 %v390, %v410
    %v459 = vadd.f32 %v391, %v411
    %v460 = vadd.f32 %v392, %v412
    %v461 = vadd.f32 %v393, %v413
    %v462 = vmax.f32 %v430, 0.0
    %v463 = vmax.f32 %v431, 0.0
    %v464 = vmax.f32 %v432, 0.0
    %v465 = vmax.f32 %v433, 0.0
    %v466 = vmax.f32 %v434, 0.0
    %v467 = vmax.f32 %v435, 0.0
    %v468 = vmax.f32 %v436, 0.0
    %v469 = vmax.f32 %v437, 0.0
    %v470 = vmax.f32 %v438, 0.0
    %v471 = vmax.f32 %v439, 0.0
    %v472 = vmax.f32 %v440, 0.0
    %v473 = vmax.f32 %v441, 0.0
    %v474 = vmax.f32 %v442, 0.0
    %v475 = vmax.f32 %v443, 0.0
    %v476 = vmax.f32 %v444, 0.0
    %v477 = vmax.f32 %v445, 0.0
    %v478 = vmax.f32 %v446, 0.0
    %v479 = vmax.f32 %v447, 0.0
    %v480 = vmax.f32 %v448, 0.0
    %v481 = vmax.f32 %v449, 0.0
    %v482 = vmax.f32 %v450, 0.0
    %v483 = vmax.f32 %v451, 0.0
    %v484 = vmax.f32 %v452, 0.0
    %v485 = vmax.f32 %v453, 0.0
    %v486 = vmax.f32 %v454, 0.0
    %v487 = vmax.f32 %v455, 0.0
    %v488 = vmax.f32 %v456, 0.0
    %v489 = vmax.f32 %v457, 0.0
    %v490 = vmax.f32 %v458, 0.0
    %v491 = vmax.f32 %v459, 0.0
    %v492 = vmax.f32 %v460, 0.0
    %v493 = vmax.f32 %v461, 0.0
    %v494 = vpack.c.bf16 %v478, %v462
    %v495 = vpack.c.bf16 %v479, %v463
    %v496 = vpack.c.bf16 %v480, %v464
    %v497 = vpack.c.bf16 %v481, %v465
    %v498 = vpack.c.bf16 %v482, %v466
    %v499 = vpack.c.bf16 %v483, %v467
    %v500 = vpack.c.bf16 %v484, %v468
    %v501 = vpack.c.bf16 %v485, %v469
    %v502 = vpack.c.bf16 %v486, %v470
    %v503 = vpack.c.bf16 %v487, %v471
    %v504 = vpack.c.bf16 %v488, %v472
    %v505 = vpack.c.bf16 %v489, %v473
    %v506 = vpack.c.bf16 %v490, %v474
    %v507 = vpack.c.bf16 %v491, %v475
    %v508 = vpack.c.bf16 %v492, %v476
    %v509 = vpack.c.bf16 %v493, %v477
    %v510 = vld [vmem:[#allocation6] sm:$0xff]
    %v511 = vld [vmem:[#allocation6 + $0x8] sm:$0xff]
    %v512 = vld [vmem:[#allocation6 + $0x10] sm:$0xff]
    %v513 = vld [vmem:[#allocation6 + $0x18] sm:$0xff]
    %v514 = vld [vmem:[#allocation6 + $0x20] sm:$0xff]
    %v515 = vld [vmem:[#allocation6 + $0x28] sm:$0xff]
    %v516 = vld [vmem:[#allocation6 + $0x30] sm:$0xff]
    %v517 = vld [vmem:[#allocation6 + $0x38] sm:$0xff]
    %v518 = vld [vmem:[#allocation6 + $0x40] sm:$0xff]
    %v519 = vld [vmem:[#allocation6 + $0x48] sm:$0xff]
    %v520 = vld [vmem:[#allocation6 + $0x50] sm:$0xff]
    %v521 = vld [vmem:[#allocation6 + $0x58] sm:$0xff]
    %v522 = vld [vmem:[#allocation6 + $0x60] sm:$0xff]
    %v523 = vld [vmem:[#allocation6 + $0x68] sm:$0xff]
    %v524 = vld [vmem:[#allocation6 + $0x70] sm:$0xff]
    %v525 = vld [vmem:[#allocation6 + $0x78] sm:$0xff]
    %v526 = vld [vmem:[#allocation6 + $0x80] sm:$0xff]
    %v527 = vld [vmem:[#allocation6 + $0x88] sm:$0xff]
    %v528 = vld [vmem:[#allocation6 + $0x90] sm:$0xff]
    %v529 = vld [vmem:[#allocation6 + $0x98] sm:$0xff]
    %v530 = vld [vmem:[#allocation6 + $0xa0] sm:$0xff]
    %v531 = vld [vmem:[#allocation6 + $0xa8] sm:$0xff]
    %v532 = vld [vmem:[#allocation6 + $0xb0] sm:$0xff]
    %v533 = vld [vmem:[#allocation6 + $0xb8] sm:$0xff]
    %v534 = vld [vmem:[#allocation6 + $0xc0] sm:$0xff]
    %v535 = vld [vmem:[#allocation6 + $0xc8] sm:$0xff]
    %v536 = vld [vmem:[#allocation6 + $0xd0] sm:$0xff]
    %v537 = vld [vmem:[#allocation6 + $0xd8] sm:$0xff]
    %v538 = vld [vmem:[#allocation6 + $0xe0] sm:$0xff]
    %v539 = vld [vmem:[#allocation6 + $0xe8] sm:$0xff]
    %v540 = vld [vmem:[#allocation6 + $0xf0] sm:$0xff]
    %v541 = vld [vmem:[#allocation6 + $0xf8] sm:$0xff]
    %v542 = vld [vmem:[#allocation6 + $0x100] sm:$0xff]
    %v543 = vld [vmem:[#allocation6 + $0x108] sm:$0xff]
    %v544 = vld [vmem:[#allocation6 + $0x110] sm:$0xff]
    %v545 = vld [vmem:[#allocation6 + $0x118] sm:$0xff]
    %v546 = vld [vmem:[#allocation6 + $0x120] sm:$0xff]
    %v547 = vld [vmem:[#allocation6 + $0x128] sm:$0xff]
    %v548 = vld [vmem:[#allocation6 + $0x130] sm:$0xff]
    %v549 = vld [vmem:[#allocation6 + $0x138] sm:$0xff]
    %v550 = vld [vmem:[#allocation6 + $0x140] sm:$0xff]
    %v551 = vld [vmem:[#allocation6 + $0x148] sm:$0xff]
    %v552 = vld [vmem:[#allocation6 + $0x150] sm:$0xff]
    %v553 = vld [vmem:[#allocation6 + $0x158] sm:$0xff]
    %v554 = vld [vmem:[#allocation6 + $0x160] sm:$0xff]
    %v555 = vld [vmem:[#allocation6 + $0x168] sm:$0xff]
    %v556 = vld [vmem:[#allocation6 + $0x170] sm:$0xff]
    %v557 = vld [vmem:[#allocation6 + $0x178] sm:$0xff]
    %v558 = vld [vmem:[#allocation6 + $0x180] sm:$0xff]
    %v559 = vld [vmem:[#allocation6 + $0x188] sm:$0xff]
    %v560 = vld [vmem:[#allocation6 + $0x190] sm:$0xff]
    %v561 = vld [vmem:[#allocation6 + $0x198] sm:$0xff]
    %v562 = vld [vmem:[#allocation6 + $0x1a0] sm:$0xff]
    %v563 = vld [vmem:[#allocation6 + $0x1a8] sm:$0xff]
    %v564 = vld [vmem:[#allocation6 + $0x1b0] sm:$0xff]
    %v565 = vld [vmem:[#allocation6 + $0x1b8] sm:$0xff]
    %v566 = vld [vmem:[#allocation6 + $0x1c0] sm:$0xff]
    %v567 = vld [vmem:[#allocation6 + $0x1c8] sm:$0xff]
    %v568 = vld [vmem:[#allocation6 + $0x1d0] sm:$0xff]
    %v569 = vld [vmem:[#allocation6 + $0x1d8] sm:$0xff]
    %v570 = vld [vmem:[#allocation6 + $0x1e0] sm:$0xff]
    %v571 = vld [vmem:[#allocation6 + $0x1e8] sm:$0xff]
    %v572 = vld [vmem:[#allocation6 + $0x1f0] sm:$0xff]
    %v573 = vld [vmem:[#allocation6 + $0x1f8] sm:$0xff]
    %v574 = vld [vmem:[#allocation6 + $0x200] sm:$0xff]
    %v575 = vld [vmem:[#allocation6 + $0x208] sm:$0xff]
    %v576 = vld [vmem:[#allocation6 + $0x210] sm:$0xff]
    %v577 = vld [vmem:[#allocation6 + $0x218] sm:$0xff]
    %v578 = vld [vmem:[#allocation6 + $0x220] sm:$0xff]
    %v579 = vld [vmem:[#allocation6 + $0x228] sm:$0xff]
    %v580 = vld [vmem:[#allocation6 + $0x230] sm:$0xff]
    %v581 = vld [vmem:[#allocation6 + $0x238] sm:$0xff]
    %v582 = vld [vmem:[#allocation6 + $0x240] sm:$0xff]
    %v583 = vld [vmem:[#allocation6 + $0x248] sm:$0xff]
    %v584 = vld [vmem:[#allocation6 + $0x250] sm:$0xff]
    %v585 = vld [vmem:[#allocation6 + $0x258] sm:$0xff]
    %v586 = vld [vmem:[#allocation6 + $0x260] sm:$0xff]
    %v587 = vld [vmem:[#allocation6 + $0x268] sm:$0xff]
    %v588 = vld [vmem:[#allocation6 + $0x270] sm:$0xff]
    %v589 = vld [vmem:[#allocation6 + $0x278] sm:$0xff]
    %v590 = vld [vmem:[#allocation6 + $0x280] sm:$0xff]
    %v591 = vld [vmem:[#allocation6 + $0x288] sm:$0xff]
    %v592 = vld [vmem:[#allocation6 + $0x290] sm:$0xff]
    %v593 = vld [vmem:[#allocation6 + $0x298] sm:$0xff]
    %v594 = vld [vmem:[#allocation6 + $0x2a0] sm:$0xff]
    %v595 = vld [vmem:[#allocation6 + $0x2a8] sm:$0xff]
    %v596 = vld [vmem:[#allocation6 + $0x2b0] sm:$0xff]
    %v597 = vld [vmem:[#allocation6 + $0x2b8] sm:$0xff]
    %v598 = vld [vmem:[#allocation6 + $0x2c0] sm:$0xff]
    %v599 = vld [vmem:[#allocation6 + $0x2c8] sm:$0xff]
    %v600 = vld [vmem:[#allocation6 + $0x2d0] sm:$0xff]
    %v601 = vld [vmem:[#allocation6 + $0x2d8] sm:$0xff]
    %v602 = vld [vmem:[#allocation6 + $0x2e0] sm:$0xff]
    %v603 = vld [vmem:[#allocation6 + $0x2e8] sm:$0xff]
    %v604 = vld [vmem:[#allocation6 + $0x2f0] sm:$0xff]
    %v605 = vld [vmem:[#allocation6 + $0x2f8] sm:$0xff]
    %v606 = vld [vmem:[#allocation6 + $0x300] sm:$0xff]
    %v607 = vld [vmem:[#allocation6 + $0x308] sm:$0xff]
    %v608 = vld [vmem:[#allocation6 + $0x310] sm:$0xff]
    %v609 = vld [vmem:[#allocation6 + $0x318] sm:$0xff]
    %v610 = vld [vmem:[#allocation6 + $0x320] sm:$0xff]
    %v611 = vld [vmem:[#allocation6 + $0x328] sm:$0xff]
    %v612 = vld [vmem:[#allocation6 + $0x330] sm:$0xff]
    %v613 = vld [vmem:[#allocation6 + $0x338] sm:$0xff]
    %v614 = vld [vmem:[#allocation6 + $0x340] sm:$0xff]
    %v615 = vld [vmem:[#allocation6 + $0x348] sm:$0xff]
    %v616 = vld [vmem:[#allocation6 + $0x350] sm:$0xff]
    %v617 = vld [vmem:[#allocation6 + $0x358] sm:$0xff]
    %v618 = vld [vmem:[#allocation6 + $0x360] sm:$0xff]
    %v619 = vld [vmem:[#allocation6 + $0x368] sm:$0xff]
    %v620 = vld [vmem:[#allocation6 + $0x370] sm:$0xff]
    %v621 = vld [vmem:[#allocation6 + $0x378] sm:$0xff]
    %v622 = vld [vmem:[#allocation6 + $0x380] sm:$0xff]
    %v623 = vld [vmem:[#allocation6 + $0x388] sm:$0xff]
    %v624 = vld [vmem:[#allocation6 + $0x390] sm:$0xff]
    %v625 = vld [vmem:[#allocation6 + $0x398] sm:$0xff]
    %v626 = vld [vmem:[#allocation6 + $0x3a0] sm:$0xff]
    %v627 = vld [vmem:[#allocation6 + $0x3a8] sm:$0xff]
    %v628 = vld [vmem:[#allocation6 + $0x3b0] sm:$0xff]
    %v629 = vld [vmem:[#allocation6 + $0x3b8] sm:$0xff]
    %v630 = vld [vmem:[#allocation6 + $0x3c0] sm:$0xff]
    %v631 = vld [vmem:[#allocation6 + $0x3c8] sm:$0xff]
    %v632 = vld [vmem:[#allocation6 + $0x3d0] sm:$0xff]
    %v633 = vld [vmem:[#allocation6 + $0x3d8] sm:$0xff]
    %v634 = vld [vmem:[#allocation6 + $0x3e0] sm:$0xff]
    %v635 = vld [vmem:[#allocation6 + $0x3e8] sm:$0xff]
    %v636 = vld [vmem:[#allocation6 + $0x3f0] sm:$0xff]
    %v637 = vld [vmem:[#allocation6 + $0x3f8] sm:$0xff]
    %v638 = vld [vmem:[#allocation6 + $0x400] sm:$0xff]
    %v639 = vld [vmem:[#allocation6 + $0x408] sm:$0xff]
    %v640 = vld [vmem:[#allocation6 + $0x410] sm:$0xff]
    %v641 = vld [vmem:[#allocation6 + $0x418] sm:$0xff]
    %v642 = vld [vmem:[#allocation6 + $0x420] sm:$0xff]
    %v643 = vld [vmem:[#allocation6 + $0x428] sm:$0xff]
    %v644 = vld [vmem:[#allocation6 + $0x430] sm:$0xff]
    %v645 = vld [vmem:[#allocation6 + $0x438] sm:$0xff]
    %v646 = vld [vmem:[#allocation6 + $0x440] sm:$0xff]
    %v647 = vld [vmem:[#allocation6 + $0x448] sm:$0xff]
    %v648 = vld [vmem:[#allocation6 + $0x450] sm:$0xff]
    %v649 = vld [vmem:[#allocation6 + $0x458] sm:$0xff]
    %v650 = vld [vmem:[#allocation6 + $0x460] sm:$0xff]
    %v651 = vld [vmem:[#allocation6 + $0x468] sm:$0xff]
    %v652 = vld [vmem:[#allocation6 + $0x470] sm:$0xff]
    %v653 = vld [vmem:[#allocation6 + $0x478] sm:$0xff]
    %v654 = vld [vmem:[#allocation6 + $0x480] sm:$0xff]
    %v655 = vld [vmem:[#allocation6 + $0x488] sm:$0xff]
    %v656 = vld [vmem:[#allocation6 + $0x490] sm:$0xff]
    %v657 = vld [vmem:[#allocation6 + $0x498] sm:$0xff]
    %v658 = vld [vmem:[#allocation6 + $0x4a0] sm:$0xff]
    %v659 = vld [vmem:[#allocation6 + $0x4a8] sm:$0xff]
    %v660 = vld [vmem:[#allocation6 + $0x4b0] sm:$0xff]
    %v661 = vld [vmem:[#allocation6 + $0x4b8] sm:$0xff]
    %v662 = vld [vmem:[#allocation6 + $0x4c0] sm:$0xff]
    %v663 = vld [vmem:[#allocation6 + $0x4c8] sm:$0xff]
    %v664 = vld [vmem:[#allocation6 + $0x4d0] sm:$0xff]
    %v665 = vld [vmem:[#allocation6 + $0x4d8] sm:$0xff]
    %v666 = vld [vmem:[#allocation6 + $0x4e0] sm:$0xff]
    %v667 = vld [vmem:[#allocation6 + $0x4e8] sm:$0xff]
    %v668 = vld [vmem:[#allocation6 + $0x4f0] sm:$0xff]
    %v669 = vld [vmem:[#allocation6 + $0x4f8] sm:$0xff]
    %v670 = vld [vmem:[#allocation6 + $0x500] sm:$0xff]
    %v671 = vld [vmem:[#allocation6 + $0x508] sm:$0xff]
    %v672 = vld [vmem:[#allocation6 + $0x510] sm:$0xff]
    %v673 = vld [vmem:[#allocation6 + $0x518] sm:$0xff]
    %v674 = vld [vmem:[#allocation6 + $0x520] sm:$0xff]
    %v675 = vld [vmem:[#allocation6 + $0x528] sm:$0xff]
    %v676 = vld [vmem:[#allocation6 + $0x530] sm:$0xff]
    %v677 = vld [vmem:[#allocation6 + $0x538] sm:$0xff]
    %v678 = vld [vmem:[#allocation6 + $0x540] sm:$0xff]
    %v679 = vld [vmem:[#allocation6 + $0x548] sm:$0xff]
    %v680 = vld [vmem:[#allocation6 + $0x550] sm:$0xff]
    %v681 = vld [vmem:[#allocation6 + $0x558] sm:$0xff]
    %v682 = vld [vmem:[#allocation6 + $0x560] sm:$0xff]
    %v683 = vld [vmem:[#allocation6 + $0x568] sm:$0xff]
    %v684 = vld [vmem:[#allocation6 + $0x570] sm:$0xff]
    %v685 = vld [vmem:[#allocation6 + $0x578] sm:$0xff]
    %v686 = vld [vmem:[#allocation6 + $0x580] sm:$0xff]
    %v687 = vld [vmem:[#allocation6 + $0x588] sm:$0xff]
    %v688 = vld [vmem:[#allocation6 + $0x590] sm:$0xff]
    %v689 = vld [vmem:[#allocation6 + $0x598] sm:$0xff]
    %v690 = vld [vmem:[#allocation6 + $0x5a0] sm:$0xff]
    %v691 = vld [vmem:[#allocation6 + $0x5a8] sm:$0xff]
    %v692 = vld [vmem:[#allocation6 + $0x5b0] sm:$0xff]
    %v693 = vld [vmem:[#allocation6 + $0x5b8] sm:$0xff]
    %v694 = vld [vmem:[#allocation6 + $0x5c0] sm:$0xff]
    %v695 = vld [vmem:[#allocation6 + $0x5c8] sm:$0xff]
    %v696 = vld [vmem:[#allocation6 + $0x5d0] sm:$0xff]
    %v697 = vld [vmem:[#allocation6 + $0x5d8] sm:$0xff]
    %v698 = vld [vmem:[#allocation6 + $0x5e0] sm:$0xff]
    %v699 = vld [vmem:[#allocation6 + $0x5e8] sm:$0xff]
    %v700 = vld [vmem:[#allocation6 + $0x5f0] sm:$0xff]
    %v701 = vld [vmem:[#allocation6 + $0x5f8] sm:$0xff]
    %v702 = vld [vmem:[#allocation6 + $0x600] sm:$0xff]
    %v703 = vld [vmem:[#allocation6 + $0x608] sm:$0xff]
    %v704 = vld [vmem:[#allocation6 + $0x610] sm:$0xff]
    %v705 = vld [vmem:[#allocation6 + $0x618] sm:$0xff]
    %v706 = vld [vmem:[#allocation6 + $0x620] sm:$0xff]
    %v707 = vld [vmem:[#allocation6 + $0x628] sm:$0xff]
    %v708 = vld [vmem:[#allocation6 + $0x630] sm:$0xff]
    %v709 = vld [vmem:[#allocation6 + $0x638] sm:$0xff]
    %v710 = vld [vmem:[#allocation6 + $0x640] sm:$0xff]
    %v711 = vld [vmem:[#allocation6 + $0x648] sm:$0xff]
    %v712 = vld [vmem:[#allocation6 + $0x650] sm:$0xff]
    %v713 = vld [vmem:[#allocation6 + $0x658] sm:$0xff]
    %v714 = vld [vmem:[#allocation6 + $0x660] sm:$0xff]
    %v715 = vld [vmem:[#allocation6 + $0x668] sm:$0xff]
    %v716 = vld [vmem:[#allocation6 + $0x670] sm:$0xff]
    %v717 = vld [vmem:[#allocation6 + $0x678] sm:$0xff]
    %v718 = vld [vmem:[#allocation6 + $0x680] sm:$0xff]
    %v719 = vld [vmem:[#allocation6 + $0x688] sm:$0xff]
    %v720 = vld [vmem:[#allocation6 + $0x690] sm:$0xff]
    %v721 = vld [vmem:[#allocation6 + $0x698] sm:$0xff]
    %v722 = vld [vmem:[#allocation6 + $0x6a0] sm:$0xff]
    %v723 = vld [vmem:[#allocation6 + $0x6a8] sm:$0xff]
    %v724 = vld [vmem:[#allocation6 + $0x6b0] sm:$0xff]
    %v725 = vld [vmem:[#allocation6 + $0x6b8] sm:$0xff]
    %v726 = vld [vmem:[#allocation6 + $0x6c0] sm:$0xff]
    %v727 = vld [vmem:[#allocation6 + $0x6c8] sm:$0xff]
    %v728 = vld [vmem:[#allocation6 + $0x6d0] sm:$0xff]
    %v729 = vld [vmem:[#allocation6 + $0x6d8] sm:$0xff]
    %v730 = vld [vmem:[#allocation6 + $0x6e0] sm:$0xff]
    %v731 = vld [vmem:[#allocation6 + $0x6e8] sm:$0xff]
    %v732 = vld [vmem:[#allocation6 + $0x6f0] sm:$0xff]
    %v733 = vld [vmem:[#allocation6 + $0x6f8] sm:$0xff]
    %v734 = vld [vmem:[#allocation6 + $0x700] sm:$0xff]
    %v735 = vld [vmem:[#allocation6 + $0x708] sm:$0xff]
    %v736 = vld [vmem:[#allocation6 + $0x710] sm:$0xff]
    %v737 = vld [vmem:[#allocation6 + $0x718] sm:$0xff]
    %v738 = vld [vmem:[#allocation6 + $0x720] sm:$0xff]
    %v739 = vld [vmem:[#allocation6 + $0x728] sm:$0xff]
    %v740 = vld [vmem:[#allocation6 + $0x730] sm:$0xff]
    %v741 = vld [vmem:[#allocation6 + $0x738] sm:$0xff]
    %v742 = vld [vmem:[#allocation6 + $0x740] sm:$0xff]
    %v743 = vld [vmem:[#allocation6 + $0x748] sm:$0xff]
    %v744 = vld [vmem:[#allocation6 + $0x750] sm:$0xff]
    %v745 = vld [vmem:[#allocation6 + $0x758] sm:$0xff]
    %v746 = vld [vmem:[#allocation6 + $0x760] sm:$0xff]
    %v747 = vld [vmem:[#allocation6 + $0x768] sm:$0xff]
    %v748 = vld [vmem:[#allocation6 + $0x770] sm:$0xff]
    %v749 = vld [vmem:[#allocation6 + $0x778] sm:$0xff]
    %v750 = vld [vmem:[#allocation6 + $0x780] sm:$0xff]
    %v751 = vld [vmem:[#allocation6 + $0x788] sm:$0xff]
    %v752 = vld [vmem:[#allocation6 + $0x790] sm:$0xff]
    %v753 = vld [vmem:[#allocation6 + $0x798] sm:$0xff]
    %v754 = vld [vmem:[#allocation6 + $0x7a0] sm:$0xff]
    %v755 = vld [vmem:[#allocation6 + $0x7a8] sm:$0xff]
    %v756 = vld [vmem:[#allocation6 + $0x7b0] sm:$0xff]
    %v757 = vld [vmem:[#allocation6 + $0x7b8] sm:$0xff]
    %v758 = vld [vmem:[#allocation6 + $0x7c0] sm:$0xff]
    %v759 = vld [vmem:[#allocation6 + $0x7c8] sm:$0xff]
    %v760 = vld [vmem:[#allocation6 + $0x7d0] sm:$0xff]
    %v761 = vld [vmem:[#allocation6 + $0x7d8] sm:$0xff]
    %v762 = vld [vmem:[#allocation6 + $0x7e0] sm:$0xff]
    %v763 = vld [vmem:[#allocation6 + $0x7e8] sm:$0xff]
    %v764 = vld [vmem:[#allocation6 + $0x7f0] sm:$0xff]
    %v765 = vld [vmem:[#allocation6 + $0x7f8] sm:$0xff]
    %v766 = vld [vmem:[%s5] sm:$0x3]
    %v768 = vperm.slane %v766, 0
    %v769 = vperm.slane %v766, 1
    %v1028 = vunpack.c.l.b16 %v510
    %v1029 = vunpack.c.h.b16 %v510
    %v1030 = vunpack.c.l.b16 %v511
    %v1031 = vunpack.c.h.b16 %v511
    %v1032 = vunpack.c.l.b16 %v512
    %v1033 = vunpack.c.h.b16 %v512
    %v1034 = vunpack.c.l.b16 %v513
    %v1035 = vunpack.c.h.b16 %v513
    %v1036 = vunpack.c.l.b16 %v514
    %v1037 = vunpack.c.h.b16 %v514
    %v1038 = vunpack.c.l.b16 %v515
    %v1039 = vunpack.c.h.b16 %v515
    %v1040 = vunpack.c.l.b16 %v516
    %v1041 = vunpack.c.h.b16 %v516
    %v1042 = vunpack.c.l.b16 %v517
    %v1043 = vunpack.c.h.b16 %v517
    %v1044 = vunpack.c.l.b16 %v518
    %v1045 = vunpack.c.h.b16 %v518
    %v1046 = vunpack.c.l.b16 %v519
    %v1047 = vunpack.c.h.b16 %v519
    %v1048 = vunpack.c.l.b16 %v520
    %v1049 = vunpack.c.h.b16 %v520
    %v1050 = vunpack.c.l.b16 %v521
    %v1051 = vunpack.c.h.b16 %v521
    %v1052 = vunpack.c.l.b16 %v522
    %v1053 = vunpack.c.h.b16 %v522
    %v1054 = vunpack.c.l.b16 %v523
    %v1055 = vunpack.c.h.b16 %v523
    %v1056 = vunpack.c.l.b16 %v524
    %v1057 = vunpack.c.h.b16 %v524
    %v1058 = vunpack.c.l.b16 %v525
    %v1059 = vunpack.c.h.b16 %v525
    %v1060 = vunpack.c.l.b16 %v526
    %v1061 = vunpack.c.h.b16 %v526
    %v1062 = vunpack.c.l.b16 %v527
    %v1063 = vunpack.c.h.b16 %v527
    %v1064 = vunpack.c.l.b16 %v528
    %v1065 = vunpack.c.h.b16 %v528
    %v1066 = vunpack.c.l.b16 %v529
    %v1067 = vunpack.c.h.b16 %v529
    %v1068 = vunpack.c.l.b16 %v530
    %v1069 = vunpack.c.h.b16 %v530
    %v1070 = vunpack.c.l.b16 %v531
    %v1071 = vunpack.c.h.b16 %v531
    %v1072 = vunpack.c.l.b16 %v532
    %v1073 = vunpack.c.h.b16 %v532
    %v1074 = vunpack.c.l.b16 %v533
    %v1075 = vunpack.c.h.b16 %v533
    %v1076 = vunpack.c.l.b16 %v534
    %v1077 = vunpack.c.h.b16 %v534
    %v1078 = vunpack.c.l.b16 %v535
    %v1079 = vunpack.c.h.b16 %v535
    %v1080 = vunpack.c.l.b16 %v536
    %v1081 = vunpack.c.h.b16 %v536
    %v1082 = vunpack.c.l.b16 %v537
    %v1083 = vunpack.c.h.b16 %v537
    %v1084 = vunpack.c.l.b16 %v538
    %v1085 = vunpack.c.h.b16 %v538
    %v1086 = vunpack.c.l.b16 %v539
    %v1087 = vunpack.c.h.b16 %v539
    %v1088 = vunpack.c.l.b16 %v540
    %v1089 = vunpack.c.h.b16 %v540
    %v1090 = vunpack.c.l.b16 %v541
    %v1091 = vunpack.c.h.b16 %v541
    %v1092 = vunpack.c.l.b16 %v542
    %v1093 = vunpack.c.h.b16 %v542
    %v1094 = vunpack.c.l.b16 %v543
    %v1095 = vunpack.c.h.b16 %v543
    %v1096 = vunpack.c.l.b16 %v544
    %v1097 = vunpack.c.h.b16 %v544
    %v1098 = vunpack.c.l.b16 %v545
    %v1099 = vunpack.c.h.b16 %v545
    %v1100 = vunpack.c.l.b16 %v546
    %v1101 = vunpack.c.h.b16 %v546
    %v1102 = vunpack.c.l.b16 %v547
    %v1103 = vunpack.c.h.b16 %v547
    %v1104 = vunpack.c.l.b16 %v548
    %v1105 = vunpack.c.h.b16 %v548
    %v1106 = vunpack.c.l.b16 %v549
    %v1107 = vunpack.c.h.b16 %v549
    %v1108 = vunpack.c.l.b16 %v550
    %v1109 = vunpack.c.h.b16 %v550
    %v1110 = vunpack.c.l.b16 %v551
    %v1111 = vunpack.c.h.b16 %v551
    %v1112 = vunpack.c.l.b16 %v552
    %v1113 = vunpack.c.h.b16 %v552
    %v1114 = vunpack.c.l.b16 %v553
    %v1115 = vunpack.c.h.b16 %v553
    %v1116 = vunpack.c.l.b16 %v554
    %v1117 = vunpack.c.h.b16 %v554
    %v1118 = vunpack.c.l.b16 %v555
    %v1119 = vunpack.c.h.b16 %v555
    %v1120 = vunpack.c.l.b16 %v556
    %v1121 = vunpack.c.h.b16 %v556
    %v1122 = vunpack.c.l.b16 %v557
    %v1123 = vunpack.c.h.b16 %v557
    %v1124 = vunpack.c.l.b16 %v558
    %v1125 = vunpack.c.h.b16 %v558
    %v1126 = vunpack.c.l.b16 %v559
    %v1127 = vunpack.c.h.b16 %v559
    %v1128 = vunpack.c.l.b16 %v560
    %v1129 = vunpack.c.h.b16 %v560
    %v1130 = vunpack.c.l.b16 %v561
    %v1131 = vunpack.c.h.b16 %v561
    %v1132 = vunpack.c.l.b16 %v562
    %v1133 = vunpack.c.h.b16 %v562
    %v1134 = vunpack.c.l.b16 %v563
    %v1135 = vunpack.c.h.b16 %v563
    %v1136 = vunpack.c.l.b16 %v564
    %v1137 = vunpack.c.h.b16 %v564
    %v1138 = vunpack.c.l.b16 %v565
    %v1139 = vunpack.c.h.b16 %v565
    %v1140 = vunpack.c.l.b16 %v566
    %v1141 = vunpack.c.h.b16 %v566
    %v1142 = vunpack.c.l.b16 %v567
    %v1143 = vunpack.c.h.b16 %v567
    %v1144 = vunpack.c.l.b16 %v568
    %v1145 = vunpack.c.h.b16 %v568
    %v1146 = vunpack.c.l.b16 %v569
    %v1147 = vunpack.c.h.b16 %v569
    %v1148 = vunpack.c.l.b16 %v570
    %v1149 = vunpack.c.h.b16 %v570
    %v1150 = vunpack.c.l.b16 %v571
    %v1151 = vunpack.c.h.b16 %v571
    %v1152 = vunpack.c.l.b16 %v572
    %v1153 = vunpack.c.h.b16 %v572
    %v1154 = vunpack.c.l.b16 %v573
    %v1155 = vunpack.c.h.b16 %v573
    %v1156 = vunpack.c.l.b16 %v574
    %v1157 = vunpack.c.h.b16 %v574
    %v1158 = vunpack.c.l.b16 %v575
    %v1159 = vunpack.c.h.b16 %v575
    %v1160 = vunpack.c.l.b16 %v576
    %v1161 = vunpack.c.h.b16 %v576
    %v1162 = vunpack.c.l.b16 %v577
    %v1163 = vunpack.c.h.b16 %v577
    %v1164 = vunpack.c.l.b16 %v578
    %v1165 = vunpack.c.h.b16 %v578
    %v1166 = vunpack.c.l.b16 %v579
    %v1167 = vunpack.c.h.b16 %v579
    %v1168 = vunpack.c.l.b16 %v580
    %v1169 = vunpack.c.h.b16 %v580
    %v1170 = vunpack.c.l.b16 %v581
    %v1171 = vunpack.c.h.b16 %v581
    %v1172 = vunpack.c.l.b16 %v582
    %v1173 = vunpack.c.h.b16 %v582
    %v1174 = vunpack.c.l.b16 %v583
    %v1175 = vunpack.c.h.b16 %v583
    %v1176 = vunpack.c.l.b16 %v584
    %v1177 = vunpack.c.h.b16 %v584
    %v1178 = vunpack.c.l.b16 %v585
    %v1179 = vunpack.c.h.b16 %v585
    %v1180 = vunpack.c.l.b16 %v586
    %v1181 = vunpack.c.h.b16 %v586
    %v1182 = vunpack.c.l.b16 %v587
    %v1183 = vunpack.c.h.b16 %v587
    %v1184 = vunpack.c.l.b16 %v588
    %v1185 = vunpack.c.h.b16 %v588
    %v1186 = vunpack.c.l.b16 %v589
    %v1187 = vunpack.c.h.b16 %v589
    %v1188 = vunpack.c.l.b16 %v590
    %v1189 = vunpack.c.h.b16 %v590
    %v1190 = vunpack.c.l.b16 %v591
    %v1191 = vunpack.c.h.b16 %v591
    %v1192 = vunpack.c.l.b16 %v592
    %v1193 = vunpack.c.h.b16 %v592
    %v1194 = vunpack.c.l.b16 %v593
    %v1195 = vunpack.c.h.b16 %v593
    %v1196 = vunpack.c.l.b16 %v594
    %v1197 = vunpack.c.h.b16 %v594
    %v1198 = vunpack.c.l.b16 %v595
    %v1199 = vunpack.c.h.b16 %v595
    %v1200 = vunpack.c.l.b16 %v596
    %v1201 = vunpack.c.h.b16 %v596
    %v1202 = vunpack.c.l.b16 %v597
    %v1203 = vunpack.c.h.b16 %v597
    %v1204 = vunpack.c.l.b16 %v598
    %v1205 = vunpack.c.h.b16 %v598
    %v1206 = vunpack.c.l.b16 %v599
    %v1207 = vunpack.c.h.b16 %v599
    %v1208 = vunpack.c.l.b16 %v600
    %v1209 = vunpack.c.h.b16 %v600
    %v1210 = vunpack.c.l.b16 %v601
    %v1211 = vunpack.c.h.b16 %v601
    %v1212 = vunpack.c.l.b16 %v602
    %v1213 = vunpack.c.h.b16 %v602
    %v1214 = vunpack.c.l.b16 %v603
    %v1215 = vunpack.c.h.b16 %v603
    %v1216 = vunpack.c.l.b16 %v604
    %v1217 = vunpack.c.h.b16 %v604
    %v1218 = vunpack.c.l.b16 %v605
    %v1219 = vunpack.c.h.b16 %v605
    %v1220 = vunpack.c.l.b16 %v606
    %v1221 = vunpack.c.h.b16 %v606
    %v1222 = vunpack.c.l.b16 %v607
    %v1223 = vunpack.c.h.b16 %v607
    %v1224 = vunpack.c.l.b16 %v608
    %v1225 = vunpack.c.h.b16 %v608
    %v1226 = vunpack.c.l.b16 %v609
    %v1227 = vunpack.c.h.b16 %v609
    %v1228 = vunpack.c.l.b16 %v610
    %v1229 = vunpack.c.h.b16 %v610
    %v1230 = vunpack.c.l.b16 %v611
    %v1231 = vunpack.c.h.b16 %v611
    %v1232 = vunpack.c.l.b16 %v612
    %v1233 = vunpack.c.h.b16 %v612
    %v1234 = vunpack.c.l.b16 %v613
    %v1235 = vunpack.c.h.b16 %v613
    %v1236 = vunpack.c.l.b16 %v614
    %v1237 = vunpack.c.h.b16 %v614
    %v1238 = vunpack.c.l.b16 %v615
    %v1239 = vunpack.c.h.b16 %v615
    %v1240 = vunpack.c.l.b16 %v616
    %v1241 = vunpack.c.h.b16 %v616
    %v1242 = vunpack.c.l.b16 %v617
    %v1243 = vunpack.c.h.b16 %v617
    %v1244 = vunpack.c.l.b16 %v618
    %v1245 = vunpack.c.h.b16 %v618
    %v1246 = vunpack.c.l.b16 %v619
    %v1247 = vunpack.c.h.b16 %v619
    %v1248 = vunpack.c.l.b16 %v620
    %v1249 = vunpack.c.h.b16 %v620
    %v1250 = vunpack.c.l.b16 %v621
    %v1251 = vunpack.c.h.b16 %v621
    %v1252 = vunpack.c.l.b16 %v622
    %v1253 = vunpack.c.h.b16 %v622
    %v1254 = vunpack.c.l.b16 %v623
    %v1255 = vunpack.c.h.b16 %v623
    %v1256 = vunpack.c.l.b16 %v624
    %v1257 = vunpack.c.h.b16 %v624
    %v1258 = vunpack.c.l.b16 %v625
    %v1259 = vunpack.c.h.b16 %v625
    %v1260 = vunpack.c.l.b16 %v626
    %v1261 = vunpack.c.h.b16 %v626
    %v1262 = vunpack.c.l.b16 %v627
    %v1263 = vunpack.c.h.b16 %v627
    %v1264 = vunpack.c.l.b16 %v628
    %v1265 = vunpack.c.h.b16 %v628
    %v1266 = vunpack.c.l.b16 %v629
    %v1267 = vunpack.c.h.b16 %v629
    %v1268 = vunpack.c.l.b16 %v630
    %v1269 = vunpack.c.h.b16 %v630
    %v1270 = vunpack.c.l.b16 %v631
    %v1271 = vunpack.c.h.b16 %v631
    %v1272 = vunpack.c.l.b16 %v632
    %v1273 = vunpack.c.h.b16 %v632
    %v1274 = vunpack.c.l.b16 %v633
    %v1275 = vunpack.c.h.b16 %v633
    %v1276 = vunpack.c.l.b16 %v634
    %v1277 = vunpack.c.h.b16 %v634
    %v1278 = vunpack.c.l.b16 %v635
    %v1279 = vunpack.c.h.b16 %v635
    %v1280 = vunpack.c.l.b16 %v636
    %v1281 = vunpack.c.h.b16 %v636
    %v1282 = vunpack.c.l.b16 %v637
    %v1283 = vunpack.c.h.b16 %v637
    %v1284 = vunpack.c.l.b16 %v638
    %v1285 = vunpack.c.h.b16 %v638
    %v1286 = vunpack.c.l.b16 %v639
    %v1287 = vunpack.c.h.b16 %v639
    %v1288 = vunpack.c.l.b16 %v640
    %v1289 = vunpack.c.h.b16 %v640
    %v1290 = vunpack.c.l.b16 %v641
    %v1291 = vunpack.c.h.b16 %v641
    %v1292 = vunpack.c.l.b16 %v642
    %v1293 = vunpack.c.h.b16 %v642
    %v1294 = vunpack.c.l.b16 %v643
    %v1295 = vunpack.c.h.b16 %v643
    %v1296 = vunpack.c.l.b16 %v644
    %v1297 = vunpack.c.h.b16 %v644
    %v1298 = vunpack.c.l.b16 %v645
    %v1299 = vunpack.c.h.b16 %v645
    %v1300 = vunpack.c.l.b16 %v646
    %v1301 = vunpack.c.h.b16 %v646
    %v1302 = vunpack.c.l.b16 %v647
    %v1303 = vunpack.c.h.b16 %v647
    %v1304 = vunpack.c.l.b16 %v648
    %v1305 = vunpack.c.h.b16 %v648
    %v1306 = vunpack.c.l.b16 %v649
    %v1307 = vunpack.c.h.b16 %v649
    %v1308 = vunpack.c.l.b16 %v650
    %v1309 = vunpack.c.h.b16 %v650
    %v1310 = vunpack.c.l.b16 %v651
    %v1311 = vunpack.c.h.b16 %v651
    %v1312 = vunpack.c.l.b16 %v652
    %v1313 = vunpack.c.h.b16 %v652
    %v1314 = vunpack.c.l.b16 %v653
    %v1315 = vunpack.c.h.b16 %v653
    %v1316 = vunpack.c.l.b16 %v654
    %v1317 = vunpack.c.h.b16 %v654
    %v1318 = vunpack.c.l.b16 %v655
    %v1319 = vunpack.c.h.b16 %v655
    %v1320 = vunpack.c.l.b16 %v656
    %v1321 = vunpack.c.h.b16 %v656
    %v1322 = vunpack.c.l.b16 %v657
    %v1323 = vunpack.c.h.b16 %v657
    %v1324 = vunpack.c.l.b16 %v658
    %v1325 = vunpack.c.h.b16 %v658
    %v1326 = vunpack.c.l.b16 %v659
    %v1327 = vunpack.c.h.b16 %v659
    %v1328 = vunpack.c.l.b16 %v660
    %v1329 = vunpack.c.h.b16 %v660
    %v1330 = vunpack.c.l.b16 %v661
    %v1331 = vunpack.c.h.b16 %v661
    %v1332 = vunpack.c.l.b16 %v662
    %v1333 = vunpack.c.h.b16 %v662
    %v1334 = vunpack.c.l.b16 %v663
    %v1335 = vunpack.c.h.b16 %v663
    %v1336 = vunpack.c.l.b16 %v664
    %v1337 = vunpack.c.h.b16 %v664
    %v1338 = vunpack.c.l.b16 %v665
    %v1339 = vunpack.c.h.b16 %v665
    %v1340 = vunpack.c.l.b16 %v666
    %v1341 = vunpack.c.h.b16 %v666
    %v1342 = vunpack.c.l.b16 %v667
    %v1343 = vunpack.c.h.b16 %v667
    %v1344 = vunpack.c.l.b16 %v668
    %v1345 = vunpack.c.h.b16 %v668
    %v1346 = vunpack.c.l.b16 %v669
    %v1347 = vunpack.c.h.b16 %v669
    %v1348 = vunpack.c.l.b16 %v670
    %v1349 = vunpack.c.h.b16 %v670
    %v1350 = vunpack.c.l.b16 %v671
    %v1351 = vunpack.c.h.b16 %v671
    %v1352 = vunpack.c.l.b16 %v672
    %v1353 = vunpack.c.h.b16 %v672
    %v1354 = vunpack.c.l.b16 %v673
    %v1355 = vunpack.c.h.b16 %v673
    %v1356 = vunpack.c.l.b16 %v674
    %v1357 = vunpack.c.h.b16 %v674
    %v1358 = vunpack.c.l.b16 %v675
    %v1359 = vunpack.c.h.b16 %v675
    %v1360 = vunpack.c.l.b16 %v676
    %v1361 = vunpack.c.h.b16 %v676
    %v1362 = vunpack.c.l.b16 %v677
    %v1363 = vunpack.c.h.b16 %v677
    %v1364 = vunpack.c.l.b16 %v678
    %v1365 = vunpack.c.h.b16 %v678
    %v1366 = vunpack.c.l.b16 %v679
    %v1367 = vunpack.c.h.b16 %v679
    %v1368 = vunpack.c.l.b16 %v680
    %v1369 = vunpack.c.h.b16 %v680
    %v1370 = vunpack.c.l.b16 %v681
    %v1371 = vunpack.c.h.b16 %v681
    %v1372 = vunpack.c.l.b16 %v682
    %v1373 = vunpack.c.h.b16 %v682
    %v1374 = vunpack.c.l.b16 %v683
    %v1375 = vunpack.c.h.b16 %v683
    %v1376 = vunpack.c.l.b16 %v684
    %v1377 = vunpack.c.h.b16 %v684
    %v1378 = vunpack.c.l.b16 %v685
    %v1379 = vunpack.c.h.b16 %v685
    %v1380 = vunpack.c.l.b16 %v686
    %v1381 = vunpack.c.h.b16 %v686
    %v1382 = vunpack.c.l.b16 %v687
    %v1383 = vunpack.c.h.b16 %v687
    %v1384 = vunpack.c.l.b16 %v688
    %v1385 = vunpack.c.h.b16 %v688
    %v1386 = vunpack.c.l.b16 %v689
    %v1387 = vunpack.c.h.b16 %v689
    %v1388 = vunpack.c.l.b16 %v690
    %v1389 = vunpack.c.h.b16 %v690
    %v1390 = vunpack.c.l.b16 %v691
    %v1391 = vunpack.c.h.b16 %v691
    %v1392 = vunpack.c.l.b16 %v692
    %v1393 = vunpack.c.h.b16 %v692
    %v1394 = vunpack.c.l.b16 %v693
    %v1395 = vunpack.c.h.b16 %v693
    %v1396 = vunpack.c.l.b16 %v694
    %v1397 = vunpack.c.h.b16 %v694
    %v1398 = vunpack.c.l.b16 %v695
    %v1399 = vunpack.c.h.b16 %v695
    %v1400 = vunpack.c.l.b16 %v696
    %v1401 = vunpack.c.h.b16 %v696
    %v1402 = vunpack.c.l.b16 %v697
    %v1403 = vunpack.c.h.b16 %v697
    %v1404 = vunpack.c.l.b16 %v698
    %v1405 = vunpack.c.h.b16 %v698
    %v1406 = vunpack.c.l.b16 %v699
    %v1407 = vunpack.c.h.b16 %v699
    %v1408 = vunpack.c.l.b16 %v700
    %v1409 = vunpack.c.h.b16 %v700
    %v1410 = vunpack.c.l.b16 %v701
    %v1411 = vunpack.c.h.b16 %v701
    %v1412 = vunpack.c.l.b16 %v702
    %v1413 = vunpack.c.h.b16 %v702
    %v1414 = vunpack.c.l.b16 %v703
    %v1415 = vunpack.c.h.b16 %v703
    %v1416 = vunpack.c.l.b16 %v704
    %v1417 = vunpack.c.h.b16 %v704
    %v1418 = vunpack.c.l.b16 %v705
    %v1419 = vunpack.c.h.b16 %v705
    %v1420 = vunpack.c.l.b16 %v706
    %v1421 = vunpack.c.h.b16 %v706
    %v1422 = vunpack.c.l.b16 %v707
    %v1423 = vunpack.c.h.b16 %v707
    %v1424 = vunpack.c.l.b16 %v708
    %v1425 = vunpack.c.h.b16 %v708
    %v1426 = vunpack.c.l.b16 %v709
    %v1427 = vunpack.c.h.b16 %v709
    %v1428 = vunpack.c.l.b16 %v710
    %v1429 = vunpack.c.h.b16 %v710
    %v1430 = vunpack.c.l.b16 %v711
    %v1431 = vunpack.c.h.b16 %v711
    %v1432 = vunpack.c.l.b16 %v712
    %v1433 = vunpack.c.h.b16 %v712
    %v1434 = vunpack.c.l.b16 %v713
    %v1435 = vunpack.c.h.b16 %v713
    %v1436 = vunpack.c.l.b16 %v714
    %v1437 = vunpack.c.h.b16 %v714
    %v1438 = vunpack.c.l.b16 %v715
    %v1439 = vunpack.c.h.b16 %v715
    %v1440 = vunpack.c.l.b16 %v716
    %v1441 = vunpack.c.h.b16 %v716
    %v1442 = vunpack.c.l.b16 %v717
    %v1443 = vunpack.c.h.b16 %v717
    %v1444 = vunpack.c.l.b16 %v718
    %v1445 = vunpack.c.h.b16 %v718
    %v1446 = vunpack.c.l.b16 %v719
    %v1447 = vunpack.c.h.b16 %v719
    %v1448 = vunpack.c.l.b16 %v720
    %v1449 = vunpack.c.h.b16 %v720
    %v1450 = vunpack.c.l.b16 %v721
    %v1451 = vunpack.c.h.b16 %v721
    %v1452 = vunpack.c.l.b16 %v722
    %v1453 = vunpack.c.h.b16 %v722
    %v1454 = vunpack.c.l.b16 %v723
    %v1455 = vunpack.c.h.b16 %v723
    %v1456 = vunpack.c.l.b16 %v724
    %v1457 = vunpack.c.h.b16 %v724
    %v1458 = vunpack.c.l.b16 %v725
    %v1459 = vunpack.c.h.b16 %v725
    %v1460 = vunpack.c.l.b16 %v726
    %v1461 = vunpack.c.h.b16 %v726
    %v1462 = vunpack.c.l.b16 %v727
    %v1463 = vunpack.c.h.b16 %v727
    %v1464 = vunpack.c.l.b16 %v728
    %v1465 = vunpack.c.h.b16 %v728
    %v1466 = vunpack.c.l.b16 %v729
    %v1467 = vunpack.c.h.b16 %v729
    %v1468 = vunpack.c.l.b16 %v730
    %v1469 = vunpack.c.h.b16 %v730
    %v1470 = vunpack.c.l.b16 %v731
    %v1471 = vunpack.c.h.b16 %v731
    %v1472 = vunpack.c.l.b16 %v732
    %v1473 = vunpack.c.h.b16 %v732
    %v1474 = vunpack.c.l.b16 %v733
    %v1475 = vunpack.c.h.b16 %v733
    %v1476 = vunpack.c.l.b16 %v734
    %v1477 = vunpack.c.h.b16 %v734
    %v1478 = vunpack.c.l.b16 %v735
    %v1479 = vunpack.c.h.b16 %v735
    %v1480 = vunpack.c.l.b16 %v736
    %v1481 = vunpack.c.h.b16 %v736
    %v1482 = vunpack.c.l.b16 %v737
    %v1483 = vunpack.c.h.b16 %v737
    %v1484 = vunpack.c.l.b16 %v738
    %v1485 = vunpack.c.h.b16 %v738
    %v1486 = vunpack.c.l.b16 %v739
    %v1487 = vunpack.c.h.b16 %v739
    %v1488 = vunpack.c.l.b16 %v740
    %v1489 = vunpack.c.h.b16 %v740
    %v1490 = vunpack.c.l.b16 %v741
    %v1491 = vunpack.c.h.b16 %v741
    %v1492 = vunpack.c.l.b16 %v742
    %v1493 = vunpack.c.h.b16 %v742
    %v1494 = vunpack.c.l.b16 %v743
    %v1495 = vunpack.c.h.b16 %v743
    %v1496 = vunpack.c.l.b16 %v744
    %v1497 = vunpack.c.h.b16 %v744
    %v1498 = vunpack.c.l.b16 %v745
    %v1499 = vunpack.c.h.b16 %v745
    %v1500 = vunpack.c.l.b16 %v746
    %v1501 = vunpack.c.h.b16 %v746
    %v1502 = vunpack.c.l.b16 %v747
    %v1503 = vunpack.c.h.b16 %v747
    %v1504 = vunpack.c.l.b16 %v748
    %v1505 = vunpack.c.h.b16 %v748
    %v1506 = vunpack.c.l.b16 %v749
    %v1507 = vunpack.c.h.b16 %v749
    %v1508 = vunpack.c.l.b16 %v750
    %v1509 = vunpack.c.h.b16 %v750
    %v1510 = vunpack.c.l.b16 %v751
    %v1511 = vunpack.c.h.b16 %v751
    %v1512 = vunpack.c.l.b16 %v752
    %v1513 = vunpack.c.h.b16 %v752
    %v1514 = vunpack.c.l.b16 %v753
    %v1515 = vunpack.c.h.b16 %v753
    %v1516 = vunpack.c.l.b16 %v754
    %v1517 = vunpack.c.h.b16 %v754
    %v1518 = vunpack.c.l.b16 %v755
    %v1519 = vunpack.c.h.b16 %v755
    %v1520 = vunpack.c.l.b16 %v756
    %v1521 = vunpack.c.h.b16 %v756
    %v1522 = vunpack.c.l.b16 %v757
    %v1523 = vunpack.c.h.b16 %v757
    %v1524 = vunpack.c.l.b16 %v758
    %v1525 = vunpack.c.h.b16 %v758
    %v1526 = vunpack.c.l.b16 %v759
    %v1527 = vunpack.c.h.b16 %v759
    %v1528 = vunpack.c.l.b16 %v760
    %v1529 = vunpack.c.h.b16 %v760
    %v1530 = vunpack.c.l.b16 %v761
    %v1531 = vunpack.c.h.b16 %v761
    %v1532 = vunpack.c.l.b16 %v762
    %v1533 = vunpack.c.h.b16 %v762
    %v1534 = vunpack.c.l.b16 %v763
    %v1535 = vunpack.c.h.b16 %v763
    %v1536 = vunpack.c.l.b16 %v764
    %v1537 = vunpack.c.h.b16 %v764
    %v1538 = vunpack.c.l.b16 %v765
    %v1539 = vunpack.c.h.b16 %v765
    %v1540 = vpack.c.b16 %v1030, %v1028
    %v1541 = vpack.c.b16 %v1031, %v1029
    %v1542 = vpack.c.b16 %v1034, %v1032
    %v1543 = vpack.c.b16 %v1035, %v1033
    %v1544 = vpack.c.b16 %v1038, %v1036
    %v1545 = vpack.c.b16 %v1039, %v1037
    %v1546 = vpack.c.b16 %v1042, %v1040
    %v1547 = vpack.c.b16 %v1043, %v1041
    %v1548 = vpack.c.b16 %v1046, %v1044
    %v1549 = vpack.c.b16 %v1047, %v1045
    %v1550 = vpack.c.b16 %v1050, %v1048
    %v1551 = vpack.c.b16 %v1051, %v1049
    %v1552 = vpack.c.b16 %v1054, %v1052
    %v1553 = vpack.c.b16 %v1055, %v1053
    %v1554 = vpack.c.b16 %v1058, %v1056
    %v1555 = vpack.c.b16 %v1059, %v1057
    %v1556 = vpack.c.b16 %v1062, %v1060
    %v1557 = vpack.c.b16 %v1063, %v1061
    %v1558 = vpack.c.b16 %v1066, %v1064
    %v1559 = vpack.c.b16 %v1067, %v1065
    %v1560 = vpack.c.b16 %v1070, %v1068
    %v1561 = vpack.c.b16 %v1071, %v1069
    %v1562 = vpack.c.b16 %v1074, %v1072
    %v1563 = vpack.c.b16 %v1075, %v1073
    %v1564 = vpack.c.b16 %v1078, %v1076
    %v1565 = vpack.c.b16 %v1079, %v1077
    %v1566 = vpack.c.b16 %v1082, %v1080
    %v1567 = vpack.c.b16 %v1083, %v1081
    %v1568 = vpack.c.b16 %v1086, %v1084
    %v1569 = vpack.c.b16 %v1087, %v1085
    %v1570 = vpack.c.b16 %v1090, %v1088
    %v1571 = vpack.c.b16 %v1091, %v1089
    %v1572 = vpack.c.b16 %v1094, %v1092
    %v1573 = vpack.c.b16 %v1095, %v1093
    %v1574 = vpack.c.b16 %v1098, %v1096
    %v1575 = vpack.c.b16 %v1099, %v1097
    %v1576 = vpack.c.b16 %v1102, %v1100
    %v1577 = vpack.c.b16 %v1103, %v1101
    %v1578 = vpack.c.b16 %v1106, %v1104
    %v1579 = vpack.c.b16 %v1107, %v1105
    %v1580 = vpack.c.b16 %v1110, %v1108
    %v1581 = vpack.c.b16 %v1111, %v1109
    %v1582 = vpack.c.b16 %v1114, %v1112
    %v1583 = vpack.c.b16 %v1115, %v1113
    %v1584 = vpack.c.b16 %v1118, %v1116
    %v1585 = vpack.c.b16 %v1119, %v1117
    %v1586 = vpack.c.b16 %v1122, %v1120
    %v1587 = vpack.c.b16 %v1123, %v1121
    %v1588 = vpack.c.b16 %v1126, %v1124
    %v1589 = vpack.c.b16 %v1127, %v1125
    %v1590 = vpack.c.b16 %v1130, %v1128
    %v1591 = vpack.c.b16 %v1131, %v1129
    %v1592 = vpack.c.b16 %v1134, %v1132
    %v1593 = vpack.c.b16 %v1135, %v1133
    %v1594 = vpack.c.b16 %v1138, %v1136
    %v1595 = vpack.c.b16 %v1139, %v1137
    %v1596 = vpack.c.b16 %v1142, %v1140
    %v1597 = vpack.c.b16 %v1143, %v1141
    %v1598 = vpack.c.b16 %v1146, %v1144
    %v1599 = vpack.c.b16 %v1147, %v1145
    %v1600 = vpack.c.b16 %v1150, %v1148
    %v1601 = vpack.c.b16 %v1151, %v1149
    %v1602 = vpack.c.b16 %v1154, %v1152
    %v1603 = vpack.c.b16 %v1155, %v1153
    %v1604 = vpack.c.b16 %v1158, %v1156
    %v1605 = vpack.c.b16 %v1159, %v1157
    %v1606 = vpack.c.b16 %v1162, %v1160
    %v1607 = vpack.c.b16 %v1163, %v1161
    %v1608 = vpack.c.b16 %v1166, %v1164
    %v1609 = vpack.c.b16 %v1167, %v1165
    %v1610 = vpack.c.b16 %v1170, %v1168
    %v1611 = vpack.c.b16 %v1171, %v1169
    %v1612 = vpack.c.b16 %v1174, %v1172
    %v1613 = vpack.c.b16 %v1175, %v1173
    %v1614 = vpack.c.b16 %v1178, %v1176
    %v1615 = vpack.c.b16 %v1179, %v1177
    %v1616 = vpack.c.b16 %v1182, %v1180
    %v1617 = vpack.c.b16 %v1183, %v1181
    %v1618 = vpack.c.b16 %v1186, %v1184
    %v1619 = vpack.c.b16 %v1187, %v1185
    %v1620 = vpack.c.b16 %v1190, %v1188
    %v1621 = vpack.c.b16 %v1191, %v1189
    %v1622 = vpack.c.b16 %v1194, %v1192
    %v1623 = vpack.c.b16 %v1195, %v1193
    %v1624 = vpack.c.b16 %v1198, %v1196
    %v1625 = vpack.c.b16 %v1199, %v1197
    %v1626 = vpack.c.b16 %v1202, %v1200
    %v1627 = vpack.c.b16 %v1203, %v1201
    %v1628 = vpack.c.b16 %v1206, %v1204
    %v1629 = vpack.c.b16 %v1207, %v1205
    %v1630 = vpack.c.b16 %v1210, %v1208
    %v1631 = vpack.c.b16 %v1211, %v1209
    %v1632 = vpack.c.b16 %v1214, %v1212
    %v1633 = vpack.c.b16 %v1215, %v1213
    %v1634 = vpack.c.b16 %v1218, %v1216
    %v1635 = vpack.c.b16 %v1219, %v1217
    %v1636 = vpack.c.b16 %v1222, %v1220
    %v1637 = vpack.c.b16 %v1223, %v1221
    %v1638 = vpack.c.b16 %v1226, %v1224
    %v1639 = vpack.c.b16 %v1227, %v1225
    %v1640 = vpack.c.b16 %v1230, %v1228
    %v1641 = vpack.c.b16 %v1231, %v1229
    %v1642 = vpack.c.b16 %v1234, %v1232
    %v1643 = vpack.c.b16 %v1235, %v1233
    %v1644 = vpack.c.b16 %v1238, %v1236
    %v1645 = vpack.c.b16 %v1239, %v1237
    %v1646 = vpack.c.b16 %v1242, %v1240
    %v1647 = vpack.c.b16 %v1243, %v1241
    %v1648 = vpack.c.b16 %v1246, %v1244
    %v1649 = vpack.c.b16 %v1247, %v1245
    %v1650 = vpack.c.b16 %v1250, %v1248
    %v1651 = vpack.c.b16 %v1251, %v1249
    %v1652 = vpack.c.b16 %v1254, %v1252
    %v1653 = vpack.c.b16 %v1255, %v1253
    %v1654 = vpack.c.b16 %v1258, %v1256
    %v1655 = vpack.c.b16 %v1259, %v1257
    %v1656 = vpack.c.b16 %v1262, %v1260
    %v1657 = vpack.c.b16 %v1263, %v1261
    %v1658 = vpack.c.b16 %v1266, %v1264
    %v1659 = vpack.c.b16 %v1267, %v1265
    %v1660 = vpack.c.b16 %v1270, %v1268
    %v1661 = vpack.c.b16 %v1271, %v1269
    %v1662 = vpack.c.b16 %v1274, %v1272
    %v1663 = vpack.c.b16 %v1275, %v1273
    %v1664 = vpack.c.b16 %v1278, %v1276
    %v1665 = vpack.c.b16 %v1279, %v1277
    %v1666 = vpack.c.b16 %v1282, %v1280
    %v1667 = vpack.c.b16 %v1283, %v1281
    %v1668 = vpack.c.b16 %v1286, %v1284
    %v1669 = vpack.c.b16 %v1287, %v1285
    %v1670 = vpack.c.b16 %v1290, %v1288
    %v1671 = vpack.c.b16 %v1291, %v1289
    %v1672 = vpack.c.b16 %v1294, %v1292
    %v1673 = vpack.c.b16 %v1295, %v1293
    %v1674 = vpack.c.b16 %v1298, %v1296
    %v1675 = vpack.c.b16 %v1299, %v1297
    %v1676 = vpack.c.b16 %v1302, %v1300
    %v1677 = vpack.c.b16 %v1303, %v1301
    %v1678 = vpack.c.b16 %v1306, %v1304
    %v1679 = vpack.c.b16 %v1307, %v1305
    %v1680 = vpack.c.b16 %v1310, %v1308
    %v1681 = vpack.c.b16 %v1311, %v1309
    %v1682 = vpack.c.b16 %v1314, %v1312
    %v1683 = vpack.c.b16 %v1315, %v1313
    %v1684 = vpack.c.b16 %v1318, %v1316
    %v1685 = vpack.c.b16 %v1319, %v1317
    %v1686 = vpack.c.b16 %v1322, %v1320
    %v1687 = vpack.c.b16 %v1323, %v1321
    %v1688 = vpack.c.b16 %v1326, %v1324
    %v1689 = vpack.c.b16 %v1327, %v1325
    %v1690 = vpack.c.b16 %v1330, %v1328
    %v1691 = vpack.c.b16 %v1331, %v1329
    %v1692 = vpack.c.b16 %v1334, %v1332
    %v1693 = vpack.c.b16 %v1335, %v1333
    %v1694 = vpack.c.b16 %v1338, %v1336
    %v1695 = vpack.c.b16 %v1339, %v1337
    %v1696 = vpack.c.b16 %v1342, %v1340
    %v1697 = vpack.c.b16 %v1343, %v1341
    %v1698 = vpack.c.b16 %v1346, %v1344
    %v1699 = vpack.c.b16 %v1347, %v1345
    %v1700 = vpack.c.b16 %v1350, %v1348
    %v1701 = vpack.c.b16 %v1351, %v1349
    %v1702 = vpack.c.b16 %v1354, %v1352
    %v1703 = vpack.c.b16 %v1355, %v1353
    %v1704 = vpack.c.b16 %v1358, %v1356
    %v1705 = vpack.c.b16 %v1359, %v1357
    %v1706 = vpack.c.b16 %v1362, %v1360
    %v1707 = vpack.c.b16 %v1363, %v1361
    %v1708 = vpack.c.b16 %v1366, %v1364
    %v1709 = vpack.c.b16 %v1367, %v1365
    %v1710 = vpack.c.b16 %v1370, %v1368
    %v1711 = vpack.c.b16 %v1371, %v1369
    %v1712 = vpack.c.b16 %v1374, %v1372
    %v1713 = vpack.c.b16 %v1375, %v1373
    %v1714 = vpack.c.b16 %v1378, %v1376
    %v1715 = vpack.c.b16 %v1379, %v1377
    %v1716 = vpack.c.b16 %v1382, %v1380
    %v1717 = vpack.c.b16 %v1383, %v1381
    %v1718 = vpack.c.b16 %v1386, %v1384
    %v1719 = vpack.c.b16 %v1387, %v1385
    %v1720 = vpack.c.b16 %v1390, %v1388
    %v1721 = vpack.c.b16 %v1391, %v1389
    %v1722 = vpack.c.b16 %v1394, %v1392
    %v1723 = vpack.c.b16 %v1395, %v1393
    %v1724 = vpack.c.b16 %v1398, %v1396
    %v1725 = vpack.c.b16 %v1399, %v1397
    %v1726 = vpack.c.b16 %v1402, %v1400
    %v1727 = vpack.c.b16 %v1403, %v1401
    %v1728 = vpack.c.b16 %v1406, %v1404
    %v1729 = vpack.c.b16 %v1407, %v1405
    %v1730 = vpack.c.b16 %v1410, %v1408
    %v1731 = vpack.c.b16 %v1411, %v1409
    %v1732 = vpack.c.b16 %v1414, %v1412
    %v1733 = vpack.c.b16 %v1415, %v1413
    %v1734 = vpack.c.b16 %v1418, %v1416
    %v1735 = vpack.c.b16 %v1419, %v1417
    %v1736 = vpack.c.b16 %v1422, %v1420
    %v1737 = vpack.c.b16 %v1423, %v1421
    %v1738 = vpack.c.b16 %v1426, %v1424
    %v1739 = vpack.c.b16 %v1427, %v1425
    %v1740 = vpack.c.b16 %v1430, %v1428
    %v1741 = vpack.c.b16 %v1431, %v1429
    %v1742 = vpack.c.b16 %v1434, %v1432
    %v1743 = vpack.c.b16 %v1435, %v1433
    %v1744 = vpack.c.b16 %v1438, %v1436
    %v1745 = vpack.c.b16 %v1439, %v1437
    %v1746 = vpack.c.b16 %v1442, %v1440
    %v1747 = vpack.c.b16 %v1443, %v1441
    %v1748 = vpack.c.b16 %v1446, %v1444
    %v1749 = vpack.c.b16 %v1447, %v1445
    %v1750 = vpack.c.b16 %v1450, %v1448
    %v1751 = vpack.c.b16 %v1451, %v1449
    %v1752 = vpack.c.b16 %v1454, %v1452
    %v1753 = vpack.c.b16 %v1455, %v1453
    %v1754 = vpack.c.b16 %v1458, %v1456
    %v1755 = vpack.c.b16 %v1459, %v1457
    %v1756 = vpack.c.b16 %v1462, %v1460
    %v1757 = vpack.c.b16 %v1463, %v1461
    %v1758 = vpack.c.b16 %v1466, %v1464
    %v1759 = vpack.c.b16 %v1467, %v1465
    %v1760 = vpack.c.b16 %v1470, %v1468
    %v1761 = vpack.c.b16 %v1471, %v1469
    %v1762 = vpack.c.b16 %v1474, %v1472
    %v1763 = vpack.c.b16 %v1475, %v1473
    %v1764 = vpack.c.b16 %v1478, %v1476
    %v1765 = vpack.c.b16 %v1479, %v1477
    %v1766 = vpack.c.b16 %v1482, %v1480
    %v1767 = vpack.c.b16 %v1483, %v1481
    %v1768 = vpack.c.b16 %v1486, %v1484
    %v1769 = vpack.c.b16 %v1487, %v1485
    %v1770 = vpack.c.b16 %v1490, %v1488
    %v1771 = vpack.c.b16 %v1491, %v1489
    %v1772 = vpack.c.b16 %v1494, %v1492
    %v1773 = vpack.c.b16 %v1495, %v1493
    %v1774 = vpack.c.b16 %v1498, %v1496
    %v1775 = vpack.c.b16 %v1499, %v1497
    %v1776 = vpack.c.b16 %v1502, %v1500
    %v1777 = vpack.c.b16 %v1503, %v1501
    %v1778 = vpack.c.b16 %v1506, %v1504
    %v1779 = vpack.c.b16 %v1507, %v1505
    %v1780 = vpack.c.b16 %v1510, %v1508
    %v1781 = vpack.c.b16 %v1511, %v1509
    %v1782 = vpack.c.b16 %v1514, %v1512
    %v1783 = vpack.c.b16 %v1515, %v1513
    %v1784 = vpack.c.b16 %v1518, %v1516
    %v1785 = vpack.c.b16 %v1519, %v1517
    %v1786 = vpack.c.b16 %v1522, %v1520
    %v1787 = vpack.c.b16 %v1523, %v1521
    %v1788 = vpack.c.b16 %v1526, %v1524
    %v1789 = vpack.c.b16 %v1527, %v1525
    %v1790 = vpack.c.b16 %v1530, %v1528
    %v1791 = vpack.c.b16 %v1531, %v1529
    %v1792 = vpack.c.b16 %v1534, %v1532
    %v1793 = vpack.c.b16 %v1535, %v1533
    %v1794 = vpack.c.b16 %v1538, %v1536
    %v1795 = vpack.c.b16 %v1539, %v1537
    %2052 = vmatpush.bf16.msra.mxu0 %v1554
    %2053 = vmatpush.bf16.msra.mxu0 %v1552
    %2054 = vmatpush.bf16.msra.mxu0 %v1550
    %2055 = vmatpush.bf16.msra.mxu0 %v1548
    %2056 = vmatpush.bf16.msra.mxu0 %v1546
    %2057 = vmatpush.bf16.msra.mxu0 %v1544
    %2058 = vmatpush.bf16.msra.mxu0 %v1542
    %2059 = vmatpush.bf16.msra.mxu0 %v1540
    %2060 = vmatmul.bf16.gmra.mxu0 %v494
    %v2061 = vpop.f32.mrf.mxu0
    %v2062 = vadd.f32 %v768, %v2061
    %v2063 = vpop.f32.mrf.mxu0
    %v2064 = vadd.f32 %v768, %v2063
    %2065 = vdwg.mxu0
    %2066 = vmatpush.bf16.msra.mxu0 %v1570
    %2067 = vmatpush.bf16.msra.mxu0 %v1568
    %2068 = vmatpush.bf16.msra.mxu0 %v1566
    %2069 = vmatpush.bf16.msra.mxu0 %v1564
    %2070 = vmatpush.bf16.msra.mxu0 %v1562
    %2071 = vmatpush.bf16.msra.mxu0 %v1560
    %2072 = vmatpush.bf16.msra.mxu0 %v1558
    %2073 = vmatpush.bf16.msra.mxu0 %v1556
    %2074 = vmatmul.bf16.gmra.mxu0 %v495
    %v2075 = vpop.f32.mrf.mxu0
    %v2076 = vadd.f32 %v2062, %v2075
    %v2077 = vpop.f32.mrf.mxu0
    %v2078 = vadd.f32 %v2064, %v2077
    %2079 = vdwg.mxu0
    %2080 = vmatpush.bf16.msra.mxu0 %v1586
    %2081 = vmatpush.bf16.msra.mxu0 %v1584
    %2082 = vmatpush.bf16.msra.mxu0 %v1582
    %2083 = vmatpush.bf16.msra.mxu0 %v1580
    %2084 = vmatpush.bf16.msra.mxu0 %v1578
    %2085 = vmatpush.bf16.msra.mxu0 %v1576
    %2086 = vmatpush.bf16.msra.mxu0 %v1574
    %2087 = vmatpush.bf16.msra.mxu0 %v1572
    %2088 = vmatmul.bf16.gmra.mxu0 %v496
    %v2089 = vpop.f32.mrf.mxu0
    %v2090 = vadd.f32 %v2076, %v2089
    %v2091 = vpop.f32.mrf.mxu0
    %v2092 = vadd.f32 %v2078, %v2091
    %2093 = vdwg.mxu0
    %2094 = vmatpush.bf16.msra.mxu0 %v1602
    %2095 = vmatpush.bf16.msra.mxu0 %v1600
    %2096 = vmatpush.bf16.msra.mxu0 %v1598
    %2097 = vmatpush.bf16.msra.mxu0 %v1596
    %2098 = vmatpush.bf16.msra.mxu0 %v1594
    %2099 = vmatpush.bf16.msra.mxu0 %v1592
    %2100 = vmatpush.bf16.msra.mxu0 %v1590
    %2101 = vmatpush.bf16.msra.mxu0 %v1588
    %2102 = vmatmul.bf16.gmra.mxu0 %v497
    %v2103 = vpop.f32.mrf.mxu0
    %v2104 = vadd.f32 %v2090, %v2103
    %v2105 = vpop.f32.mrf.mxu0
    %v2106 = vadd.f32 %v2092, %v2105
    %2107 = vdwg.mxu0
    %2108 = vmatpush.bf16.msra.mxu0 %v1618
    %2109 = vmatpush.bf16.msra.mxu0 %v1616
    %2110 = vmatpush.bf16.msra.mxu0 %v1614
    %2111 = vmatpush.bf16.msra.mxu0 %v1612
    %2112 = vmatpush.bf16.msra.mxu0 %v1610
    %2113 = vmatpush.bf16.msra.mxu0 %v1608
    %2114 = vmatpush.bf16.msra.mxu0 %v1606
    %2115 = vmatpush.bf16.msra.mxu0 %v1604
    %2116 = vmatmul.bf16.gmra.mxu0 %v498
    %v2117 = vpop.f32.mrf.mxu0
    %v2118 = vadd.f32 %v2104, %v2117
    %v2119 = vpop.f32.mrf.mxu0
    %v2120 = vadd.f32 %v2106, %v2119
    %2121 = vdwg.mxu0
    %2122 = vmatpush.bf16.msra.mxu0 %v1634
    %2123 = vmatpush.bf16.msra.mxu0 %v1632
    %2124 = vmatpush.bf16.msra.mxu0 %v1630
    %2125 = vmatpush.bf16.msra.mxu0 %v1628
    %2126 = vmatpush.bf16.msra.mxu0 %v1626
    %2127 = vmatpush.bf16.msra.mxu0 %v1624
    %2128 = vmatpush.bf16.msra.mxu0 %v1622
    %2129 = vmatpush.bf16.msra.mxu0 %v1620
    %2130 = vmatmul.bf16.gmra.mxu0 %v499
    %v2131 = vpop.f32.mrf.mxu0
    %v2132 = vadd.f32 %v2118, %v2131
    %v2133 = vpop.f32.mrf.mxu0
    %v2134 = vadd.f32 %v2120, %v2133
    %2135 = vdwg.mxu0
    %2136 = vmatpush.bf16.msra.mxu0 %v1650
    %2137 = vmatpush.bf16.msra.mxu0 %v1648
    %2138 = vmatpush.bf16.msra.mxu0 %v1646
    %2139 = vmatpush.bf16.msra.mxu0 %v1644
    %2140 = vmatpush.bf16.msra.mxu0 %v1642
    %2141 = vmatpush.bf16.msra.mxu0 %v1640
    %2142 = vmatpush.bf16.msra.mxu0 %v1638
    %2143 = vmatpush.bf16.msra.mxu0 %v1636
    %2144 = vmatmul.bf16.gmra.mxu0 %v500
    %v2145 = vpop.f32.mrf.mxu0
    %v2146 = vadd.f32 %v2132, %v2145
    %v2147 = vpop.f32.mrf.mxu0
    %v2148 = vadd.f32 %v2134, %v2147
    %2149 = vdwg.mxu0
    %2150 = vmatpush.bf16.msra.mxu0 %v1666
    %2151 = vmatpush.bf16.msra.mxu0 %v1664
    %2152 = vmatpush.bf16.msra.mxu0 %v1662
    %2153 = vmatpush.bf16.msra.mxu0 %v1660
    %2154 = vmatpush.bf16.msra.mxu0 %v1658
    %2155 = vmatpush.bf16.msra.mxu0 %v1656
    %2156 = vmatpush.bf16.msra.mxu0 %v1654
    %2157 = vmatpush.bf16.msra.mxu0 %v1652
    %2158 = vmatmul.bf16.gmra.mxu0 %v501
    %v2159 = vpop.f32.mrf.mxu0
    %v2160 = vadd.f32 %v2146, %v2159
    %v2161 = vpop.f32.mrf.mxu0
    %v2162 = vadd.f32 %v2148, %v2161
    %2163 = vdwg.mxu0
    %2164 = vmatpush.bf16.msra.mxu0 %v1682
    %2165 = vmatpush.bf16.msra.mxu0 %v1680
    %2166 = vmatpush.bf16.msra.mxu0 %v1678
    %2167 = vmatpush.bf16.msra.mxu0 %v1676
    %2168 = vmatpush.bf16.msra.mxu0 %v1674
    %2169 = vmatpush.bf16.msra.mxu0 %v1672
    %2170 = vmatpush.bf16.msra.mxu0 %v1670
    %2171 = vmatpush.bf16.msra.mxu0 %v1668
    %2172 = vmatmul.bf16.gmra.mxu0 %v502
    %v2173 = vpop.f32.mrf.mxu0
    %v2174 = vadd.f32 %v2160, %v2173
    %v2175 = vpop.f32.mrf.mxu0
    %v2176 = vadd.f32 %v2162, %v2175
    %2177 = vdwg.mxu0
    %2178 = vmatpush.bf16.msra.mxu0 %v1698
    %2179 = vmatpush.bf16.msra.mxu0 %v1696
    %2180 = vmatpush.bf16.msra.mxu0 %v1694
    %2181 = vmatpush.bf16.msra.mxu0 %v1692
    %2182 = vmatpush.bf16.msra.mxu0 %v1690
    %2183 = vmatpush.bf16.msra.mxu0 %v1688
    %2184 = vmatpush.bf16.msra.mxu0 %v1686
    %2185 = vmatpush.bf16.msra.mxu0 %v1684
    %2186 = vmatmul.bf16.gmra.mxu0 %v503
    %v2187 = vpop.f32.mrf.mxu0
    %v2188 = vadd.f32 %v2174, %v2187
    %v2189 = vpop.f32.mrf.mxu0
    %v2190 = vadd.f32 %v2176, %v2189
    %2191 = vdwg.mxu0
    %2192 = vmatpush.bf16.msra.mxu0 %v1714
    %2193 = vmatpush.bf16.msra.mxu0 %v1712
    %2194 = vmatpush.bf16.msra.mxu0 %v1710
    %2195 = vmatpush.bf16.msra.mxu0 %v1708
    %2196 = vmatpush.bf16.msra.mxu0 %v1706
    %2197 = vmatpush.bf16.msra.mxu0 %v1704
    %2198 = vmatpush.bf16.msra.mxu0 %v1702
    %2199 = vmatpush.bf16.msra.mxu0 %v1700
    %2200 = vmatmul.bf16.gmra.mxu0 %v504
    %v2201 = vpop.f32.mrf.mxu0
    %v2202 = vadd.f32 %v2188, %v2201
    %v2203 = vpop.f32.mrf.mxu0
    %v2204 = vadd.f32 %v2190, %v2203
    %2205 = vdwg.mxu0
    %2206 = vmatpush.bf16.msra.mxu0 %v1730
    %2207 = vmatpush.bf16.msra.mxu0 %v1728
    %2208 = vmatpush.bf16.msra.mxu0 %v1726
    %2209 = vmatpush.bf16.msra.mxu0 %v1724
    %2210 = vmatpush.bf16.msra.mxu0 %v1722
    %2211 = vmatpush.bf16.msra.mxu0 %v1720
    %2212 = vmatpush.bf16.msra.mxu0 %v1718
    %2213 = vmatpush.bf16.msra.mxu0 %v1716
    %2214 = vmatmul.bf16.gmra.mxu0 %v505
    %v2215 = vpop.f32.mrf.mxu0
    %v2216 = vadd.f32 %v2202, %v2215
    %v2217 = vpop.f32.mrf.mxu0
    %v2218 = vadd.f32 %v2204, %v2217
    %2219 = vdwg.mxu0
    %2220 = vmatpush.bf16.msra.mxu0 %v1746
    %2221 = vmatpush.bf16.msra.mxu0 %v1744
    %2222 = vmatpush.bf16.msra.mxu0 %v1742
    %2223 = vmatpush.bf16.msra.mxu0 %v1740
    %2224 = vmatpush.bf16.msra.mxu0 %v1738
    %2225 = vmatpush.bf16.msra.mxu0 %v1736
    %2226 = vmatpush.bf16.msra.mxu0 %v1734
    %2227 = vmatpush.bf16.msra.mxu0 %v1732
    %2228 = vmatmul.bf16.gmra.mxu0 %v506
    %v2229 = vpop.f32.mrf.mxu0
    %v2230 = vadd.f32 %v2216, %v2229
    %v2231 = vpop.f32.mrf.mxu0
    %v2232 = vadd.f32 %v2218, %v2231
    %2233 = vdwg.mxu0
    %2234 = vmatpush.bf16.msra.mxu0 %v1762
    %2235 = vmatpush.bf16.msra.mxu0 %v1760
    %2236 = vmatpush.bf16.msra.mxu0 %v1758
    %2237 = vmatpush.bf16.msra.mxu0 %v1756
    %2238 = vmatpush.bf16.msra.mxu0 %v1754
    %2239 = vmatpush.bf16.msra.mxu0 %v1752
    %2240 = vmatpush.bf16.msra.mxu0 %v1750
    %2241 = vmatpush.bf16.msra.mxu0 %v1748
    %2242 = vmatmul.bf16.gmra.mxu0 %v507
    %v2243 = vpop.f32.mrf.mxu0
    %v2244 = vadd.f32 %v2230, %v2243
    %v2245 = vpop.f32.mrf.mxu0
    %v2246 = vadd.f32 %v2232, %v2245
    %2247 = vdwg.mxu0
    %2248 = vmatpush.bf16.msra.mxu0 %v1778
    %2249 = vmatpush.bf16.msra.mxu0 %v1776
    %2250 = vmatpush.bf16.msra.mxu0 %v1774
    %2251 = vmatpush.bf16.msra.mxu0 %v1772
    %2252 = vmatpush.bf16.msra.mxu0 %v1770
    %2253 = vmatpush.bf16.msra.mxu0 %v1768
    %2254 = vmatpush.bf16.msra.mxu0 %v1766
    %2255 = vmatpush.bf16.msra.mxu0 %v1764
    %2256 = vmatmul.bf16.gmra.mxu0 %v508
    %v2257 = vpop.f32.mrf.mxu0
    %v2258 = vadd.f32 %v2244, %v2257
    %v2259 = vpop.f32.mrf.mxu0
    %v2260 = vadd.f32 %v2246, %v2259
    %2261 = vdwg.mxu0
    %2262 = vmatpush.bf16.msra.mxu0 %v1794
    %2263 = vmatpush.bf16.msra.mxu0 %v1792
    %2264 = vmatpush.bf16.msra.mxu0 %v1790
    %2265 = vmatpush.bf16.msra.mxu0 %v1788
    %2266 = vmatpush.bf16.msra.mxu0 %v1786
    %2267 = vmatpush.bf16.msra.mxu0 %v1784
    %2268 = vmatpush.bf16.msra.mxu0 %v1782
    %2269 = vmatpush.bf16.msra.mxu0 %v1780
    %2270 = vmatmul.bf16.gmra.mxu0 %v509
    %v2271 = vpop.f32.mrf.mxu0
    %v2272 = vadd.f32 %v2258, %v2271
    %v2273 = vpop.f32.mrf.mxu0
    %v2274 = vadd.f32 %v2260, %v2273
    %2275 = vdwg.mxu0
    %2276 = vmatpush.bf16.msra.mxu0 %v1555
    %2277 = vmatpush.bf16.msra.mxu0 %v1553
    %2278 = vmatpush.bf16.msra.mxu0 %v1551
    %2279 = vmatpush.bf16.msra.mxu0 %v1549
    %2280 = vmatpush.bf16.msra.mxu0 %v1547
    %2281 = vmatpush.bf16.msra.mxu0 %v1545
    %2282 = vmatpush.bf16.msra.mxu0 %v1543
    %2283 = vmatpush.bf16.msra.mxu0 %v1541
    %2284 = vmatmul.bf16.gmra.mxu0 %v494
    %v2285 = vpop.f32.mrf.mxu0
    %v2286 = vadd.f32 %v769, %v2285
    %v2287 = vpop.f32.mrf.mxu0
    %v2288 = vadd.f32 %v769, %v2287
    %2289 = vdwg.mxu0
    %2290 = vmatpush.bf16.msra.mxu0 %v1571
    %2291 = vmatpush.bf16.msra.mxu0 %v1569
    %2292 = vmatpush.bf16.msra.mxu0 %v1567
    %2293 = vmatpush.bf16.msra.mxu0 %v1565
    %2294 = vmatpush.bf16.msra.mxu0 %v1563
    %2295 = vmatpush.bf16.msra.mxu0 %v1561
    %2296 = vmatpush.bf16.msra.mxu0 %v1559
    %2297 = vmatpush.bf16.msra.mxu0 %v1557
    %2298 = vmatmul.bf16.gmra.mxu0 %v495
    %v2299 = vpop.f32.mrf.mxu0
    %v2300 = vadd.f32 %v2286, %v2299
    %v2301 = vpop.f32.mrf.mxu0
    %v2302 = vadd.f32 %v2288, %v2301
    %2303 = vdwg.mxu0
    %2304 = vmatpush.bf16.msra.mxu0 %v1587
    %2305 = vmatpush.bf16.msra.mxu0 %v1585
    %2306 = vmatpush.bf16.msra.mxu0 %v1583
    %2307 = vmatpush.bf16.msra.mxu0 %v1581
    %2308 = vmatpush.bf16.msra.mxu0 %v1579
    %2309 = vmatpush.bf16.msra.mxu0 %v1577
    %2310 = vmatpush.bf16.msra.mxu0 %v1575
    %2311 = vmatpush.bf16.msra.mxu0 %v1573
    %2312 = vmatmul.bf16.gmra.mxu0 %v496
    %v2313 = vpop.f32.mrf.mxu0
    %v2314 = vadd.f32 %v2300, %v2313
    %v2315 = vpop.f32.mrf.mxu0
    %v2316 = vadd.f32 %v2302, %v2315
    %2317 = vdwg.mxu0
    %2318 = vmatpush.bf16.msra.mxu0 %v1603
    %2319 = vmatpush.bf16.msra.mxu0 %v1601
    %2320 = vmatpush.bf16.msra.mxu0 %v1599
    %2321 = vmatpush.bf16.msra.mxu0 %v1597
    %2322 = vmatpush.bf16.msra.mxu0 %v1595
    %2323 = vmatpush.bf16.msra.mxu0 %v1593
    %2324 = vmatpush.bf16.msra.mxu0 %v1591
    %2325 = vmatpush.bf16.msra.mxu0 %v1589
    %2326 = vmatmul.bf16.gmra.mxu0 %v497
    %v2327 = vpop.f32.mrf.mxu0
    %v2328 = vadd.f32 %v2314, %v2327
    %v2329 = vpop.f32.mrf.mxu0
    %v2330 = vadd.f32 %v2316, %v2329
    %2331 = vdwg.mxu0
    %2332 = vmatpush.bf16.msra.mxu0 %v1619
    %2333 = vmatpush.bf16.msra.mxu0 %v1617
    %2334 = vmatpush.bf16.msra.mxu0 %v1615
    %2335 = vmatpush.bf16.msra.mxu0 %v1613
    %2336 = vmatpush.bf16.msra.mxu0 %v1611
    %2337 = vmatpush.bf16.msra.mxu0 %v1609
    %2338 = vmatpush.bf16.msra.mxu0 %v1607
    %2339 = vmatpush.bf16.msra.mxu0 %v1605
    %2340 = vmatmul.bf16.gmra.mxu0 %v498
    %v2341 = vpop.f32.mrf.mxu0
    %v2342 = vadd.f32 %v2328, %v2341
    %v2343 = vpop.f32.mrf.mxu0
    %v2344 = vadd.f32 %v2330, %v2343
    %2345 = vdwg.mxu0
    %2346 = vmatpush.bf16.msra.mxu0 %v1635
    %2347 = vmatpush.bf16.msra.mxu0 %v1633
    %2348 = vmatpush.bf16.msra.mxu0 %v1631
    %2349 = vmatpush.bf16.msra.mxu0 %v1629
    %2350 = vmatpush.bf16.msra.mxu0 %v1627
    %2351 = vmatpush.bf16.msra.mxu0 %v1625
    %2352 = vmatpush.bf16.msra.mxu0 %v1623
    %2353 = vmatpush.bf16.msra.mxu0 %v1621
    %2354 = vmatmul.bf16.gmra.mxu0 %v499
    %v2355 = vpop.f32.mrf.mxu0
    %v2356 = vadd.f32 %v2342, %v2355
    %v2357 = vpop.f32.mrf.mxu0
    %v2358 = vadd.f32 %v2344, %v2357
    %2359 = vdwg.mxu0
    %2360 = vmatpush.bf16.msra.mxu0 %v1651
    %2361 = vmatpush.bf16.msra.mxu0 %v1649
    %2362 = vmatpush.bf16.msra.mxu0 %v1647
    %2363 = vmatpush.bf16.msra.mxu0 %v1645
    %2364 = vmatpush.bf16.msra.mxu0 %v1643
    %2365 = vmatpush.bf16.msra.mxu0 %v1641
    %2366 = vmatpush.bf16.msra.mxu0 %v1639
    %2367 = vmatpush.bf16.msra.mxu0 %v1637
    %2368 = vmatmul.bf16.gmra.mxu0 %v500
    %v2369 = vpop.f32.mrf.mxu0
    %v2370 = vadd.f32 %v2356, %v2369
    %v2371 = vpop.f32.mrf.mxu0
    %v2372 = vadd.f32 %v2358, %v2371
    %2373 = vdwg.mxu0
    %2374 = vmatpush.bf16.msra.mxu0 %v1667
    %2375 = vmatpush.bf16.msra.mxu0 %v1665
    %2376 = vmatpush.bf16.msra.mxu0 %v1663
    %2377 = vmatpush.bf16.msra.mxu0 %v1661
    %2378 = vmatpush.bf16.msra.mxu0 %v1659
    %2379 = vmatpush.bf16.msra.mxu0 %v1657
    %2380 = vmatpush.bf16.msra.mxu0 %v1655
    %2381 = vmatpush.bf16.msra.mxu0 %v1653
    %2382 = vmatmul.bf16.gmra.mxu0 %v501
    %v2383 = vpop.f32.mrf.mxu0
    %v2384 = vadd.f32 %v2370, %v2383
    %v2385 = vpop.f32.mrf.mxu0
    %v2386 = vadd.f32 %v2372, %v2385
    %2387 = vdwg.mxu0
    %2388 = vmatpush.bf16.msra.mxu0 %v1683
    %2389 = vmatpush.bf16.msra.mxu0 %v1681
    %2390 = vmatpush.bf16.msra.mxu0 %v1679
    %2391 = vmatpush.bf16.msra.mxu0 %v1677
    %2392 = vmatpush.bf16.msra.mxu0 %v1675
    %2393 = vmatpush.bf16.msra.mxu0 %v1673
    %2394 = vmatpush.bf16.msra.mxu0 %v1671
    %2395 = vmatpush.bf16.msra.mxu0 %v1669
    %2396 = vmatmul.bf16.gmra.mxu0 %v502
    %v2397 = vpop.f32.mrf.mxu0
    %v2398 = vadd.f32 %v2384, %v2397
    %v2399 = vpop.f32.mrf.mxu0
    %v2400 = vadd.f32 %v2386, %v2399
    %2401 = vdwg.mxu0
    %2402 = vmatpush.bf16.msra.mxu0 %v1699
    %2403 = vmatpush.bf16.msra.mxu0 %v1697
    %2404 = vmatpush.bf16.msra.mxu0 %v1695
    %2405 = vmatpush.bf16.msra.mxu0 %v1693
    %2406 = vmatpush.bf16.msra.mxu0 %v1691
    %2407 = vmatpush.bf16.msra.mxu0 %v1689
    %2408 = vmatpush.bf16.msra.mxu0 %v1687
    %2409 = vmatpush.bf16.msra.mxu0 %v1685
    %2410 = vmatmul.bf16.gmra.mxu0 %v503
    %v2411 = vpop.f32.mrf.mxu0
    %v2412 = vadd.f32 %v2398, %v2411
    %v2413 = vpop.f32.mrf.mxu0
    %v2414 = vadd.f32 %v2400, %v2413
    %2415 = vdwg.mxu0
    %2416 = vmatpush.bf16.msra.mxu0 %v1715
    %2417 = vmatpush.bf16.msra.mxu0 %v1713
    %2418 = vmatpush.bf16.msra.mxu0 %v1711
    %2419 = vmatpush.bf16.msra.mxu0 %v1709
    %2420 = vmatpush.bf16.msra.mxu0 %v1707
    %2421 = vmatpush.bf16.msra.mxu0 %v1705
    %2422 = vmatpush.bf16.msra.mxu0 %v1703
    %2423 = vmatpush.bf16.msra.mxu0 %v1701
    %2424 = vmatmul.bf16.gmra.mxu0 %v504
    %v2425 = vpop.f32.mrf.mxu0
    %v2426 = vadd.f32 %v2412, %v2425
    %v2427 = vpop.f32.mrf.mxu0
    %v2428 = vadd.f32 %v2414, %v2427
    %2429 = vdwg.mxu0
    %2430 = vmatpush.bf16.msra.mxu0 %v1731
    %2431 = vmatpush.bf16.msra.mxu0 %v1729
    %2432 = vmatpush.bf16.msra.mxu0 %v1727
    %2433 = vmatpush.bf16.msra.mxu0 %v1725
    %2434 = vmatpush.bf16.msra.mxu0 %v1723
    %2435 = vmatpush.bf16.msra.mxu0 %v1721
    %2436 = vmatpush.bf16.msra.mxu0 %v1719
    %2437 = vmatpush.bf16.msra.mxu0 %v1717
    %2438 = vmatmul.bf16.gmra.mxu0 %v505
    %v2439 = vpop.f32.mrf.mxu0
    %v2440 = vadd.f32 %v2426, %v2439
    %v2441 = vpop.f32.mrf.mxu0
    %v2442 = vadd.f32 %v2428, %v2441
    %2443 = vdwg.mxu0
    %2444 = vmatpush.bf16.msra.mxu0 %v1747
    %2445 = vmatpush.bf16.msra.mxu0 %v1745
    %2446 = vmatpush.bf16.msra.mxu0 %v1743
    %2447 = vmatpush.bf16.msra.mxu0 %v1741
    %2448 = vmatpush.bf16.msra.mxu0 %v1739
    %2449 = vmatpush.bf16.msra.mxu0 %v1737
    %2450 = vmatpush.bf16.msra.mxu0 %v1735
    %2451 = vmatpush.bf16.msra.mxu0 %v1733
    %2452 = vmatmul.bf16.gmra.mxu0 %v506
    %v2453 = vpop.f32.mrf.mxu0
    %v2454 = vadd.f32 %v2440, %v2453
    %v2455 = vpop.f32.mrf.mxu0
    %v2456 = vadd.f32 %v2442, %v2455
    %2457 = vdwg.mxu0
    %2458 = vmatpush.bf16.msra.mxu0 %v1763
    %2459 = vmatpush.bf16.msra.mxu0 %v1761
    %2460 = vmatpush.bf16.msra.mxu0 %v1759
    %2461 = vmatpush.bf16.msra.mxu0 %v1757
    %2462 = vmatpush.bf16.msra.mxu0 %v1755
    %2463 = vmatpush.bf16.msra.mxu0 %v1753
    %2464 = vmatpush.bf16.msra.mxu0 %v1751
    %2465 = vmatpush.bf16.msra.mxu0 %v1749
    %2466 = vmatmul.bf16.gmra.mxu0 %v507
    %v2467 = vpop.f32.mrf.mxu0
    %v2468 = vadd.f32 %v2454, %v2467
    %v2469 = vpop.f32.mrf.mxu0
    %v2470 = vadd.f32 %v2456, %v2469
    %2471 = vdwg.mxu0
    %2472 = vmatpush.bf16.msra.mxu0 %v1779
    %2473 = vmatpush.bf16.msra.mxu0 %v1777
    %2474 = vmatpush.bf16.msra.mxu0 %v1775
    %2475 = vmatpush.bf16.msra.mxu0 %v1773
    %2476 = vmatpush.bf16.msra.mxu0 %v1771
    %2477 = vmatpush.bf16.msra.mxu0 %v1769
    %2478 = vmatpush.bf16.msra.mxu0 %v1767
    %2479 = vmatpush.bf16.msra.mxu0 %v1765
    %2480 = vmatmul.bf16.gmra.mxu0 %v508
    %v2481 = vpop.f32.mrf.mxu0
    %v2482 = vadd.f32 %v2468, %v2481
    %v2483 = vpop.f32.mrf.mxu0
    %v2484 = vadd.f32 %v2470, %v2483
    %2485 = vdwg.mxu0
    %2486 = vmatpush.bf16.msra.mxu0 %v1795
    %2487 = vmatpush.bf16.msra.mxu0 %v1793
    %2488 = vmatpush.bf16.msra.mxu0 %v1791
    %2489 = vmatpush.bf16.msra.mxu0 %v1789
    %2490 = vmatpush.bf16.msra.mxu0 %v1787
    %2491 = vmatpush.bf16.msra.mxu0 %v1785
    %2492 = vmatpush.bf16.msra.mxu0 %v1783
    %2493 = vmatpush.bf16.msra.mxu0 %v1781
    %2494 = vmatmul.bf16.gmra.mxu0 %v509
    %v2495 = vpop.f32.mrf.mxu0
    %v2496 = vadd.f32 %v2482, %v2495
    %v2497 = vpop.f32.mrf.mxu0
    %v2498 = vadd.f32 %v2484, %v2497
    %2499 = vdwg.mxu0
    %v2500 = vpack.c.bf16 %v2274, %v2272
    %v2501 = vpack.c.bf16 %v2498, %v2496
    %v2502 = vld [vmem:[%s6] sm:$0xf]
    %v2503 = vld [vmem:[%s6 + $0x4] sm:$0xf]
    %v2504 = vld [vmem:[%s6 + $0x8] sm:$0xf]
    %v2505 = vld [vmem:[%s6 + $0xc] sm:$0xf]
    %v2506 = vld [vmem:[%s6 + $0x10] sm:$0xf]
    %v2507 = vld [vmem:[%s6 + $0x14] sm:$0xf]
    %v2508 = vld [vmem:[%s6 + $0x18] sm:$0xf]
    %v2509 = vld [vmem:[%s6 + $0x1c] sm:$0xf]
    %v2510 = vld [vmem:[%s6 + $0x20] sm:$0xf]
    %v2511 = vld [vmem:[%s6 + $0x24] sm:$0xf]
    %v2512 = vld [vmem:[%s6 + $0x28] sm:$0xf]
    %v2513 = vld [vmem:[%s6 + $0x2c] sm:$0xf]
    %v2514 = vld [vmem:[%s6 + $0x30] sm:$0xf]
    %v2515 = vld [vmem:[%s6 + $0x34] sm:$0xf]
    %v2516 = vld [vmem:[%s6 + $0x38] sm:$0xf]
    %v2517 = vld [vmem:[%s6 + $0x3c] sm:$0xf]
    %v2518 = vld [vmem:[%s6 + $0x40] sm:$0xf]
    %v2519 = vld [vmem:[%s6 + $0x44] sm:$0xf]
    %v2520 = vld [vmem:[%s6 + $0x48] sm:$0xf]
    %v2521 = vld [vmem:[%s6 + $0x4c] sm:$0xf]
    %v2522 = vld [vmem:[%s6 + $0x50] sm:$0xf]
    %v2523 = vld [vmem:[%s6 + $0x54] sm:$0xf]
    %v2524 = vld [vmem:[%s6 + $0x58] sm:$0xf]
    %v2525 = vld [vmem:[%s6 + $0x5c] sm:$0xf]
    %v2526 = vld [vmem:[%s6 + $0x60] sm:$0xf]
    %v2527 = vld [vmem:[%s6 + $0x64] sm:$0xf]
    %v2528 = vld [vmem:[%s6 + $0x68] sm:$0xf]
    %v2529 = vld [vmem:[%s6 + $0x6c] sm:$0xf]
    %v2530 = vld [vmem:[%s6 + $0x70] sm:$0xf]
    %v2531 = vld [vmem:[%s6 + $0x74] sm:$0xf]
    %v2532 = vld [vmem:[%s6 + $0x78] sm:$0xf]
    %v2533 = vld [vmem:[%s6 + $0x7c] sm:$0xf]
    %v2534 = vld [vmem:[%s7] sm:$0x1]
    %v2536 = vperm.slane %v2534, 0
    %v2570 = vunpack.c.l.b16 %v2502
    %v2571 = vunpack.c.l.b16 %v2503
    %v2572 = vunpack.c.l.b16 %v2504
    %v2573 = vunpack.c.l.b16 %v2505
    %v2574 = vunpack.c.l.b16 %v2506
    %v2575 = vunpack.c.l.b16 %v2507
    %v2576 = vunpack.c.l.b16 %v2508
    %v2577 = vunpack.c.l.b16 %v2509
    %v2578 = vunpack.c.l.b16 %v2510
    %v2579 = vunpack.c.l.b16 %v2511
    %v2580 = vunpack.c.l.b16 %v2512
    %v2581 = vunpack.c.l.b16 %v2513
    %v2582 = vunpack.c.l.b16 %v2514
    %v2583 = vunpack.c.l.b16 %v2515
    %v2584 = vunpack.c.l.b16 %v2516
    %v2585 = vunpack.c.l.b16 %v2517
    %v2586 = vunpack.c.l.b16 %v2518
    %v2587 = vunpack.c.l.b16 %v2519
    %v2588 = vunpack.c.l.b16 %v2520
    %v2589 = vunpack.c.l.b16 %v2521
    %v2590 = vunpack.c.l.b16 %v2522
    %v2591 = vunpack.c.l.b16 %v2523
    %v2592 = vunpack.c.l.b16 %v2524
    %v2593 = vunpack.c.l.b16 %v2525
    %v2594 = vunpack.c.l.b16 %v2526
    %v2595 = vunpack.c.l.b16 %v2527
    %v2596 = vunpack.c.l.b16 %v2528
    %v2597 = vunpack.c.l.b16 %v2529
    %v2598 = vunpack.c.l.b16 %v2530
    %v2599 = vunpack.c.l.b16 %v2531
    %v2600 = vunpack.c.l.b16 %v2532
    %v2601 = vunpack.c.l.b16 %v2533
    %v2602 = vpack.c.b16 %v2571, %v2570
    %v2603 = vpack.c.b16 %v2573, %v2572
    %v2604 = vpack.c.b16 %v2575, %v2574
    %v2605 = vpack.c.b16 %v2577, %v2576
    %v2606 = vpack.c.b16 %v2579, %v2578
    %v2607 = vpack.c.b16 %v2581, %v2580
    %v2608 = vpack.c.b16 %v2583, %v2582
    %v2609 = vpack.c.b16 %v2585, %v2584
    %v2610 = vpack.c.b16 %v2587, %v2586
    %v2611 = vpack.c.b16 %v2589, %v2588
    %v2612 = vpack.c.b16 %v2591, %v2590
    %v2613 = vpack.c.b16 %v2593, %v2592
    %v2614 = vpack.c.b16 %v2595, %v2594
    %v2615 = vpack.c.b16 %v2597, %v2596
    %v2616 = vpack.c.b16 %v2599, %v2598
    %v2617 = vpack.c.b16 %v2601, %v2600
    %2634 = vmatpush.bf16.msra.mxu0 %v2609
    %2635 = vmatpush.bf16.msra.mxu0 %v2608
    %2636 = vmatpush.bf16.msra.mxu0 %v2607
    %2637 = vmatpush.bf16.msra.mxu0 %v2606
    %2638 = vmatpush.bf16.msra.mxu0 %v2605
    %2639 = vmatpush.bf16.msra.mxu0 %v2604
    %2640 = vmatpush.bf16.msra.mxu0 %v2603
    %2641 = vmatpush.bf16.msra.mxu0 %v2602
    %2642 = vmatmul.bf16.gmra.mxu0 %v2500
    %v2643 = vpop.f32.mrf.mxu0
    %v2644 = vadd.f32 %v2536, %v2643
    %v2645 = vpop.f32.mrf.mxu0
    %v2646 = vadd.f32 %v2536, %v2645
    %2647 = vdwg.mxu0
    %2648 = vmatpush.bf16.msra.mxu0 %v2617
    %2649 = vmatpush.bf16.msra.mxu0 %v2616
    %2650 = vmatpush.bf16.msra.mxu0 %v2615
    %2651 = vmatpush.bf16.msra.mxu0 %v2614
    %2652 = vmatpush.bf16.msra.mxu0 %v2613
    %2653 = vmatpush.bf16.msra.mxu0 %v2612
    %2654 = vmatpush.bf16.msra.mxu0 %v2611
    %2655 = vmatpush.bf16.msra.mxu0 %v2610
    %2656 = vmatmul.bf16.gmra.mxu0 %v2501
    %v2657 = vpop.f32.mrf.mxu0
    %v2658 = vadd.f32 %v2644, %v2657
    %v2659 = vpop.f32.mrf.mxu0
    %v2660 = vadd.f32 %v2646, %v2659
    %2661 = vdwg.mxu0
    %2662 = vst [vmem:[%s9] sm:$0xff] %v2658
    %2663 = vst [vmem:[%s9 + $0x8] sm:$0xff] %v2660
    %v2664 = vld [vmem:[%s1] sm:$0xff]
    %v2665 = vld [vmem:[%s1 + $0x18] sm:$0xff]
    %v2666 = vunpack.c.l.bf16 %v2664
    %v2667 = vunpack.c.h.bf16 %v2664
    %v2668 = vunpack.c.l.bf16 %v2665
    %v2669 = vunpack.c.h.bf16 %v2665
    %v2670 = vadd.f32 %v2666, %v2667
    %2671 = vadd.xlane.f32.xlu0 %v2670
    %v2672 = vpop.xlane.xlu0 %2671
    %v2673 = vadd.f32 %v2668, %v2669
    %2674 = vadd.xlane.f32.xlu0 %v2673
    %v2675 = vpop.xlane.xlu0 %2674
    %v2676 = vld [vmem:[%s2] ss:$4 sm:$0xff]
    %v2677 = vld [vmem:[%s66] ss:$4 sm:$0xff]
    %v2680 = vperm.slane %v2676, 0
    %v2681 = vperm.slane %v2676, 1
    %v2682 = vperm.slane %v2676, 2
    %v2683 = vperm.slane %v2676, 3
    %v2684 = vperm.slane %v2676, 4
    %v2685 = vperm.slane %v2676, 5
    %v2686 = vperm.slane %v2676, 6
    %v2687 = vperm.slane %v2676, 7
    %v2688 = vperm.slane %v2677, 0
    %v2689 = vperm.slane %v2677, 1
    %v2690 = vperm.slane %v2677, 2
    %v2691 = vperm.slane %v2677, 3
    %v2692 = vperm.slane %v2677, 4
    %v2693 = vperm.slane %v2677, 5
    %v2694 = vperm.slane %v2677, 6
    %v2695 = vperm.slane %v2677, 7
    %v2712 = vmul.f32 %v2672, %v2680
    %v2713 = vmul.f32 %v2672, %v2681
    %v2714 = vmul.f32 %v2672, %v2682
    %v2715 = vmul.f32 %v2672, %v2683
    %v2716 = vmul.f32 %v2672, %v2684
    %v2717 = vmul.f32 %v2672, %v2685
    %v2718 = vmul.f32 %v2672, %v2686
    %v2719 = vmul.f32 %v2672, %v2687
    %v2720 = vmul.f32 %v2672, %v2688
    %v2721 = vmul.f32 %v2672, %v2689
    %v2722 = vmul.f32 %v2672, %v2690
    %v2723 = vmul.f32 %v2672, %v2691
    %v2724 = vmul.f32 %v2672, %v2692
    %v2725 = vmul.f32 %v2672, %v2693
    %v2726 = vmul.f32 %v2672, %v2694
    %v2727 = vmul.f32 %v2672, %v2695
    %v2728 = vmul.f32 %v2675, %v2680
    %v2729 = vmul.f32 %v2675, %v2681
    %v2730 = vmul.f32 %v2675, %v2682
    %v2731 = vmul.f32 %v2675, %v2683
    %v2732 = vmul.f32 %v2675, %v2684
    %v2733 = vmul.f32 %v2675, %v2685
    %v2734 = vmul.f32 %v2675, %v2686
    %v2735 = vmul.f32 %v2675, %v2687
    %v2736 = vmul.f32 %v2675, %v2688
    %v2737 = vmul.f32 %v2675, %v2689
    %v2738 = vmul.f32 %v2675, %v2690
    %v2739 = vmul.f32 %v2675, %v2691
    %v2740 = vmul.f32 %v2675, %v2692
    %v2741 = vmul.f32 %v2675, %v2693
    %v2742 = vmul.f32 %v2675, %v2694
    %v2743 = vmul.f32 %v2675, %v2695
    %v2744 = vadd.f32 %v2712, 0.0
    %v2745 = vadd.f32 %v2713, 0.0
    %v2746 = vadd.f32 %v2714, 0.0
    %v2747 = vadd.f32 %v2715, 0.0
    %v2748 = vadd.f32 %v2716, 0.0
    %v2749 = vadd.f32 %v2717, 0.0
    %v2750 = vadd.f32 %v2718, 0.0
    %v2751 = vadd.f32 %v2719, 0.0
    %v2752 = vadd.f32 %v2720, 0.0
    %v2753 = vadd.f32 %v2721, 0.0
    %v2754 = vadd.f32 %v2722, 0.0
    %v2755 = vadd.f32 %v2723, 0.0
    %v2756 = vadd.f32 %v2724, 0.0
    %v2757 = vadd.f32 %v2725, 0.0
    %v2758 = vadd.f32 %v2726, 0.0
    %v2759 = vadd.f32 %v2727, 0.0
    %v2760 = vadd.f32 %v2728, 0.0
    %v2761 = vadd.f32 %v2729, 0.0
    %v2762 = vadd.f32 %v2730, 0.0
    %v2763 = vadd.f32 %v2731, 0.0
    %v2764 = vadd.f32 %v2732, 0.0
    %v2765 = vadd.f32 %v2733, 0.0
    %v2766 = vadd.f32 %v2734, 0.0
    %v2767 = vadd.f32 %v2735, 0.0
    %v2768 = vadd.f32 %v2736, 0.0
    %v2769 = vadd.f32 %v2737, 0.0
    %v2770 = vadd.f32 %v2738, 0.0
    %v2771 = vadd.f32 %v2739, 0.0
    %v2772 = vadd.f32 %v2740, 0.0
    %v2773 = vadd.f32 %v2741, 0.0
    %v2774 = vadd.f32 %v2742, 0.0
    %v2775 = vadd.f32 %v2743, 0.0
    %v2776 = vld [vmem:[%s1 + $0x8] sm:$0xff]
    %v2777 = vld [vmem:[%s1 + $0x20] sm:$0xff]
    %v2778 = vunpack.c.l.bf16 %v2776
    %v2779 = vunpack.c.h.bf16 %v2776
    %v2780 = vunpack.c.l.bf16 %v2777
    %v2781 = vunpack.c.h.bf16 %v2777
    %v2782 = vadd.f32 %v2778, %v2779
    %2783 = vadd.xlane.f32.xlu0 %v2782
    %v2784 = vpop.xlane.xlu0 %2783
    %v2785 = vadd.f32 %v2780, %v2781
    %2786 = vadd.xlane.f32.xlu0 %v2785
    %v2787 = vpop.xlane.xlu0 %2786
    %v2788 = vld [vmem:[%s178] ss:$4 sm:$0xff]
    %v2789 = vld [vmem:[%s180] ss:$4 sm:$0xff]
    %v2792 = vperm.slane %v2788, 0
    %v2793 = vperm.slane %v2788, 1
    %v2794 = vperm.slane %v2788, 2
    %v2795 = vperm.slane %v2788, 3
    %v2796 = vperm.slane %v2788, 4
    %v2797 = vperm.slane %v2788, 5
    %v2798 = vperm.slane %v2788, 6
    %v2799 = vperm.slane %v2788, 7
    %v2800 = vperm.slane %v2789, 0
    %v2801 = vperm.slane %v2789, 1
    %v2802 = vperm.slane %v2789, 2
    %v2803 = vperm.slane %v2789, 3
    %v2804 = vperm.slane %v2789, 4
    %v2805 = vperm.slane %v2789, 5
    %v2806 = vperm.slane %v2789, 6
    %v2807 = vperm.slane %v2789, 7
    %v2824 = vmul.f32 %v2784, %v2792
    %v2825 = vmul.f32 %v2784, %v2793
    %v2826 = vmul.f32 %v2784, %v2794
    %v2827 = vmul.f32 %v2784, %v2795
    %v2828 = vmul.f32 %v2784, %v2796
    %v2829 = vmul.f32 %v2784, %v2797
    %v2830 = vmul.f32 %v2784, %v2798
    %v2831 = vmul.f32 %v2784, %v2799
    %v2832 = vmul.f32 %v2784, %v2800
    %v2833 = vmul.f32 %v2784, %v2801
    %v2834 = vmul.f32 %v2784, %v2802
    %v2835 = vmul.f32 %v2784, %v2803
    %v2836 = vmul.f32 %v2784, %v2804
    %v2837 = vmul.f32 %v2784, %v2805
    %v2838 = vmul.f32 %v2784, %v2806
    %v2839 = vmul.f32 %v2784, %v2807
    %v2840 = vmul.f32 %v2787, %v2792
    %v2841 = vmul.f32 %v2787, %v2793
    %v2842 = vmul.f32 %v2787, %v2794
    %v2843 = vmul.f32 %v2787, %v2795
    %v2844 = vmul.f32 %v2787, %v2796
    %v2845 = vmul.f32 %v2787, %v2797
    %v2846 = vmul.f32 %v2787, %v2798
    %v2847 = vmul.f32 %v2787, %v2799
    %v2848 = vmul.f32 %v2787, %v2800
    %v2849 = vmul.f32 %v2787, %v2801
    %v2850 = vmul.f32 %v2787, %v2802
    %v2851 = vmul.f32 %v2787, %v2803
    %v2852 = vmul.f32 %v2787, %v2804
    %v2853 = vmul.f32 %v2787, %v2805
    %v2854 = vmul.f32 %v2787, %v2806
    %v2855 = vmul.f32 %v2787, %v2807
    %v2856 = vadd.f32 %v2744, %v2824
    %v2857 = vadd.f32 %v2745, %v2825
    %v2858 = vadd.f32 %v2746, %v2826
    %v2859 = vadd.f32 %v2747, %v2827
    %v2860 = vadd.f32 %v2748, %v2828
    %v2861 = vadd.f32 %v2749, %v2829
    %v2862 = vadd.f32 %v2750, %v2830
    %v2863 = vadd.f32 %v2751, %v2831
    %v2864 = vadd.f32 %v2752, %v2832
    %v2865 = vadd.f32 %v2753, %v2833
    %v2866 = vadd.f32 %v2754, %v2834
    %v2867 = vadd.f32 %v2755, %v2835
    %v2868 = vadd.f32 %v2756, %v2836
    %v2869 = vadd.f32 %v2757, %v2837
    %v2870 = vadd.f32 %v2758, %v2838
    %v2871 = vadd.f32 %v2759, %v2839
    %v2872 = vadd.f32 %v2760, %v2840
    %v2873 = vadd.f32 %v2761, %v2841
    %v2874 = vadd.f32 %v2762, %v2842
    %v2875 = vadd.f32 %v2763, %v2843
    %v2876 = vadd.f32 %v2764, %v2844
    %v2877 = vadd.f32 %v2765, %v2845
    %v2878 = vadd.f32 %v2766, %v2846
    %v2879 = vadd.f32 %v2767, %v2847
    %v2880 = vadd.f32 %v2768, %v2848
    %v2881 = vadd.f32 %v2769, %v2849
    %v2882 = vadd.f32 %v2770, %v2850
    %v2883 = vadd.f32 %v2771, %v2851
    %v2884 = vadd.f32 %v2772, %v2852
    %v2885 = vadd.f32 %v2773, %v2853
    %v2886 = vadd.f32 %v2774, %v2854
    %v2887 = vadd.f32 %v2775, %v2855
    %v2888 = vld [vmem:[%s1 + $0x10] sm:$0xff]
    %v2889 = vld [vmem:[%s1 + $0x28] sm:$0xff]
    %v2890 = vunpack.c.l.bf16 %v2888
    %v2891 = vunpack.c.h.bf16 %v2888
    %v2892 = vunpack.c.l.bf16 %v2889
    %v2893 = vunpack.c.h.bf16 %v2889
    %v2894 = vadd.f32 %v2890, %v2891
    %2895 = vadd.xlane.f32.xlu0 %v2894
    %v2896 = vpop.xlane.xlu0 %2895
    %v2897 = vadd.f32 %v2892, %v2893
    %2898 = vadd.xlane.f32.xlu0 %v2897
    %v2899 = vpop.xlane.xlu0 %2898
    %v2900 = vld [vmem:[%s292] ss:$4 sm:$0xff]
    %v2901 = vld [vmem:[%s294] ss:$4 sm:$0xff]
    %v2904 = vperm.slane %v2900, 0
    %v2905 = vperm.slane %v2900, 1
    %v2906 = vperm.slane %v2900, 2
    %v2907 = vperm.slane %v2900, 3
    %v2908 = vperm.slane %v2900, 4
    %v2909 = vperm.slane %v2900, 5
    %v2910 = vperm.slane %v2900, 6
    %v2911 = vperm.slane %v2900, 7
    %v2912 = vperm.slane %v2901, 0
    %v2913 = vperm.slane %v2901, 1
    %v2914 = vperm.slane %v2901, 2
    %v2915 = vperm.slane %v2901, 3
    %v2916 = vperm.slane %v2901, 4
    %v2917 = vperm.slane %v2901, 5
    %v2918 = vperm.slane %v2901, 6
    %v2919 = vperm.slane %v2901, 7
    %v2936 = vmul.f32 %v2896, %v2904
    %v2937 = vmul.f32 %v2896, %v2905
    %v2938 = vmul.f32 %v2896, %v2906
    %v2939 = vmul.f32 %v2896, %v2907
    %v2940 = vmul.f32 %v2896, %v2908
    %v2941 = vmul.f32 %v2896, %v2909
    %v2942 = vmul.f32 %v2896, %v2910
    %v2943 = vmul.f32 %v2896, %v2911
    %v2944 = vmul.f32 %v2896, %v2912
    %v2945 = vmul.f32 %v2896, %v2913
    %v2946 = vmul.f32 %v2896, %v2914
    %v2947 = vmul.f32 %v2896, %v2915
    %v2948 = vmul.f32 %v2896, %v2916
    %v2949 = vmul.f32 %v2896, %v2917
    %v2950 = vmul.f32 %v2896, %v2918
    %v2951 = vmul.f32 %v2896, %v2919
    %v2952 = vmul.f32 %v2899, %v2904
    %v2953 = vmul.f32 %v2899, %v2905
    %v2954 = vmul.f32 %v2899, %v2906
    %v2955 = vmul.f32 %v2899, %v2907
    %v2956 = vmul.f32 %v2899, %v2908
    %v2957 = vmul.f32 %v2899, %v2909
    %v2958 = vmul.f32 %v2899, %v2910
    %v2959 = vmul.f32 %v2899, %v2911
    %v2960 = vmul.f32 %v2899, %v2912
    %v2961 = vmul.f32 %v2899, %v2913
    %v2962 = vmul.f32 %v2899, %v2914
    %v2963 = vmul.f32 %v2899, %v2915
    %v2964 = vmul.f32 %v2899, %v2916
    %v2965 = vmul.f32 %v2899, %v2917
    %v2966 = vmul.f32 %v2899, %v2918
    %v2967 = vmul.f32 %v2899, %v2919
    %v2968 = vadd.f32 %v2856, %v2936
    %v2969 = vadd.f32 %v2857, %v2937
    %v2970 = vadd.f32 %v2858, %v2938
    %v2971 = vadd.f32 %v2859, %v2939
    %v2972 = vadd.f32 %v2860, %v2940
    %v2973 = vadd.f32 %v2861, %v2941
    %v2974 = vadd.f32 %v2862, %v2942
    %v2975 = vadd.f32 %v2863, %v2943
    %v2976 = vadd.f32 %v2864, %v2944
    %v2977 = vadd.f32 %v2865, %v2945
    %v2978 = vadd.f32 %v2866, %v2946
    %v2979 = vadd.f32 %v2867, %v2947
    %v2980 = vadd.f32 %v2868, %v2948
    %v2981 = vadd.f32 %v2869, %v2949
    %v2982 = vadd.f32 %v2870, %v2950
    %v2983 = vadd.f32 %v2871, %v2951
    %v2984 = vadd.f32 %v2872, %v2952
    %v2985 = vadd.f32 %v2873, %v2953
    %v2986 = vadd.f32 %v2874, %v2954
    %v2987 = vadd.f32 %v2875, %v2955
    %v2988 = vadd.f32 %v2876, %v2956
    %v2989 = vadd.f32 %v2877, %v2957
    %v2990 = vadd.f32 %v2878, %v2958
    %v2991 = vadd.f32 %v2879, %v2959
    %v2992 = vadd.f32 %v2880, %v2960
    %v2993 = vadd.f32 %v2881, %v2961
    %v2994 = vadd.f32 %v2882, %v2962
    %v2995 = vadd.f32 %v2883, %v2963
    %v2996 = vadd.f32 %v2884, %v2964
    %v2997 = vadd.f32 %v2885, %v2965
    %v2998 = vadd.f32 %v2886, %v2966
    %v2999 = vadd.f32 %v2887, %v2967
    %v3000 = vld [vmem:[%s3] sm:$0xff]
    %v3001 = vld [vmem:[%s3 + $0x8] sm:$0xff]
    %v3004 = vperm.slane %v3000, 0
    %v3005 = vperm.slane %v3000, 1
    %v3006 = vperm.slane %v3000, 2
    %v3007 = vperm.slane %v3000, 3
    %v3008 = vperm.slane %v3000, 4
    %v3009 = vperm.slane %v3000, 5
    %v3010 = vperm.slane %v3000, 6
    %v3011 = vperm.slane %v3000, 7
    %v3012 = vperm.slane %v3001, 0
    %v3013 = vperm.slane %v3001, 1
    %v3014 = vperm.slane %v3001, 2
    %v3015 = vperm.slane %v3001, 3
    %v3016 = vperm.slane %v3001, 4
    %v3017 = vperm.slane %v3001, 5
    %v3018 = vperm.slane %v3001, 6
    %v3019 = vperm.slane %v3001, 7
    %v3036 = vadd.f32 %v2968, %v3004
    %v3037 = vadd.f32 %v2969, %v3005
    %v3038 = vadd.f32 %v2970, %v3006
    %v3039 = vadd.f32 %v2971, %v3007
    %v3040 = vadd.f32 %v2972, %v3008
    %v3041 = vadd.f32 %v2973, %v3009
    %v3042 = vadd.f32 %v2974, %v3010
    %v3043 = vadd.f32 %v2975, %v3011
    %v3044 = vadd.f32 %v2976, %v3012
    %v3045 = vadd.f32 %v2977, %v3013
    %v3046 = vadd.f32 %v2978, %v3014
    %v3047 = vadd.f32 %v2979, %v3015
    %v3048 = vadd.f32 %v2980, %v3016
    %v3049 = vadd.f32 %v2981, %v3017
    %v3050 = vadd.f32 %v2982, %v3018
    %v3051 = vadd.f32 %v2983, %v3019
    %v3052 = vadd.f32 %v2984, %v3004
    %v3053 = vadd.f32 %v2985, %v3005
    %v3054 = vadd.f32 %v2986, %v3006
    %v3055 = vadd.f32 %v2987, %v3007
    %v3056 = vadd.f32 %v2988, %v3008
    %v3057 = vadd.f32 %v2989, %v3009
    %v3058 = vadd.f32 %v2990, %v3010
    %v3059 = vadd.f32 %v2991, %v3011
    %v3060 = vadd.f32 %v2992, %v3012
    %v3061 = vadd.f32 %v2993, %v3013
    %v3062 = vadd.f32 %v2994, %v3014
    %v3063 = vadd.f32 %v2995, %v3015
    %v3064 = vadd.f32 %v2996, %v3016
    %v3065 = vadd.f32 %v2997, %v3017
    %v3066 = vadd.f32 %v2998, %v3018
    %v3067 = vadd.f32 %v2999, %v3019
    %v3068 = vmax.f32 %v3036, 0.0
    %v3069 = vmax.f32 %v3037, 0.0
    %v3070 = vmax.f32 %v3038, 0.0
    %v3071 = vmax.f32 %v3039, 0.0
    %v3072 = vmax.f32 %v3040, 0.0
    %v3073 = vmax.f32 %v3041, 0.0
    %v3074 = vmax.f32 %v3042, 0.0
    %v3075 = vmax.f32 %v3043, 0.0
    %v3076 = vmax.f32 %v3044, 0.0
    %v3077 = vmax.f32 %v3045, 0.0
    %v3078 = vmax.f32 %v3046, 0.0
    %v3079 = vmax.f32 %v3047, 0.0
    %v3080 = vmax.f32 %v3048, 0.0
    %v3081 = vmax.f32 %v3049, 0.0
    %v3082 = vmax.f32 %v3050, 0.0
    %v3083 = vmax.f32 %v3051, 0.0
    %v3084 = vmax.f32 %v3052, 0.0
    %v3085 = vmax.f32 %v3053, 0.0
    %v3086 = vmax.f32 %v3054, 0.0
    %v3087 = vmax.f32 %v3055, 0.0
    %v3088 = vmax.f32 %v3056, 0.0
    %v3089 = vmax.f32 %v3057, 0.0
    %v3090 = vmax.f32 %v3058, 0.0
    %v3091 = vmax.f32 %v3059, 0.0
    %v3092 = vmax.f32 %v3060, 0.0
    %v3093 = vmax.f32 %v3061, 0.0
    %v3094 = vmax.f32 %v3062, 0.0
    %v3095 = vmax.f32 %v3063, 0.0
    %v3096 = vmax.f32 %v3064, 0.0
    %v3097 = vmax.f32 %v3065, 0.0
    %v3098 = vmax.f32 %v3066, 0.0
    %v3099 = vmax.f32 %v3067, 0.0
    %v3100 = vpack.c.bf16 %v3084, %v3068
    %v3101 = vpack.c.bf16 %v3085, %v3069
    %v3102 = vpack.c.bf16 %v3086, %v3070
    %v3103 = vpack.c.bf16 %v3087, %v3071
    %v3104 = vpack.c.bf16 %v3088, %v3072
    %v3105 = vpack.c.bf16 %v3089, %v3073
    %v3106 = vpack.c.bf16 %v3090, %v3074
    %v3107 = vpack.c.bf16 %v3091, %v3075
    %v3108 = vpack.c.bf16 %v3092, %v3076
    %v3109 = vpack.c.bf16 %v3093, %v3077
    %v3110 = vpack.c.bf16 %v3094, %v3078
    %v3111 = vpack.c.bf16 %v3095, %v3079
    %v3112 = vpack.c.bf16 %v3096, %v3080
    %v3113 = vpack.c.bf16 %v3097, %v3081
    %v3114 = vpack.c.bf16 %v3098, %v3082
    %v3115 = vpack.c.bf16 %v3099, %v3083
    %v3116 = vld [vmem:[#allocation6] sm:$0xff]
    %v3117 = vld [vmem:[#allocation6 + $0x8] sm:$0xff]
    %v3118 = vld [vmem:[#allocation6 + $0x10] sm:$0xff]
    %v3119 = vld [vmem:[#allocation6 + $0x18] sm:$0xff]
    %v3120 = vld [vmem:[#allocation6 + $0x20] sm:$0xff]
    %v3121 = vld [vmem:[#allocation6 + $0x28] sm:$0xff]
    %v3122 = vld [vmem:[#allocation6 + $0x30] sm:$0xff]
    %v3123 = vld [vmem:[#allocation6 + $0x38] sm:$0xff]
    %v3124 = vld [vmem:[#allocation6 + $0x40] sm:$0xff]
    %v3125 = vld [vmem:[#allocation6 + $0x48] sm:$0xff]
    %v3126 = vld [vmem:[#allocation6 + $0x50] sm:$0xff]
    %v3127 = vld [vmem:[#allocation6 + $0x58] sm:$0xff]
    %v3128 = vld [vmem:[#allocation6 + $0x60] sm:$0xff]
    %v3129 = vld [vmem:[#allocation6 + $0x68] sm:$0xff]
    %v3130 = vld [vmem:[#allocation6 + $0x70] sm:$0xff]
    %v3131 = vld [vmem:[#allocation6 + $0x78] sm:$0xff]
    %v3132 = vld [vmem:[#allocation6 + $0x80] sm:$0xff]
    %v3133 = vld [vmem:[#allocation6 + $0x88] sm:$0xff]
    %v3134 = vld [vmem:[#allocation6 + $0x90] sm:$0xff]
    %v3135 = vld [vmem:[#allocation6 + $0x98] sm:$0xff]
    %v3136 = vld [vmem:[#allocation6 + $0xa0] sm:$0xff]
    %v3137 = vld [vmem:[#allocation6 + $0xa8] sm:$0xff]
    %v3138 = vld [vmem:[#allocation6 + $0xb0] sm:$0xff]
    %v3139 = vld [vmem:[#allocation6 + $0xb8] sm:$0xff]
    %v3140 = vld [vmem:[#allocation6 + $0xc0] sm:$0xff]
    %v3141 = vld [vmem:[#allocation6 + $0xc8] sm:$0xff]
    %v3142 = vld [vmem:[#allocation6 + $0xd0] sm:$0xff]
    %v3143 = vld [vmem:[#allocation6 + $0xd8] sm:$0xff]
    %v3144 = vld [vmem:[#allocation6 + $0xe0] sm:$0xff]
    %v3145 = vld [vmem:[#allocation6 + $0xe8] sm:$0xff]
    %v3146 = vld [vmem:[#allocation6 + $0xf0] sm:$0xff]
    %v3147 = vld [vmem:[#allocation6 + $0xf8] sm:$0xff]
    %v3148 = vld [vmem:[#allocation6 + $0x100] sm:$0xff]
    %v3149 = vld [vmem:[#allocation6 + $0x108] sm:$0xff]
    %v3150 = vld [vmem:[#allocation6 + $0x110] sm:$0xff]
    %v3151 = vld [vmem:[#allocation6 + $0x118] sm:$0xff]
    %v3152 = vld [vmem:[#allocation6 + $0x120] sm:$0xff]
    %v3153 = vld [vmem:[#allocation6 + $0x128] sm:$0xff]
    %v3154 = vld [vmem:[#allocation6 + $0x130] sm:$0xff]
    %v3155 = vld [vmem:[#allocation6 + $0x138] sm:$0xff]
    %v3156 = vld [vmem:[#allocation6 + $0x140] sm:$0xff]
    %v3157 = vld [vmem:[#allocation6 + $0x148] sm:$0xff]
    %v3158 = vld [vmem:[#allocation6 + $0x150] sm:$0xff]
    %v3159 = vld [vmem:[#allocation6 + $0x158] sm:$0xff]
    %v3160 = vld [vmem:[#allocation6 + $0x160] sm:$0xff]
    %v3161 = vld [vmem:[#allocation6 + $0x168] sm:$0xff]
    %v3162 = vld [vmem:[#allocation6 + $0x170] sm:$0xff]
    %v3163 = vld [vmem:[#allocation6 + $0x178] sm:$0xff]
    %v3164 = vld [vmem:[#allocation6 + $0x180] sm:$0xff]
    %v3165 = vld [vmem:[#allocation6 + $0x188] sm:$0xff]
    %v3166 = vld [vmem:[#allocation6 + $0x190] sm:$0xff]
    %v3167 = vld [vmem:[#allocation6 + $0x198] sm:$0xff]
    %v3168 = vld [vmem:[#allocation6 + $0x1a0] sm:$0xff]
    %v3169 = vld [vmem:[#allocation6 + $0x1a8] sm:$0xff]
    %v3170 = vld [vmem:[#allocation6 + $0x1b0] sm:$0xff]
    %v3171 = vld [vmem:[#allocation6 + $0x1b8] sm:$0xff]
    %v3172 = vld [vmem:[#allocation6 + $0x1c0] sm:$0xff]
    %v3173 = vld [vmem:[#allocation6 + $0x1c8] sm:$0xff]
    %v3174 = vld [vmem:[#allocation6 + $0x1d0] sm:$0xff]
    %v3175 = vld [vmem:[#allocation6 + $0x1d8] sm:$0xff]
    %v3176 = vld [vmem:[#allocation6 + $0x1e0] sm:$0xff]
    %v3177 = vld [vmem:[#allocation6 + $0x1e8] sm:$0xff]
    %v3178 = vld [vmem:[#allocation6 + $0x1f0] sm:$0xff]
    %v3179 = vld [vmem:[#allocation6 + $0x1f8] sm:$0xff]
    %v3180 = vld [vmem:[#allocation6 + $0x200] sm:$0xff]
    %v3181 = vld [vmem:[#allocation6 + $0x208] sm:$0xff]
    %v3182 = vld [vmem:[#allocation6 + $0x210] sm:$0xff]
    %v3183 = vld [vmem:[#allocation6 + $0x218] sm:$0xff]
    %v3184 = vld [vmem:[#allocation6 + $0x220] sm:$0xff]
    %v3185 = vld [vmem:[#allocation6 + $0x228] sm:$0xff]
    %v3186 = vld [vmem:[#allocation6 + $0x230] sm:$0xff]
    %v3187 = vld [vmem:[#allocation6 + $0x238] sm:$0xff]
    %v3188 = vld [vmem:[#allocation6 + $0x240] sm:$0xff]
    %v3189 = vld [vmem:[#allocation6 + $0x248] sm:$0xff]
    %v3190 = vld [vmem:[#allocation6 + $0x250] sm:$0xff]
    %v3191 = vld [vmem:[#allocation6 + $0x258] sm:$0xff]
    %v3192 = vld [vmem:[#allocation6 + $0x260] sm:$0xff]
    %v3193 = vld [vmem:[#allocation6 + $0x268] sm:$0xff]
    %v3194 = vld [vmem:[#allocation6 + $0x270] sm:$0xff]
    %v3195 = vld [vmem:[#allocation6 + $0x278] sm:$0xff]
    %v3196 = vld [vmem:[#allocation6 + $0x280] sm:$0xff]
    %v3197 = vld [vmem:[#allocation6 + $0x288] sm:$0xff]
    %v3198 = vld [vmem:[#allocation6 + $0x290] sm:$0xff]
    %v3199 = vld [vmem:[#allocation6 + $0x298] sm:$0xff]
    %v3200 = vld [vmem:[#allocation6 + $0x2a0] sm:$0xff]
    %v3201 = vld [vmem:[#allocation6 + $0x2a8] sm:$0xff]
    %v3202 = vld [vmem:[#allocation6 + $0x2b0] sm:$0xff]
    %v3203 = vld [vmem:[#allocation6 + $0x2b8] sm:$0xff]
    %v3204 = vld [vmem:[#allocation6 + $0x2c0] sm:$0xff]
    %v3205 = vld [vmem:[#allocation6 + $0x2c8] sm:$0xff]
    %v3206 = vld [vmem:[#allocation6 + $0x2d0] sm:$0xff]
    %v3207 = vld [vmem:[#allocation6 + $0x2d8] sm:$0xff]
    %v3208 = vld [vmem:[#allocation6 + $0x2e0] sm:$0xff]
    %v3209 = vld [vmem:[#allocation6 + $0x2e8] sm:$0xff]
    %v3210 = vld [vmem:[#allocation6 + $0x2f0] sm:$0xff]
    %v3211 = vld [vmem:[#allocation6 + $0x2f8] sm:$0xff]
    %v3212 = vld [vmem:[#allocation6 + $0x300] sm:$0xff]
    %v3213 = vld [vmem:[#allocation6 + $0x308] sm:$0xff]
    %v3214 = vld [vmem:[#allocation6 + $0x310] sm:$0xff]
    %v3215 = vld [vmem:[#allocation6 + $0x318] sm:$0xff]
    %v3216 = vld [vmem:[#allocation6 + $0x320] sm:$0xff]
    %v3217 = vld [vmem:[#allocation6 + $0x328] sm:$0xff]
    %v3218 = vld [vmem:[#allocation6 + $0x330] sm:$0xff]
    %v3219 = vld [vmem:[#allocation6 + $0x338] sm:$0xff]
    %v3220 = vld [vmem:[#allocation6 + $0x340] sm:$0xff]
    %v3221 = vld [vmem:[#allocation6 + $0x348] sm:$0xff]
    %v3222 = vld [vmem:[#allocation6 + $0x350] sm:$0xff]
    %v3223 = vld [vmem:[#allocation6 + $0x358] sm:$0xff]
    %v3224 = vld [vmem:[#allocation6 + $0x360] sm:$0xff]
    %v3225 = vld [vmem:[#allocation6 + $0x368] sm:$0xff]
    %v3226 = vld [vmem:[#allocation6 + $0x370] sm:$0xff]
    %v3227 = vld [vmem:[#allocation6 + $0x378] sm:$0xff]
    %v3228 = vld [vmem:[#allocation6 + $0x380] sm:$0xff]
    %v3229 = vld [vmem:[#allocation6 + $0x388] sm:$0xff]
    %v3230 = vld [vmem:[#allocation6 + $0x390] sm:$0xff]
    %v3231 = vld [vmem:[#allocation6 + $0x398] sm:$0xff]
    %v3232 = vld [vmem:[#allocation6 + $0x3a0] sm:$0xff]
    %v3233 = vld [vmem:[#allocation6 + $0x3a8] sm:$0xff]
    %v3234 = vld [vmem:[#allocation6 + $0x3b0] sm:$0xff]
    %v3235 = vld [vmem:[#allocation6 + $0x3b8] sm:$0xff]
    %v3236 = vld [vmem:[#allocation6 + $0x3c0] sm:$0xff]
    %v3237 = vld [vmem:[#allocation6 + $0x3c8] sm:$0xff]
    %v3238 = vld [vmem:[#allocation6 + $0x3d0] sm:$0xff]
    %v3239 = vld [vmem:[#allocation6 + $0x3d8] sm:$0xff]
    %v3240 = vld [vmem:[#allocation6 + $0x3e0] sm:$0xff]
    %v3241 = vld [vmem:[#allocation6 + $0x3e8] sm:$0xff]
    %v3242 = vld [vmem:[#allocation6 + $0x3f0] sm:$0xff]
    %v3243 = vld [vmem:[#allocation6 + $0x3f8] sm:$0xff]
    %v3244 = vld [vmem:[#allocation6 + $0x400] sm:$0xff]
    %v3245 = vld [vmem:[#allocation6 + $0x408] sm:$0xff]
    %v3246 = vld [vmem:[#allocation6 + $0x410] sm:$0xff]
    %v3247 = vld [vmem:[#allocation6 + $0x418] sm:$0xff]
    %v3248 = vld [vmem:[#allocation6 + $0x420] sm:$0xff]
    %v3249 = vld [vmem:[#allocation6 + $0x428] sm:$0xff]
    %v3250 = vld [vmem:[#allocation6 + $0x430] sm:$0xff]
    %v3251 = vld [vmem:[#allocation6 + $0x438] sm:$0xff]
    %v3252 = vld [vmem:[#allocation6 + $0x440] sm:$0xff]
    %v3253 = vld [vmem:[#allocation6 + $0x448] sm:$0xff]
    %v3254 = vld [vmem:[#allocation6 + $0x450] sm:$0xff]
    %v3255 = vld [vmem:[#allocation6 + $0x458] sm:$0xff]
    %v3256 = vld [vmem:[#allocation6 + $0x460] sm:$0xff]
    %v3257 = vld [vmem:[#allocation6 + $0x468] sm:$0xff]
    %v3258 = vld [vmem:[#allocation6 + $0x470] sm:$0xff]
    %v3259 = vld [vmem:[#allocation6 + $0x478] sm:$0xff]
    %v3260 = vld [vmem:[#allocation6 + $0x480] sm:$0xff]
    %v3261 = vld [vmem:[#allocation6 + $0x488] sm:$0xff]
    %v3262 = vld [vmem:[#allocation6 + $0x490] sm:$0xff]
    %v3263 = vld [vmem:[#allocation6 + $0x498] sm:$0xff]
    %v3264 = vld [vmem:[#allocation6 + $0x4a0] sm:$0xff]
    %v3265 = vld [vmem:[#allocation6 + $0x4a8] sm:$0xff]
    %v3266 = vld [vmem:[#allocation6 + $0x4b0] sm:$0xff]
    %v3267 = vld [vmem:[#allocation6 + $0x4b8] sm:$0xff]
    %v3268 = vld [vmem:[#allocation6 + $0x4c0] sm:$0xff]
    %v3269 = vld [vmem:[#allocation6 + $0x4c8] sm:$0xff]
    %v3270 = vld [vmem:[#allocation6 + $0x4d0] sm:$0xff]
    %v3271 = vld [vmem:[#allocation6 + $0x4d8] sm:$0xff]
    %v3272 = vld [vmem:[#allocation6 + $0x4e0] sm:$0xff]
    %v3273 = vld [vmem:[#allocation6 + $0x4e8] sm:$0xff]
    %v3274 = vld [vmem:[#allocation6 + $0x4f0] sm:$0xff]
    %v3275 = vld [vmem:[#allocation6 + $0x4f8] sm:$0xff]
    %v3276 = vld [vmem:[#allocation6 + $0x500] sm:$0xff]
    %v3277 = vld [vmem:[#allocation6 + $0x508] sm:$0xff]
    %v3278 = vld [vmem:[#allocation6 + $0x510] sm:$0xff]
    %v3279 = vld [vmem:[#allocation6 + $0x518] sm:$0xff]
    %v3280 = vld [vmem:[#allocation6 + $0x520] sm:$0xff]
    %v3281 = vld [vmem:[#allocation6 + $0x528] sm:$0xff]
    %v3282 = vld [vmem:[#allocation6 + $0x530] sm:$0xff]
    %v3283 = vld [vmem:[#allocation6 + $0x538] sm:$0xff]
    %v3284 = vld [vmem:[#allocation6 + $0x540] sm:$0xff]
    %v3285 = vld [vmem:[#allocation6 + $0x548] sm:$0xff]
    %v3286 = vld [vmem:[#allocation6 + $0x550] sm:$0xff]
    %v3287 = vld [vmem:[#allocation6 + $0x558] sm:$0xff]
    %v3288 = vld [vmem:[#allocation6 + $0x560] sm:$0xff]
    %v3289 = vld [vmem:[#allocation6 + $0x568] sm:$0xff]
    %v3290 = vld [vmem:[#allocation6 + $0x570] sm:$0xff]
    %v3291 = vld [vmem:[#allocation6 + $0x578] sm:$0xff]
    %v3292 = vld [vmem:[#allocation6 + $0x580] sm:$0xff]
    %v3293 = vld [vmem:[#allocation6 + $0x588] sm:$0xff]
    %v3294 = vld [vmem:[#allocation6 + $0x590] sm:$0xff]
    %v3295 = vld [vmem:[#allocation6 + $0x598] sm:$0xff]
    %v3296 = vld [vmem:[#allocation6 + $0x5a0] sm:$0xff]
    %v3297 = vld [vmem:[#allocation6 + $0x5a8] sm:$0xff]
    %v3298 = vld [vmem:[#allocation6 + $0x5b0] sm:$0xff]
    %v3299 = vld [vmem:[#allocation6 + $0x5b8] sm:$0xff]
    %v3300 = vld [vmem:[#allocation6 + $0x5c0] sm:$0xff]
    %v3301 = vld [vmem:[#allocation6 + $0x5c8] sm:$0xff]
    %v3302 = vld [vmem:[#allocation6 + $0x5d0] sm:$0xff]
    %v3303 = vld [vmem:[#allocation6 + $0x5d8] sm:$0xff]
    %v3304 = vld [vmem:[#allocation6 + $0x5e0] sm:$0xff]
    %v3305 = vld [vmem:[#allocation6 + $0x5e8] sm:$0xff]
    %v3306 = vld [vmem:[#allocation6 + $0x5f0] sm:$0xff]
    %v3307 = vld [vmem:[#allocation6 + $0x5f8] sm:$0xff]
    %v3308 = vld [vmem:[#allocation6 + $0x600] sm:$0xff]
    %v3309 = vld [vmem:[#allocation6 + $0x608] sm:$0xff]
    %v3310 = vld [vmem:[#allocation6 + $0x610] sm:$0xff]
    %v3311 = vld [vmem:[#allocation6 + $0x618] sm:$0xff]
    %v3312 = vld [vmem:[#allocation6 + $0x620] sm:$0xff]
    %v3313 = vld [vmem:[#allocation6 + $0x628] sm:$0xff]
    %v3314 = vld [vmem:[#allocation6 + $0x630] sm:$0xff]
    %v3315 = vld [vmem:[#allocation6 + $0x638] sm:$0xff]
    %v3316 = vld [vmem:[#allocation6 + $0x640] sm:$0xff]
    %v3317 = vld [vmem:[#allocation6 + $0x648] sm:$0xff]
    %v3318 = vld [vmem:[#allocation6 + $0x650] sm:$0xff]
    %v3319 = vld [vmem:[#allocation6 + $0x658] sm:$0xff]
    %v3320 = vld [vmem:[#allocation6 + $0x660] sm:$0xff]
    %v3321 = vld [vmem:[#allocation6 + $0x668] sm:$0xff]
    %v3322 = vld [vmem:[#allocation6 + $0x670] sm:$0xff]
    %v3323 = vld [vmem:[#allocation6 + $0x678] sm:$0xff]
    %v3324 = vld [vmem:[#allocation6 + $0x680] sm:$0xff]
    %v3325 = vld [vmem:[#allocation6 + $0x688] sm:$0xff]
    %v3326 = vld [vmem:[#allocation6 + $0x690] sm:$0xff]
    %v3327 = vld [vmem:[#allocation6 + $0x698] sm:$0xff]
    %v3328 = vld [vmem:[#allocation6 + $0x6a0] sm:$0xff]
    %v3329 = vld [vmem:[#allocation6 + $0x6a8] sm:$0xff]
    %v3330 = vld [vmem:[#allocation6 + $0x6b0] sm:$0xff]
    %v3331 = vld [vmem:[#allocation6 + $0x6b8] sm:$0xff]
    %v3332 = vld [vmem:[#allocation6 + $0x6c0] sm:$0xff]
    %v3333 = vld [vmem:[#allocation6 + $0x6c8] sm:$0xff]
    %v3334 = vld [vmem:[#allocation6 + $0x6d0] sm:$0xff]
    %v3335 = vld [vmem:[#allocation6 + $0x6d8] sm:$0xff]
    %v3336 = vld [vmem:[#allocation6 + $0x6e0] sm:$0xff]
    %v3337 = vld [vmem:[#allocation6 + $0x6e8] sm:$0xff]
    %v3338 = vld [vmem:[#allocation6 + $0x6f0] sm:$0xff]
    %v3339 = vld [vmem:[#allocation6 + $0x6f8] sm:$0xff]
    %v3340 = vld [vmem:[#allocation6 + $0x700] sm:$0xff]
    %v3341 = vld [vmem:[#allocation6 + $0x708] sm:$0xff]
    %v3342 = vld [vmem:[#allocation6 + $0x710] sm:$0xff]
    %v3343 = vld [vmem:[#allocation6 + $0x718] sm:$0xff]
    %v3344 = vld [vmem:[#allocation6 + $0x720] sm:$0xff]
    %v3345 = vld [vmem:[#allocation6 + $0x728] sm:$0xff]
    %v3346 = vld [vmem:[#allocation6 + $0x730] sm:$0xff]
    %v3347 = vld [vmem:[#allocation6 + $0x738] sm:$0xff]
    %v3348 = vld [vmem:[#allocation6 + $0x740] sm:$0xff]
    %v3349 = vld [vmem:[#allocation6 + $0x748] sm:$0xff]
    %v3350 = vld [vmem:[#allocation6 + $0x750] sm:$0xff]
    %v3351 = vld [vmem:[#allocation6 + $0x758] sm:$0xff]
    %v3352 = vld [vmem:[#allocation6 + $0x760] sm:$0xff]
    %v3353 = vld [vmem:[#allocation6 + $0x768] sm:$0xff]
    %v3354 = vld [vmem:[#allocation6 + $0x770] sm:$0xff]
    %v3355 = vld [vmem:[#allocation6 + $0x778] sm:$0xff]
    %v3356 = vld [vmem:[#allocation6 + $0x780] sm:$0xff]
    %v3357 = vld [vmem:[#allocation6 + $0x788] sm:$0xff]
    %v3358 = vld [vmem:[#allocation6 + $0x790] sm:$0xff]
    %v3359 = vld [vmem:[#allocation6 + $0x798] sm:$0xff]
    %v3360 = vld [vmem:[#allocation6 + $0x7a0] sm:$0xff]
    %v3361 = vld [vmem:[#allocation6 + $0x7a8] sm:$0xff]
    %v3362 = vld [vmem:[#allocation6 + $0x7b0] sm:$0xff]
    %v3363 = vld [vmem:[#allocation6 + $0x7b8] sm:$0xff]
    %v3364 = vld [vmem:[#allocation6 + $0x7c0] sm:$0xff]
    %v3365 = vld [vmem:[#allocation6 + $0x7c8] sm:$0xff]
    %v3366 = vld [vmem:[#allocation6 + $0x7d0] sm:$0xff]
    %v3367 = vld [vmem:[#allocation6 + $0x7d8] sm:$0xff]
    %v3368 = vld [vmem:[#allocation6 + $0x7e0] sm:$0xff]
    %v3369 = vld [vmem:[#allocation6 + $0x7e8] sm:$0xff]
    %v3370 = vld [vmem:[#allocation6 + $0x7f0] sm:$0xff]
    %v3371 = vld [vmem:[#allocation6 + $0x7f8] sm:$0xff]
    %v3372 = vld [vmem:[%s5] sm:$0x3]
    %v3374 = vperm.slane %v3372, 0
    %v3375 = vperm.slane %v3372, 1
    %v3634 = vunpack.c.l.b16 %v3116
    %v3635 = vunpack.c.h.b16 %v3116
    %v3636 = vunpack.c.l.b16 %v3117
    %v3637 = vunpack.c.h.b16 %v3117
    %v3638 = vunpack.c.l.b16 %v3118
    %v3639 = vunpack.c.h.b16 %v3118
    %v3640 = vunpack.c.l.b16 %v3119
    %v3641 = vunpack.c.h.b16 %v3119
    %v3642 = vunpack.c.l.b16 %v3120
    %v3643 = vunpack.c.h.b16 %v3120
    %v3644 = vunpack.c.l.b16 %v3121
    %v3645 = vunpack.c.h.b16 %v3121
    %v3646 = vunpack.c.l.b16 %v3122
    %v3647 = vunpack.c.h.b16 %v3122
    %v3648 = vunpack.c.l.b16 %v3123
    %v3649 = vunpack.c.h.b16 %v3123
    %v3650 = vunpack.c.l.b16 %v3124
    %v3651 = vunpack.c.h.b16 %v3124
    %v3652 = vunpack.c.l.b16 %v3125
    %v3653 = vunpack.c.h.b16 %v3125
    %v3654 = vunpack.c.l.b16 %v3126
    %v3655 = vunpack.c.h.b16 %v3126
    %v3656 = vunpack.c.l.b16 %v3127
    %v3657 = vunpack.c.h.b16 %v3127
    %v3658 = vunpack.c.l.b16 %v3128
    %v3659 = vunpack.c.h.b16 %v3128
    %v3660 = vunpack.c.l.b16 %v3129
    %v3661 = vunpack.c.h.b16 %v3129
    %v3662 = vunpack.c.l.b16 %v3130
    %v3663 = vunpack.c.h.b16 %v3130
    %v3664 = vunpack.c.l.b16 %v3131
    %v3665 = vunpack.c.h.b16 %v3131
    %v3666 = vunpack.c.l.b16 %v3132
    %v3667 = vunpack.c.h.b16 %v3132
    %v3668 = vunpack.c.l.b16 %v3133
    %v3669 = vunpack.c.h.b16 %v3133
    %v3670 = vunpack.c.l.b16 %v3134
    %v3671 = vunpack.c.h.b16 %v3134
    %v3672 = vunpack.c.l.b16 %v3135
    %v3673 = vunpack.c.h.b16 %v3135
    %v3674 = vunpack.c.l.b16 %v3136
    %v3675 = vunpack.c.h.b16 %v3136
    %v3676 = vunpack.c.l.b16 %v3137
    %v3677 = vunpack.c.h.b16 %v3137
    %v3678 = vunpack.c.l.b16 %v3138
    %v3679 = vunpack.c.h.b16 %v3138
    %v3680 = vunpack.c.l.b16 %v3139
    %v3681 = vunpack.c.h.b16 %v3139
    %v3682 = vunpack.c.l.b16 %v3140
    %v3683 = vunpack.c.h.b16 %v3140
    %v3684 = vunpack.c.l.b16 %v3141
    %v3685 = vunpack.c.h.b16 %v3141
    %v3686 = vunpack.c.l.b16 %v3142
    %v3687 = vunpack.c.h.b16 %v3142
    %v3688 = vunpack.c.l.b16 %v3143
    %v3689 = vunpack.c.h.b16 %v3143
    %v3690 = vunpack.c.l.b16 %v3144
    %v3691 = vunpack.c.h.b16 %v3144
    %v3692 = vunpack.c.l.b16 %v3145
    %v3693 = vunpack.c.h.b16 %v3145
    %v3694 = vunpack.c.l.b16 %v3146
    %v3695 = vunpack.c.h.b16 %v3146
    %v3696 = vunpack.c.l.b16 %v3147
    %v3697 = vunpack.c.h.b16 %v3147
    %v3698 = vunpack.c.l.b16 %v3148
    %v3699 = vunpack.c.h.b16 %v3148
    %v3700 = vunpack.c.l.b16 %v3149
    %v3701 = vunpack.c.h.b16 %v3149
    %v3702 = vunpack.c.l.b16 %v3150
    %v3703 = vunpack.c.h.b16 %v3150
    %v3704 = vunpack.c.l.b16 %v3151
    %v3705 = vunpack.c.h.b16 %v3151
    %v3706 = vunpack.c.l.b16 %v3152
    %v3707 = vunpack.c.h.b16 %v3152
    %v3708 = vunpack.c.l.b16 %v3153
    %v3709 = vunpack.c.h.b16 %v3153
    %v3710 = vunpack.c.l.b16 %v3154
    %v3711 = vunpack.c.h.b16 %v3154
    %v3712 = vunpack.c.l.b16 %v3155
    %v3713 = vunpack.c.h.b16 %v3155
    %v3714 = vunpack.c.l.b16 %v3156
    %v3715 = vunpack.c.h.b16 %v3156
    %v3716 = vunpack.c.l.b16 %v3157
    %v3717 = vunpack.c.h.b16 %v3157
    %v3718 = vunpack.c.l.b16 %v3158
    %v3719 = vunpack.c.h.b16 %v3158
    %v3720 = vunpack.c.l.b16 %v3159
    %v3721 = vunpack.c.h.b16 %v3159
    %v3722 = vunpack.c.l.b16 %v3160
    %v3723 = vunpack.c.h.b16 %v3160
    %v3724 = vunpack.c.l.b16 %v3161
    %v3725 = vunpack.c.h.b16 %v3161
    %v3726 = vunpack.c.l.b16 %v3162
    %v3727 = vunpack.c.h.b16 %v3162
    %v3728 = vunpack.c.l.b16 %v3163
    %v3729 = vunpack.c.h.b16 %v3163
    %v3730 = vunpack.c.l.b16 %v3164
    %v3731 = vunpack.c.h.b16 %v3164
    %v3732 = vunpack.c.l.b16 %v3165
    %v3733 = vunpack.c.h.b16 %v3165
    %v3734 = vunpack.c.l.b16 %v3166
    %v3735 = vunpack.c.h.b16 %v3166
    %v3736 = vunpack.c.l.b16 %v3167
    %v3737 = vunpack.c.h.b16 %v3167
    %v3738 = vunpack.c.l.b16 %v3168
    %v3739 = vunpack.c.h.b16 %v3168
    %v3740 = vunpack.c.l.b16 %v3169
    %v3741 = vunpack.c.h.b16 %v3169
    %v3742 = vunpack.c.l.b16 %v3170
    %v3743 = vunpack.c.h.b16 %v3170
    %v3744 = vunpack.c.l.b16 %v3171
    %v3745 = vunpack.c.h.b16 %v3171
    %v3746 = vunpack.c.l.b16 %v3172
    %v3747 = vunpack.c.h.b16 %v3172
    %v3748 = vunpack.c.l.b16 %v3173
    %v3749 = vunpack.c.h.b16 %v3173
    %v3750 = vunpack.c.l.b16 %v3174
    %v3751 = vunpack.c.h.b16 %v3174
    %v3752 = vunpack.c.l.b16 %v3175
    %v3753 = vunpack.c.h.b16 %v3175
    %v3754 = vunpack.c.l.b16 %v3176
    %v3755 = vunpack.c.h.b16 %v3176
    %v3756 = vunpack.c.l.b16 %v3177
    %v3757 = vunpack.c.h.b16 %v3177
    %v3758 = vunpack.c.l.b16 %v3178
    %v3759 = vunpack.c.h.b16 %v3178
    %v3760 = vunpack.c.l.b16 %v3179
    %v3761 = vunpack.c.h.b16 %v3179
    %v3762 = vunpack.c.l.b16 %v3180
    %v3763 = vunpack.c.h.b16 %v3180
    %v3764 = vunpack.c.l.b16 %v3181
    %v3765 = vunpack.c.h.b16 %v3181
    %v3766 = vunpack.c.l.b16 %v3182
    %v3767 = vunpack.c.h.b16 %v3182
    %v3768 = vunpack.c.l.b16 %v3183
    %v3769 = vunpack.c.h.b16 %v3183
    %v3770 = vunpack.c.l.b16 %v3184
    %v3771 = vunpack.c.h.b16 %v3184
    %v3772 = vunpack.c.l.b16 %v3185
    %v3773 = vunpack.c.h.b16 %v3185
    %v3774 = vunpack.c.l.b16 %v3186
    %v3775 = vunpack.c.h.b16 %v3186
    %v3776 = vunpack.c.l.b16 %v3187
    %v3777 = vunpack.c.h.b16 %v3187
    %v3778 = vunpack.c.l.b16 %v3188
    %v3779 = vunpack.c.h.b16 %v3188
    %v3780 = vunpack.c.l.b16 %v3189
    %v3781 = vunpack.c.h.b16 %v3189
    %v3782 = vunpack.c.l.b16 %v3190
    %v3783 = vunpack.c.h.b16 %v3190
    %v3784 = vunpack.c.l.b16 %v3191
    %v3785 = vunpack.c.h.b16 %v3191
    %v3786 = vunpack.c.l.b16 %v3192
    %v3787 = vunpack.c.h.b16 %v3192
    %v3788 = vunpack.c.l.b16 %v3193
    %v3789 = vunpack.c.h.b16 %v3193
    %v3790 = vunpack.c.l.b16 %v3194
    %v3791 = vunpack.c.h.b16 %v3194
    %v3792 = vunpack.c.l.b16 %v3195
    %v3793 = vunpack.c.h.b16 %v3195
    %v3794 = vunpack.c.l.b16 %v3196
    %v3795 = vunpack.c.h.b16 %v3196
    %v3796 = vunpack.c.l.b16 %v3197
    %v3797 = vunpack.c.h.b16 %v3197
    %v3798 = vunpack.c.l.b16 %v3198
    %v3799 = vunpack.c.h.b16 %v3198
    %v3800 = vunpack.c.l.b16 %v3199
    %v3801 = vunpack.c.h.b16 %v3199
    %v3802 = vunpack.c.l.b16 %v3200
    %v3803 = vunpack.c.h.b16 %v3200
    %v3804 = vunpack.c.l.b16 %v3201
    %v3805 = vunpack.c.h.b16 %v3201
    %v3806 = vunpack.c.l.b16 %v3202
    %v3807 = vunpack.c.h.b16 %v3202
    %v3808 = vunpack.c.l.b16 %v3203
    %v3809 = vunpack.c.h.b16 %v3203
    %v3810 = vunpack.c.l.b16 %v3204
    %v3811 = vunpack.c.h.b16 %v3204
    %v3812 = vunpack.c.l.b16 %v3205
    %v3813 = vunpack.c.h.b16 %v3205
    %v3814 = vunpack.c.l.b16 %v3206
    %v3815 = vunpack.c.h.b16 %v3206
    %v3816 = vunpack.c.l.b16 %v3207
    %v3817 = vunpack.c.h.b16 %v3207
    %v3818 = vunpack.c.l.b16 %v3208
    %v3819 = vunpack.c.h.b16 %v3208
    %v3820 = vunpack.c.l.b16 %v3209
    %v3821 = vunpack.c.h.b16 %v3209
    %v3822 = vunpack.c.l.b16 %v3210
    %v3823 = vunpack.c.h.b16 %v3210
    %v3824 = vunpack.c.l.b16 %v3211
    %v3825 = vunpack.c.h.b16 %v3211
    %v3826 = vunpack.c.l.b16 %v3212
    %v3827 = vunpack.c.h.b16 %v3212
    %v3828 = vunpack.c.l.b16 %v3213
    %v3829 = vunpack.c.h.b16 %v3213
    %v3830 = vunpack.c.l.b16 %v3214
    %v3831 = vunpack.c.h.b16 %v3214
    %v3832 = vunpack.c.l.b16 %v3215
    %v3833 = vunpack.c.h.b16 %v3215
    %v3834 = vunpack.c.l.b16 %v3216
    %v3835 = vunpack.c.h.b16 %v3216
    %v3836 = vunpack.c.l.b16 %v3217
    %v3837 = vunpack.c.h.b16 %v3217
    %v3838 = vunpack.c.l.b16 %v3218
    %v3839 = vunpack.c.h.b16 %v3218
    %v3840 = vunpack.c.l.b16 %v3219
    %v3841 = vunpack.c.h.b16 %v3219
    %v3842 = vunpack.c.l.b16 %v3220
    %v3843 = vunpack.c.h.b16 %v3220
    %v3844 = vunpack.c.l.b16 %v3221
    %v3845 = vunpack.c.h.b16 %v3221
    %v3846 = vunpack.c.l.b16 %v3222
    %v3847 = vunpack.c.h.b16 %v3222
    %v3848 = vunpack.c.l.b16 %v3223
    %v3849 = vunpack.c.h.b16 %v3223
    %v3850 = vunpack.c.l.b16 %v3224
    %v3851 = vunpack.c.h.b16 %v3224
    %v3852 = vunpack.c.l.b16 %v3225
    %v3853 = vunpack.c.h.b16 %v3225
    %v3854 = vunpack.c.l.b16 %v3226
    %v3855 = vunpack.c.h.b16 %v3226
    %v3856 = vunpack.c.l.b16 %v3227
    %v3857 = vunpack.c.h.b16 %v3227
    %v3858 = vunpack.c.l.b16 %v3228
    %v3859 = vunpack.c.h.b16 %v3228
    %v3860 = vunpack.c.l.b16 %v3229
    %v3861 = vunpack.c.h.b16 %v3229
    %v3862 = vunpack.c.l.b16 %v3230
    %v3863 = vunpack.c.h.b16 %v3230
    %v3864 = vunpack.c.l.b16 %v3231
    %v3865 = vunpack.c.h.b16 %v3231
    %v3866 = vunpack.c.l.b16 %v3232
    %v3867 = vunpack.c.h.b16 %v3232
    %v3868 = vunpack.c.l.b16 %v3233
    %v3869 = vunpack.c.h.b16 %v3233
    %v3870 = vunpack.c.l.b16 %v3234
    %v3871 = vunpack.c.h.b16 %v3234
    %v3872 = vunpack.c.l.b16 %v3235
    %v3873 = vunpack.c.h.b16 %v3235
    %v3874 = vunpack.c.l.b16 %v3236
    %v3875 = vunpack.c.h.b16 %v3236
    %v3876 = vunpack.c.l.b16 %v3237
    %v3877 = vunpack.c.h.b16 %v3237
    %v3878 = vunpack.c.l.b16 %v3238
    %v3879 = vunpack.c.h.b16 %v3238
    %v3880 = vunpack.c.l.b16 %v3239
    %v3881 = vunpack.c.h.b16 %v3239
    %v3882 = vunpack.c.l.b16 %v3240
    %v3883 = vunpack.c.h.b16 %v3240
    %v3884 = vunpack.c.l.b16 %v3241
    %v3885 = vunpack.c.h.b16 %v3241
    %v3886 = vunpack.c.l.b16 %v3242
    %v3887 = vunpack.c.h.b16 %v3242
    %v3888 = vunpack.c.l.b16 %v3243
    %v3889 = vunpack.c.h.b16 %v3243
    %v3890 = vunpack.c.l.b16 %v3244
    %v3891 = vunpack.c.h.b16 %v3244
    %v3892 = vunpack.c.l.b16 %v3245
    %v3893 = vunpack.c.h.b16 %v3245
    %v3894 = vunpack.c.l.b16 %v3246
    %v3895 = vunpack.c.h.b16 %v3246
    %v3896 = vunpack.c.l.b16 %v3247
    %v3897 = vunpack.c.h.b16 %v3247
    %v3898 = vunpack.c.l.b16 %v3248
    %v3899 = vunpack.c.h.b16 %v3248
    %v3900 = vunpack.c.l.b16 %v3249
    %v3901 = vunpack.c.h.b16 %v3249
    %v3902 = vunpack.c.l.b16 %v3250
    %v3903 = vunpack.c.h.b16 %v3250
    %v3904 = vunpack.c.l.b16 %v3251
    %v3905 = vunpack.c.h.b16 %v3251
    %v3906 = vunpack.c.l.b16 %v3252
    %v3907 = vunpack.c.h.b16 %v3252
    %v3908 = vunpack.c.l.b16 %v3253
    %v3909 = vunpack.c.h.b16 %v3253
    %v3910 = vunpack.c.l.b16 %v3254
    %v3911 = vunpack.c.h.b16 %v3254
    %v3912 = vunpack.c.l.b16 %v3255
    %v3913 = vunpack.c.h.b16 %v3255
    %v3914 = vunpack.c.l.b16 %v3256
    %v3915 = vunpack.c.h.b16 %v3256
    %v3916 = vunpack.c.l.b16 %v3257
    %v3917 = vunpack.c.h.b16 %v3257
    %v3918 = vunpack.c.l.b16 %v3258
    %v3919 = vunpack.c.h.b16 %v3258
    %v3920 = vunpack.c.l.b16 %v3259
    %v3921 = vunpack.c.h.b16 %v3259
    %v3922 = vunpack.c.l.b16 %v3260
    %v3923 = vunpack.c.h.b16 %v3260
    %v3924 = vunpack.c.l.b16 %v3261
    %v3925 = vunpack.c.h.b16 %v3261
    %v3926 = vunpack.c.l.b16 %v3262
    %v3927 = vunpack.c.h.b16 %v3262
    %v3928 = vunpack.c.l.b16 %v3263
    %v3929 = vunpack.c.h.b16 %v3263
    %v3930 = vunpack.c.l.b16 %v3264
    %v3931 = vunpack.c.h.b16 %v3264
    %v3932 = vunpack.c.l.b16 %v3265
    %v3933 = vunpack.c.h.b16 %v3265
    %v3934 = vunpack.c.l.b16 %v3266
    %v3935 = vunpack.c.h.b16 %v3266
    %v3936 = vunpack.c.l.b16 %v3267
    %v3937 = vunpack.c.h.b16 %v3267
    %v3938 = vunpack.c.l.b16 %v3268
    %v3939 = vunpack.c.h.b16 %v3268
    %v3940 = vunpack.c.l.b16 %v3269
    %v3941 = vunpack.c.h.b16 %v3269
    %v3942 = vunpack.c.l.b16 %v3270
    %v3943 = vunpack.c.h.b16 %v3270
    %v3944 = vunpack.c.l.b16 %v3271
    %v3945 = vunpack.c.h.b16 %v3271
    %v3946 = vunpack.c.l.b16 %v3272
    %v3947 = vunpack.c.h.b16 %v3272
    %v3948 = vunpack.c.l.b16 %v3273
    %v3949 = vunpack.c.h.b16 %v3273
    %v3950 = vunpack.c.l.b16 %v3274
    %v3951 = vunpack.c.h.b16 %v3274
    %v3952 = vunpack.c.l.b16 %v3275
    %v3953 = vunpack.c.h.b16 %v3275
    %v3954 = vunpack.c.l.b16 %v3276
    %v3955 = vunpack.c.h.b16 %v3276
    %v3956 = vunpack.c.l.b16 %v3277
    %v3957 = vunpack.c.h.b16 %v3277
    %v3958 = vunpack.c.l.b16 %v3278
    %v3959 = vunpack.c.h.b16 %v3278
    %v3960 = vunpack.c.l.b16 %v3279
    %v3961 = vunpack.c.h.b16 %v3279
    %v3962 = vunpack.c.l.b16 %v3280
    %v3963 = vunpack.c.h.b16 %v3280
    %v3964 = vunpack.c.l.b16 %v3281
    %v3965 = vunpack.c.h.b16 %v3281
    %v3966 = vunpack.c.l.b16 %v3282
    %v3967 = vunpack.c.h.b16 %v3282
    %v3968 = vunpack.c.l.b16 %v3283
    %v3969 = vunpack.c.h.b16 %v3283
    %v3970 = vunpack.c.l.b16 %v3284
    %v3971 = vunpack.c.h.b16 %v3284
    %v3972 = vunpack.c.l.b16 %v3285
    %v3973 = vunpack.c.h.b16 %v3285
    %v3974 = vunpack.c.l.b16 %v3286
    %v3975 = vunpack.c.h.b16 %v3286
    %v3976 = vunpack.c.l.b16 %v3287
    %v3977 = vunpack.c.h.b16 %v3287
    %v3978 = vunpack.c.l.b16 %v3288
    %v3979 = vunpack.c.h.b16 %v3288
    %v3980 = vunpack.c.l.b16 %v3289
    %v3981 = vunpack.c.h.b16 %v3289
    %v3982 = vunpack.c.l.b16 %v3290
    %v3983 = vunpack.c.h.b16 %v3290
    %v3984 = vunpack.c.l.b16 %v3291
    %v3985 = vunpack.c.h.b16 %v3291
    %v3986 = vunpack.c.l.b16 %v3292
    %v3987 = vunpack.c.h.b16 %v3292
    %v3988 = vunpack.c.l.b16 %v3293
    %v3989 = vunpack.c.h.b16 %v3293
    %v3990 = vunpack.c.l.b16 %v3294
    %v3991 = vunpack.c.h.b16 %v3294
    %v3992 = vunpack.c.l.b16 %v3295
    %v3993 = vunpack.c.h.b16 %v3295
    %v3994 = vunpack.c.l.b16 %v3296
    %v3995 = vunpack.c.h.b16 %v3296
    %v3996 = vunpack.c.l.b16 %v3297
    %v3997 = vunpack.c.h.b16 %v3297
    %v3998 = vunpack.c.l.b16 %v3298
    %v3999 = vunpack.c.h.b16 %v3298
    %v4000 = vunpack.c.l.b16 %v3299
    %v4001 = vunpack.c.h.b16 %v3299
    %v4002 = vunpack.c.l.b16 %v3300
    %v4003 = vunpack.c.h.b16 %v3300
    %v4004 = vunpack.c.l.b16 %v3301
    %v4005 = vunpack.c.h.b16 %v3301
    %v4006 = vunpack.c.l.b16 %v3302
    %v4007 = vunpack.c.h.b16 %v3302
    %v4008 = vunpack.c.l.b16 %v3303
    %v4009 = vunpack.c.h.b16 %v3303
    %v4010 = vunpack.c.l.b16 %v3304
    %v4011 = vunpack.c.h.b16 %v3304
    %v4012 = vunpack.c.l.b16 %v3305
    %v4013 = vunpack.c.h.b16 %v3305
    %v4014 = vunpack.c.l.b16 %v3306
    %v4015 = vunpack.c.h.b16 %v3306
    %v4016 = vunpack.c.l.b16 %v3307
    %v4017 = vunpack.c.h.b16 %v3307
    %v4018 = vunpack.c.l.b16 %v3308
    %v4019 = vunpack.c.h.b16 %v3308
    %v4020 = vunpack.c.l.b16 %v3309
    %v4021 = vunpack.c.h.b16 %v3309
    %v4022 = vunpack.c.l.b16 %v3310
    %v4023 = vunpack.c.h.b16 %v3310
    %v4024 = vunpack.c.l.b16 %v3311
    %v4025 = vunpack.c.h.b16 %v3311
    %v4026 = vunpack.c.l.b16 %v3312
    %v4027 = vunpack.c.h.b16 %v3312
    %v4028 = vunpack.c.l.b16 %v3313
    %v4029 = vunpack.c.h.b16 %v3313
    %v4030 = vunpack.c.l.b16 %v3314
    %v4031 = vunpack.c.h.b16 %v3314
    %v4032 = vunpack.c.l.b16 %v3315
    %v4033 = vunpack.c.h.b16 %v3315
    %v4034 = vunpack.c.l.b16 %v3316
    %v4035 = vunpack.c.h.b16 %v3316
    %v4036 = vunpack.c.l.b16 %v3317
    %v4037 = vunpack.c.h.b16 %v3317
    %v4038 = vunpack.c.l.b16 %v3318
    %v4039 = vunpack.c.h.b16 %v3318
    %v4040 = vunpack.c.l.b16 %v3319
    %v4041 = vunpack.c.h.b16 %v3319
    %v4042 = vunpack.c.l.b16 %v3320
    %v4043 = vunpack.c.h.b16 %v3320
    %v4044 = vunpack.c.l.b16 %v3321
    %v4045 = vunpack.c.h.b16 %v3321
    %v4046 = vunpack.c.l.b16 %v3322
    %v4047 = vunpack.c.h.b16 %v3322
    %v4048 = vunpack.c.l.b16 %v3323
    %v4049 = vunpack.c.h.b16 %v3323
    %v4050 = vunpack.c.l.b16 %v3324
    %v4051 = vunpack.c.h.b16 %v3324
    %v4052 = vunpack.c.l.b16 %v3325
    %v4053 = vunpack.c.h.b16 %v3325
    %v4054 = vunpack.c.l.b16 %v3326
    %v4055 = vunpack.c.h.b16 %v3326
    %v4056 = vunpack.c.l.b16 %v3327
    %v4057 = vunpack.c.h.b16 %v3327
    %v4058 = vunpack.c.l.b16 %v3328
    %v4059 = vunpack.c.h.b16 %v3328
    %v4060 = vunpack.c.l.b16 %v3329
    %v4061 = vunpack.c.h.b16 %v3329
    %v4062 = vunpack.c.l.b16 %v3330
    %v4063 = vunpack.c.h.b16 %v3330
    %v4064 = vunpack.c.l.b16 %v3331
    %v4065 = vunpack.c.h.b16 %v3331
    %v4066 = vunpack.c.l.b16 %v3332
    %v4067 = vunpack.c.h.b16 %v3332
    %v4068 = vunpack.c.l.b16 %v3333
    %v4069 = vunpack.c.h.b16 %v3333
    %v4070 = vunpack.c.l.b16 %v3334
    %v4071 = vunpack.c.h.b16 %v3334
    %v4072 = vunpack.c.l.b16 %v3335
    %v4073 = vunpack.c.h.b16 %v3335
    %v4074 = vunpack.c.l.b16 %v3336
    %v4075 = vunpack.c.h.b16 %v3336
    %v4076 = vunpack.c.l.b16 %v3337
    %v4077 = vunpack.c.h.b16 %v3337
    %v4078 = vunpack.c.l.b16 %v3338
    %v4079 = vunpack.c.h.b16 %v3338
    %v4080 = vunpack.c.l.b16 %v3339
    %v4081 = vunpack.c.h.b16 %v3339
    %v4082 = vunpack.c.l.b16 %v3340
    %v4083 = vunpack.c.h.b16 %v3340
    %v4084 = vunpack.c.l.b16 %v3341
    %v4085 = vunpack.c.h.b16 %v3341
    %v4086 = vunpack.c.l.b16 %v3342
    %v4087 = vunpack.c.h.b16 %v3342
    %v4088 = vunpack.c.l.b16 %v3343
    %v4089 = vunpack.c.h.b16 %v3343
    %v4090 = vunpack.c.l.b16 %v3344
    %v4091 = vunpack.c.h.b16 %v3344
    %v4092 = vunpack.c.l.b16 %v3345
    %v4093 = vunpack.c.h.b16 %v3345
    %v4094 = vunpack.c.l.b16 %v3346
    %v4095 = vunpack.c.h.b16 %v3346
    %v4096 = vunpack.c.l.b16 %v3347
    %v4097 = vunpack.c.h.b16 %v3347
    %v4098 = vunpack.c.l.b16 %v3348
    %v4099 = vunpack.c.h.b16 %v3348
    %v4100 = vunpack.c.l.b16 %v3349
    %v4101 = vunpack.c.h.b16 %v3349
    %v4102 = vunpack.c.l.b16 %v3350
    %v4103 = vunpack.c.h.b16 %v3350
    %v4104 = vunpack.c.l.b16 %v3351
    %v4105 = vunpack.c.h.b16 %v3351
    %v4106 = vunpack.c.l.b16 %v3352
    %v4107 = vunpack.c.h.b16 %v3352
    %v4108 = vunpack.c.l.b16 %v3353
    %v4109 = vunpack.c.h.b16 %v3353
    %v4110 = vunpack.c.l.b16 %v3354
    %v4111 = vunpack.c.h.b16 %v3354
    %v4112 = vunpack.c.l.b16 %v3355
    %v4113 = vunpack.c.h.b16 %v3355
    %v4114 = vunpack.c.l.b16 %v3356
    %v4115 = vunpack.c.h.b16 %v3356
    %v4116 = vunpack.c.l.b16 %v3357
    %v4117 = vunpack.c.h.b16 %v3357
    %v4118 = vunpack.c.l.b16 %v3358
    %v4119 = vunpack.c.h.b16 %v3358
    %v4120 = vunpack.c.l.b16 %v3359
    %v4121 = vunpack.c.h.b16 %v3359
    %v4122 = vunpack.c.l.b16 %v3360
    %v4123 = vunpack.c.h.b16 %v3360
    %v4124 = vunpack.c.l.b16 %v3361
    %v4125 = vunpack.c.h.b16 %v3361
    %v4126 = vunpack.c.l.b16 %v3362
    %v4127 = vunpack.c.h.b16 %v3362
    %v4128 = vunpack.c.l.b16 %v3363
    %v4129 = vunpack.c.h.b16 %v3363
    %v4130 = vunpack.c.l.b16 %v3364
    %v4131 = vunpack.c.h.b16 %v3364
    %v4132 = vunpack.c.l.b16 %v3365
    %v4133 = vunpack.c.h.b16 %v3365
    %v4134 = vunpack.c.l.b16 %v3366
    %v4135 = vunpack.c.h.b16 %v3366
    %v4136 = vunpack.c.l.b16 %v3367
    %v4137 = vunpack.c.h.b16 %v3367
    %v4138 = vunpack.c.l.b16 %v3368
    %v4139 = vunpack.c.h.b16 %v3368
    %v4140 = vunpack.c.l.b16 %v3369
    %v4141 = vunpack.c.h.b16 %v3369
    %v4142 = vunpack.c.l.b16 %v3370
    %v4143 = vunpack.c.h.b16 %v3370
    %v4144 = vunpack.c.l.b16 %v3371
    %v4145 = vunpack.c.h.b16 %v3371
    %v4146 = vpack.c.b16 %v3636, %v3634
    %v4147 = vpack.c.b16 %v3637, %v3635
    %v4148 = vpack.c.b16 %v3640, %v3638
    %v4149 = vpack.c.b16 %v3641, %v3639
    %v4150 = vpack.c.b16 %v3644, %v3642
    %v4151 = vpack.c.b16 %v3645, %v3643
    %v4152 = vpack.c.b16 %v3648, %v3646
    %v4153 = vpack.c.b16 %v3649, %v3647
    %v4154 = vpack.c.b16 %v3652, %v3650
    %v4155 = vpack.c.b16 %v3653, %v3651
    %v4156 = vpack.c.b16 %v3656, %v3654
    %v4157 = vpack.c.b16 %v3657, %v3655
    %v4158 = vpack.c.b16 %v3660, %v3658
    %v4159 = vpack.c.b16 %v3661, %v3659
    %v4160 = vpack.c.b16 %v3664, %v3662
    %v4161 = vpack.c.b16 %v3665, %v3663
    %v4162 = vpack.c.b16 %v3668, %v3666
    %v4163 = vpack.c.b16 %v3669, %v3667
    %v4164 = vpack.c.b16 %v3672, %v3670
    %v4165 = vpack.c.b16 %v3673, %v3671
    %v4166 = vpack.c.b16 %v3676, %v3674
    %v4167 = vpack.c.b16 %v3677, %v3675
    %v4168 = vpack.c.b16 %v3680, %v3678
    %v4169 = vpack.c.b16 %v3681, %v3679
    %v4170 = vpack.c.b16 %v3684, %v3682
    %v4171 = vpack.c.b16 %v3685, %v3683
    %v4172 = vpack.c.b16 %v3688, %v3686
    %v4173 = vpack.c.b16 %v3689, %v3687
    %v4174 = vpack.c.b16 %v3692, %v3690
    %v4175 = vpack.c.b16 %v3693, %v3691
    %v4176 = vpack.c.b16 %v3696, %v3694
    %v4177 = vpack.c.b16 %v3697, %v3695
    %v4178 = vpack.c.b16 %v3700, %v3698
    %v4179 = vpack.c.b16 %v3701, %v3699
    %v4180 = vpack.c.b16 %v3704, %v3702
    %v4181 = vpack.c.b16 %v3705, %v3703
    %v4182 = vpack.c.b16 %v3708, %v3706
    %v4183 = vpack.c.b16 %v3709, %v3707
    %v4184 = vpack.c.b16 %v3712, %v3710
    %v4185 = vpack.c.b16 %v3713, %v3711
    %v4186 = vpack.c.b16 %v3716, %v3714
    %v4187 = vpack.c.b16 %v3717, %v3715
    %v4188 = vpack.c.b16 %v3720, %v3718
    %v4189 = vpack.c.b16 %v3721, %v3719
    %v4190 = vpack.c.b16 %v3724, %v3722
    %v4191 = vpack.c.b16 %v3725, %v3723
    %v4192 = vpack.c.b16 %v3728, %v3726
    %v4193 = vpack.c.b16 %v3729, %v3727
    %v4194 = vpack.c.b16 %v3732, %v3730
    %v4195 = vpack.c.b16 %v3733, %v3731
    %v4196 = vpack.c.b16 %v3736, %v3734
    %v4197 = vpack.c.b16 %v3737, %v3735
    %v4198 = vpack.c.b16 %v3740, %v3738
    %v4199 = vpack.c.b16 %v3741, %v3739
    %v4200 = vpack.c.b16 %v3744, %v3742
    %v4201 = vpack.c.b16 %v3745, %v3743
    %v4202 = vpack.c.b16 %v3748, %v3746
    %v4203 = vpack.c.b16 %v3749, %v3747
    %v4204 = vpack.c.b16 %v3752, %v3750
    %v4205 = vpack.c.b16 %v3753, %v3751
    %v4206 = vpack.c.b16 %v3756, %v3754
    %v4207 = vpack.c.b16 %v3757, %v3755
    %v4208 = vpack.c.b16 %v3760, %v3758
    %v4209 = vpack.c.b16 %v3761, %v3759
    %v4210 = vpack.c.b16 %v3764, %v3762
    %v4211 = vpack.c.b16 %v3765, %v3763
    %v4212 = vpack.c.b16 %v3768, %v3766
    %v4213 = vpack.c.b16 %v3769, %v3767
    %v4214 = vpack.c.b16 %v3772, %v3770
    %v4215 = vpack.c.b16 %v3773, %v3771
    %v4216 = vpack.c.b16 %v3776, %v3774
    %v4217 = vpack.c.b16 %v3777, %v3775
    %v4218 = vpack.c.b16 %v3780, %v3778
    %v4219 = vpack.c.b16 %v3781, %v3779
    %v4220 = vpack.c.b16 %v3784, %v3782
    %v4221 = vpack.c.b16 %v3785, %v3783
    %v4222 = vpack.c.b16 %v3788, %v3786
    %v4223 = vpack.c.b16 %v3789, %v3787
    %v4224 = vpack.c.b16 %v3792, %v3790
    %v4225 = vpack.c.b16 %v3793, %v3791
    %v4226 = vpack.c.b16 %v3796, %v3794
    %v4227 = vpack.c.b16 %v3797, %v3795
    %v4228 = vpack.c.b16 %v3800, %v3798
    %v4229 = vpack.c.b16 %v3801, %v3799
    %v4230 = vpack.c.b16 %v3804, %v3802
    %v4231 = vpack.c.b16 %v3805, %v3803
    %v4232 = vpack.c.b16 %v3808, %v3806
    %v4233 = vpack.c.b16 %v3809, %v3807
    %v4234 = vpack.c.b16 %v3812, %v3810
    %v4235 = vpack.c.b16 %v3813, %v3811
    %v4236 = vpack.c.b16 %v3816, %v3814
    %v4237 = vpack.c.b16 %v3817, %v3815
    %v4238 = vpack.c.b16 %v3820, %v3818
    %v4239 = vpack.c.b16 %v3821, %v3819
    %v4240 = vpack.c.b16 %v3824, %v3822
    %v4241 = vpack.c.b16 %v3825, %v3823
    %v4242 = vpack.c.b16 %v3828, %v3826
    %v4243 = vpack.c.b16 %v3829, %v3827
    %v4244 = vpack.c.b16 %v3832, %v3830
    %v4245 = vpack.c.b16 %v3833, %v3831
    %v4246 = vpack.c.b16 %v3836, %v3834
    %v4247 = vpack.c.b16 %v3837, %v3835
    %v4248 = vpack.c.b16 %v3840, %v3838
    %v4249 = vpack.c.b16 %v3841, %v3839
    %v4250 = vpack.c.b16 %v3844, %v3842
    %v4251 = vpack.c.b16 %v3845, %v3843
    %v4252 = vpack.c.b16 %v3848, %v3846
    %v4253 = vpack.c.b16 %v3849, %v3847
    %v4254 = vpack.c.b16 %v3852, %v3850
    %v4255 = vpack.c.b16 %v3853, %v3851
    %v4256 = vpack.c.b16 %v3856, %v3854
    %v4257 = vpack.c.b16 %v3857, %v3855
    %v4258 = vpack.c.b16 %v3860, %v3858
    %v4259 = vpack.c.b16 %v3861, %v3859
    %v4260 = vpack.c.b16 %v3864, %v3862
    %v4261 = vpack.c.b16 %v3865, %v3863
    %v4262 = vpack.c.b16 %v3868, %v3866
    %v4263 = vpack.c.b16 %v3869, %v3867
    %v4264 = vpack.c.b16 %v3872, %v3870
    %v4265 = vpack.c.b16 %v3873, %v3871
    %v4266 = vpack.c.b16 %v3876, %v3874
    %v4267 = vpack.c.b16 %v3877, %v3875
    %v4268 = vpack.c.b16 %v3880, %v3878
    %v4269 = vpack.c.b16 %v3881, %v3879
    %v4270 = vpack.c.b16 %v3884, %v3882
    %v4271 = vpack.c.b16 %v3885, %v3883
    %v4272 = vpack.c.b16 %v3888, %v3886
    %v4273 = vpack.c.b16 %v3889, %v3887
    %v4274 = vpack.c.b16 %v3892, %v3890
    %v4275 = vpack.c.b16 %v3893, %v3891
    %v4276 = vpack.c.b16 %v3896, %v3894
    %v4277 = vpack.c.b16 %v3897, %v3895
    %v4278 = vpack.c.b16 %v3900, %v3898
    %v4279 = vpack.c.b16 %v3901, %v3899
    %v4280 = vpack.c.b16 %v3904, %v3902
    %v4281 = vpack.c.b16 %v3905, %v3903
    %v4282 = vpack.c.b16 %v3908, %v3906
    %v4283 = vpack.c.b16 %v3909, %v3907
    %v4284 = vpack.c.b16 %v3912, %v3910
    %v4285 = vpack.c.b16 %v3913, %v3911
    %v4286 = vpack.c.b16 %v3916, %v3914
    %v4287 = vpack.c.b16 %v3917, %v3915
    %v4288 = vpack.c.b16 %v3920, %v3918
    %v4289 = vpack.c.b16 %v3921, %v3919
    %v4290 = vpack.c.b16 %v3924, %v3922
    %v4291 = vpack.c.b16 %v3925, %v3923
    %v4292 = vpack.c.b16 %v3928, %v3926
    %v4293 = vpack.c.b16 %v3929, %v3927
    %v4294 = vpack.c.b16 %v3932, %v3930
    %v4295 = vpack.c.b16 %v3933, %v3931
    %v4296 = vpack.c.b16 %v3936, %v3934
    %v4297 = vpack.c.b16 %v3937, %v3935
    %v4298 = vpack.c.b16 %v3940, %v3938
    %v4299 = vpack.c.b16 %v3941, %v3939
    %v4300 = vpack.c.b16 %v3944, %v3942
    %v4301 = vpack.c.b16 %v3945, %v3943
    %v4302 = vpack.c.b16 %v3948, %v3946
    %v4303 = vpack.c.b16 %v3949, %v3947
    %v4304 = vpack.c.b16 %v3952, %v3950
    %v4305 = vpack.c.b16 %v3953, %v3951
    %v4306 = vpack.c.b16 %v3956, %v3954
    %v4307 = vpack.c.b16 %v3957, %v3955
    %v4308 = vpack.c.b16 %v3960, %v3958
    %v4309 = vpack.c.b16 %v3961, %v3959
    %v4310 = vpack.c.b16 %v3964, %v3962
    %v4311 = vpack.c.b16 %v3965, %v3963
    %v4312 = vpack.c.b16 %v3968, %v3966
    %v4313 = vpack.c.b16 %v3969, %v3967
    %v4314 = vpack.c.b16 %v3972, %v3970
    %v4315 = vpack.c.b16 %v3973, %v3971
    %v4316 = vpack.c.b16 %v3976, %v3974
    %v4317 = vpack.c.b16 %v3977, %v3975
    %v4318 = vpack.c.b16 %v3980, %v3978
    %v4319 = vpack.c.b16 %v3981, %v3979
    %v4320 = vpack.c.b16 %v3984, %v3982
    %v4321 = vpack.c.b16 %v3985, %v3983
    %v4322 = vpack.c.b16 %v3988, %v3986
    %v4323 = vpack.c.b16 %v3989, %v3987
    %v4324 = vpack.c.b16 %v3992, %v3990
    %v4325 = vpack.c.b16 %v3993, %v3991
    %v4326 = vpack.c.b16 %v3996, %v3994
    %v4327 = vpack.c.b16 %v3997, %v3995
    %v4328 = vpack.c.b16 %v4000, %v3998
    %v4329 = vpack.c.b16 %v4001, %v3999
    %v4330 = vpack.c.b16 %v4004, %v4002
    %v4331 = vpack.c.b16 %v4005, %v4003
    %v4332 = vpack.c.b16 %v4008, %v4006
    %v4333 = vpack.c.b16 %v4009, %v4007
    %v4334 = vpack.c.b16 %v4012, %v4010
    %v4335 = vpack.c.b16 %v4013, %v4011
    %v4336 = vpack.c.b16 %v4016, %v4014
    %v4337 = vpack.c.b16 %v4017, %v4015
    %v4338 = vpack.c.b16 %v4020, %v4018
    %v4339 = vpack.c.b16 %v4021, %v4019
    %v4340 = vpack.c.b16 %v4024, %v4022
    %v4341 = vpack.c.b16 %v4025, %v4023
    %v4342 = vpack.c.b16 %v4028, %v4026
    %v4343 = vpack.c.b16 %v4029, %v4027
    %v4344 = vpack.c.b16 %v4032, %v4030
    %v4345 = vpack.c.b16 %v4033, %v4031
    %v4346 = vpack.c.b16 %v4036, %v4034
    %v4347 = vpack.c.b16 %v4037, %v4035
    %v4348 = vpack.c.b16 %v4040, %v4038
    %v4349 = vpack.c.b16 %v4041, %v4039
    %v4350 = vpack.c.b16 %v4044, %v4042
    %v4351 = vpack.c.b16 %v4045, %v4043
    %v4352 = vpack.c.b16 %v4048, %v4046
    %v4353 = vpack.c.b16 %v4049, %v4047
    %v4354 = vpack.c.b16 %v4052, %v4050
    %v4355 = vpack.c.b16 %v4053, %v4051
    %v4356 = vpack.c.b16 %v4056, %v4054
    %v4357 = vpack.c.b16 %v4057, %v4055
    %v4358 = vpack.c.b16 %v4060, %v4058
    %v4359 = vpack.c.b16 %v4061, %v4059
    %v4360 = vpack.c.b16 %v4064, %v4062
    %v4361 = vpack.c.b16 %v4065, %v4063
    %v4362 = vpack.c.b16 %v4068, %v4066
    %v4363 = vpack.c.b16 %v4069, %v4067
    %v4364 = vpack.c.b16 %v4072, %v4070
    %v4365 = vpack.c.b16 %v4073, %v4071
    %v4366 = vpack.c.b16 %v4076, %v4074
    %v4367 = vpack.c.b16 %v4077, %v4075
    %v4368 = vpack.c.b16 %v4080, %v4078
    %v4369 = vpack.c.b16 %v4081, %v4079
    %v4370 = vpack.c.b16 %v4084, %v4082
    %v4371 = vpack.c.b16 %v4085, %v4083
    %v4372 = vpack.c.b16 %v4088, %v4086
    %v4373 = vpack.c.b16 %v4089, %v4087
    %v4374 = vpack.c.b16 %v4092, %v4090
    %v4375 = vpack.c.b16 %v4093, %v4091
    %v4376 = vpack.c.b16 %v4096, %v4094
    %v4377 = vpack.c.b16 %v4097, %v4095
    %v4378 = vpack.c.b16 %v4100, %v4098
    %v4379 = vpack.c.b16 %v4101, %v4099
    %v4380 = vpack.c.b16 %v4104, %v4102
    %v4381 = vpack.c.b16 %v4105, %v4103
    %v4382 = vpack.c.b16 %v4108, %v4106
    %v4383 = vpack.c.b16 %v4109, %v4107
    %v4384 = vpack.c.b16 %v4112, %v4110
    %v4385 = vpack.c.b16 %v4113, %v4111
    %v4386 = vpack.c.b16 %v4116, %v4114
    %v4387 = vpack.c.b16 %v4117, %v4115
    %v4388 = vpack.c.b16 %v4120, %v4118
    %v4389 = vpack.c.b16 %v4121, %v4119
    %v4390 = vpack.c.b16 %v4124, %v4122
    %v4391 = vpack.c.b16 %v4125, %v4123
    %v4392 = vpack.c.b16 %v4128, %v4126
    %v4393 = vpack.c.b16 %v4129, %v4127
    %v4394 = vpack.c.b16 %v4132, %v4130
    %v4395 = vpack.c.b16 %v4133, %v4131
    %v4396 = vpack.c.b16 %v4136, %v4134
    %v4397 = vpack.c.b16 %v4137, %v4135
    %v4398 = vpack.c.b16 %v4140, %v4138
    %v4399 = vpack.c.b16 %v4141, %v4139
    %v4400 = vpack.c.b16 %v4144, %v4142
    %v4401 = vpack.c.b16 %v4145, %v4143
    %4658 = vmatpush.bf16.msra.mxu0 %v4160
    %4659 = vmatpush.bf16.msra.mxu0 %v4158
    %4660 = vmatpush.bf16.msra.mxu0 %v4156
    %4661 = vmatpush.bf16.msra.mxu0 %v4154
    %4662 = vmatpush.bf16.msra.mxu0 %v4152
    %4663 = vmatpush.bf16.msra.mxu0 %v4150
    %4664 = vmatpush.bf16.msra.mxu0 %v4148
    %4665 = vmatpush.bf16.msra.mxu0 %v4146
    %4666 = vmatmul.bf16.gmra.mxu0 %v3100
    %v4667 = vpop.f32.mrf.mxu0
    %v4668 = vadd.f32 %v3374, %v4667
    %v4669 = vpop.f32.mrf.mxu0
    %v4670 = vadd.f32 %v3374, %v4669
    %4671 = vdwg.mxu0
    %4672 = vmatpush.bf16.msra.mxu0 %v4176
    %4673 = vmatpush.bf16.msra.mxu0 %v4174
    %4674 = vmatpush.bf16.msra.mxu0 %v4172
    %4675 = vmatpush.bf16.msra.mxu0 %v4170
    %4676 = vmatpush.bf16.msra.mxu0 %v4168
    %4677 = vmatpush.bf16.msra.mxu0 %v4166
    %4678 = vmatpush.bf16.msra.mxu0 %v4164
    %4679 = vmatpush.bf16.msra.mxu0 %v4162
    %4680 = vmatmul.bf16.gmra.mxu0 %v3101
    %v4681 = vpop.f32.mrf.mxu0
    %v4682 = vadd.f32 %v4668, %v4681
    %v4683 = vpop.f32.mrf.mxu0
    %v4684 = vadd.f32 %v4670, %v4683
    %4685 = vdwg.mxu0
    %4686 = vmatpush.bf16.msra.mxu0 %v4192
    %4687 = vmatpush.bf16.msra.mxu0 %v4190
    %4688 = vmatpush.bf16.msra.mxu0 %v4188
    %4689 = vmatpush.bf16.msra.mxu0 %v4186
    %4690 = vmatpush.bf16.msra.mxu0 %v4184
    %4691 = vmatpush.bf16.msra.mxu0 %v4182
    %4692 = vmatpush.bf16.msra.mxu0 %v4180
    %4693 = vmatpush.bf16.msra.mxu0 %v4178
    %4694 = vmatmul.bf16.gmra.mxu0 %v3102
    %v4695 = vpop.f32.mrf.mxu0
    %v4696 = vadd.f32 %v4682, %v4695
    %v4697 = vpop.f32.mrf.mxu0
    %v4698 = vadd.f32 %v4684, %v4697
    %4699 = vdwg.mxu0
    %4700 = vmatpush.bf16.msra.mxu0 %v4208
    %4701 = vmatpush.bf16.msra.mxu0 %v4206
    %4702 = vmatpush.bf16.msra.mxu0 %v4204
    %4703 = vmatpush.bf16.msra.mxu0 %v4202
    %4704 = vmatpush.bf16.msra.mxu0 %v4200
    %4705 = vmatpush.bf16.msra.mxu0 %v4198
    %4706 = vmatpush.bf16.msra.mxu0 %v4196
    %4707 = vmatpush.bf16.msra.mxu0 %v4194
    %4708 = vmatmul.bf16.gmra.mxu0 %v3103
    %v4709 = vpop.f32.mrf.mxu0
    %v4710 = vadd.f32 %v4696, %v4709
    %v4711 = vpop.f32.mrf.mxu0
    %v4712 = vadd.f32 %v4698, %v4711
    %4713 = vdwg.mxu0
    %4714 = vmatpush.bf16.msra.mxu0 %v4224
    %4715 = vmatpush.bf16.msra.mxu0 %v4222
    %4716 = vmatpush.bf16.msra.mxu0 %v4220
    %4717 = vmatpush.bf16.msra.mxu0 %v4218
    %4718 = vmatpush.bf16.msra.mxu0 %v4216
    %4719 = vmatpush.bf16.msra.mxu0 %v4214
    %4720 = vmatpush.bf16.msra.mxu0 %v4212
    %4721 = vmatpush.bf16.msra.mxu0 %v4210
    %4722 = vmatmul.bf16.gmra.mxu0 %v3104
    %v4723 = vpop.f32.mrf.mxu0
    %v4724 = vadd.f32 %v4710, %v4723
    %v4725 = vpop.f32.mrf.mxu0
    %v4726 = vadd.f32 %v4712, %v4725
    %4727 = vdwg.mxu0
    %4728 = vmatpush.bf16.msra.mxu0 %v4240
    %4729 = vmatpush.bf16.msra.mxu0 %v4238
    %4730 = vmatpush.bf16.msra.mxu0 %v4236
    %4731 = vmatpush.bf16.msra.mxu0 %v4234
    %4732 = vmatpush.bf16.msra.mxu0 %v4232
    %4733 = vmatpush.bf16.msra.mxu0 %v4230
    %4734 = vmatpush.bf16.msra.mxu0 %v4228
    %4735 = vmatpush.bf16.msra.mxu0 %v4226
    %4736 = vmatmul.bf16.gmra.mxu0 %v3105
    %v4737 = vpop.f32.mrf.mxu0
    %v4738 = vadd.f32 %v4724, %v4737
    %v4739 = vpop.f32.mrf.mxu0
    %v4740 = vadd.f32 %v4726, %v4739
    %4741 = vdwg.mxu0
    %4742 = vmatpush.bf16.msra.mxu0 %v4256
    %4743 = vmatpush.bf16.msra.mxu0 %v4254
    %4744 = vmatpush.bf16.msra.mxu0 %v4252
    %4745 = vmatpush.bf16.msra.mxu0 %v4250
    %4746 = vmatpush.bf16.msra.mxu0 %v4248
    %4747 = vmatpush.bf16.msra.mxu0 %v4246
    %4748 = vmatpush.bf16.msra.mxu0 %v4244
    %4749 = vmatpush.bf16.msra.mxu0 %v4242
    %4750 = vmatmul.bf16.gmra.mxu0 %v3106
    %v4751 = vpop.f32.mrf.mxu0
    %v4752 = vadd.f32 %v4738, %v4751
    %v4753 = vpop.f32.mrf.mxu0
    %v4754 = vadd.f32 %v4740, %v4753
    %4755 = vdwg.mxu0
    %4756 = vmatpush.bf16.msra.mxu0 %v4272
    %4757 = vmatpush.bf16.msra.mxu0 %v4270
    %4758 = vmatpush.bf16.msra.mxu0 %v4268
    %4759 = vmatpush.bf16.msra.mxu0 %v4266
    %4760 = vmatpush.bf16.msra.mxu0 %v4264
    %4761 = vmatpush.bf16.msra.mxu0 %v4262
    %4762 = vmatpush.bf16.msra.mxu0 %v4260
    %4763 = vmatpush.bf16.msra.mxu0 %v4258
    %4764 = vmatmul.bf16.gmra.mxu0 %v3107
    %v4765 = vpop.f32.mrf.mxu0
    %v4766 = vadd.f32 %v4752, %v4765
    %v4767 = vpop.f32.mrf.mxu0
    %v4768 = vadd.f32 %v4754, %v4767
    %4769 = vdwg.mxu0
    %4770 = vmatpush.bf16.msra.mxu0 %v4288
    %4771 = vmatpush.bf16.msra.mxu0 %v4286
    %4772 = vmatpush.bf16.msra.mxu0 %v4284
    %4773 = vmatpush.bf16.msra.mxu0 %v4282
    %4774 = vmatpush.bf16.msra.mxu0 %v4280
    %4775 = vmatpush.bf16.msra.mxu0 %v4278
    %4776 = vmatpush.bf16.msra.mxu0 %v4276
    %4777 = vmatpush.bf16.msra.mxu0 %v4274
    %4778 = vmatmul.bf16.gmra.mxu0 %v3108
    %v4779 = vpop.f32.mrf.mxu0
    %v4780 = vadd.f32 %v4766, %v4779
    %v4781 = vpop.f32.mrf.mxu0
    %v4782 = vadd.f32 %v4768, %v4781
    %4783 = vdwg.mxu0
    %4784 = vmatpush.bf16.msra.mxu0 %v4304
    %4785 = vmatpush.bf16.msra.mxu0 %v4302
    %4786 = vmatpush.bf16.msra.mxu0 %v4300
    %4787 = vmatpush.bf16.msra.mxu0 %v4298
    %4788 = vmatpush.bf16.msra.mxu0 %v4296
    %4789 = vmatpush.bf16.msra.mxu0 %v4294
    %4790 = vmatpush.bf16.msra.mxu0 %v4292
    %4791 = vmatpush.bf16.msra.mxu0 %v4290
    %4792 = vmatmul.bf16.gmra.mxu0 %v3109
    %v4793 = vpop.f32.mrf.mxu0
    %v4794 = vadd.f32 %v4780, %v4793
    %v4795 = vpop.f32.mrf.mxu0
    %v4796 = vadd.f32 %v4782, %v4795
    %4797 = vdwg.mxu0
    %4798 = vmatpush.bf16.msra.mxu0 %v4320
    %4799 = vmatpush.bf16.msra.mxu0 %v4318
    %4800 = vmatpush.bf16.msra.mxu0 %v4316
    %4801 = vmatpush.bf16.msra.mxu0 %v4314
    %4802 = vmatpush.bf16.msra.mxu0 %v4312
    %4803 = vmatpush.bf16.msra.mxu0 %v4310
    %4804 = vmatpush.bf16.msra.mxu0 %v4308
    %4805 = vmatpush.bf16.msra.mxu0 %v4306
    %4806 = vmatmul.bf16.gmra.mxu0 %v3110
    %v4807 = vpop.f32.mrf.mxu0
    %v4808 = vadd.f32 %v4794, %v4807
    %v4809 = vpop.f32.mrf.mxu0
    %v4810 = vadd.f32 %v4796, %v4809
    %4811 = vdwg.mxu0
    %4812 = vmatpush.bf16.msra.mxu0 %v4336
    %4813 = vmatpush.bf16.msra.mxu0 %v4334
    %4814 = vmatpush.bf16.msra.mxu0 %v4332
    %4815 = vmatpush.bf16.msra.mxu0 %v4330
    %4816 = vmatpush.bf16.msra.mxu0 %v4328
    %4817 = vmatpush.bf16.msra.mxu0 %v4326
    %4818 = vmatpush.bf16.msra.mxu0 %v4324
    %4819 = vmatpush.bf16.msra.mxu0 %v4322
    %4820 = vmatmul.bf16.gmra.mxu0 %v3111
    %v4821 = vpop.f32.mrf.mxu0
    %v4822 = vadd.f32 %v4808, %v4821
    %v4823 = vpop.f32.mrf.mxu0
    %v4824 = vadd.f32 %v4810, %v4823
    %4825 = vdwg.mxu0
    %4826 = vmatpush.bf16.msra.mxu0 %v4352
    %4827 = vmatpush.bf16.msra.mxu0 %v4350
    %4828 = vmatpush.bf16.msra.mxu0 %v4348
    %4829 = vmatpush.bf16.msra.mxu0 %v4346
    %4830 = vmatpush.bf16.msra.mxu0 %v4344
    %4831 = vmatpush.bf16.msra.mxu0 %v4342
    %4832 = vmatpush.bf16.msra.mxu0 %v4340
    %4833 = vmatpush.bf16.msra.mxu0 %v4338
    %4834 = vmatmul.bf16.gmra.mxu0 %v3112
    %v4835 = vpop.f32.mrf.mxu0
    %v4836 = vadd.f32 %v4822, %v4835
    %v4837 = vpop.f32.mrf.mxu0
    %v4838 = vadd.f32 %v4824, %v4837
    %4839 = vdwg.mxu0
    %4840 = vmatpush.bf16.msra.mxu0 %v4368
    %4841 = vmatpush.bf16.msra.mxu0 %v4366
    %4842 = vmatpush.bf16.msra.mxu0 %v4364
    %4843 = vmatpush.bf16.msra.mxu0 %v4362
    %4844 = vmatpush.bf16.msra.mxu0 %v4360
    %4845 = vmatpush.bf16.msra.mxu0 %v4358
    %4846 = vmatpush.bf16.msra.mxu0 %v4356
    %4847 = vmatpush.bf16.msra.mxu0 %v4354
    %4848 = vmatmul.bf16.gmra.mxu0 %v3113
    %v4849 = vpop.f32.mrf.mxu0
    %v4850 = vadd.f32 %v4836, %v4849
    %v4851 = vpop.f32.mrf.mxu0
    %v4852 = vadd.f32 %v4838, %v4851
    %4853 = vdwg.mxu0
    %4854 = vmatpush.bf16.msra.mxu0 %v4384
    %4855 = vmatpush.bf16.msra.mxu0 %v4382
    %4856 = vmatpush.bf16.msra.mxu0 %v4380
    %4857 = vmatpush.bf16.msra.mxu0 %v4378
    %4858 = vmatpush.bf16.msra.mxu0 %v4376
    %4859 = vmatpush.bf16.msra.mxu0 %v4374
    %4860 = vmatpush.bf16.msra.mxu0 %v4372
    %4861 = vmatpush.bf16.msra.mxu0 %v4370
    %4862 = vmatmul.bf16.gmra.mxu0 %v3114
    %v4863 = vpop.f32.mrf.mxu0
    %v4864 = vadd.f32 %v4850, %v4863
    %v4865 = vpop.f32.mrf.mxu0
    %v4866 = vadd.f32 %v4852, %v4865
    %4867 = vdwg.mxu0
    %4868 = vmatpush.bf16.msra.mxu0 %v4400
    %4869 = vmatpush.bf16.msra.mxu0 %v4398
    %4870 = vmatpush.bf16.msra.mxu0 %v4396
    %4871 = vmatpush.bf16.msra.mxu0 %v4394
    %4872 = vmatpush.bf16.msra.mxu0 %v4392
    %4873 = vmatpush.bf16.msra.mxu0 %v4390
    %4874 = vmatpush.bf16.msra.mxu0 %v4388
    %4875 = vmatpush.bf16.msra.mxu0 %v4386
    %4876 = vmatmul.bf16.gmra.mxu0 %v3115
    %v4877 = vpop.f32.mrf.mxu0
    %v4878 = vadd.f32 %v4864, %v4877
    %v4879 = vpop.f32.mrf.mxu0
    %v4880 = vadd.f32 %v4866, %v4879
    %4881 = vdwg.mxu0
    %4882 = vmatpush.bf16.msra.mxu0 %v4161
    %4883 = vmatpush.bf16.msra.mxu0 %v4159
    %4884 = vmatpush.bf16.msra.mxu0 %v4157
    %4885 = vmatpush.bf16.msra.mxu0 %v4155
    %4886 = vmatpush.bf16.msra.mxu0 %v4153
    %4887 = vmatpush.bf16.msra.mxu0 %v4151
    %4888 = vmatpush.bf16.msra.mxu0 %v4149
    %4889 = vmatpush.bf16.msra.mxu0 %v4147
    %4890 = vmatmul.bf16.gmra.mxu0 %v3100
    %v4891 = vpop.f32.mrf.mxu0
    %v4892 = vadd.f32 %v3375, %v4891
    %v4893 = vpop.f32.mrf.mxu0
    %v4894 = vadd.f32 %v3375, %v4893
    %4895 = vdwg.mxu0
    %4896 = vmatpush.bf16.msra.mxu0 %v4177
    %4897 = vmatpush.bf16.msra.mxu0 %v4175
    %4898 = vmatpush.bf16.msra.mxu0 %v4173
    %4899 = vmatpush.bf16.msra.mxu0 %v4171
    %4900 = vmatpush.bf16.msra.mxu0 %v4169
    %4901 = vmatpush.bf16.msra.mxu0 %v4167
    %4902 = vmatpush.bf16.msra.mxu0 %v4165
    %4903 = vmatpush.bf16.msra.mxu0 %v4163
    %4904 = vmatmul.bf16.gmra.mxu0 %v3101
    %v4905 = vpop.f32.mrf.mxu0
    %v4906 = vadd.f32 %v4892, %v4905
    %v4907 = vpop.f32.mrf.mxu0
    %v4908 = vadd.f32 %v4894, %v4907
    %4909 = vdwg.mxu0
    %4910 = vmatpush.bf16.msra.mxu0 %v4193
    %4911 = vmatpush.bf16.msra.mxu0 %v4191
    %4912 = vmatpush.bf16.msra.mxu0 %v4189
    %4913 = vmatpush.bf16.msra.mxu0 %v4187
    %4914 = vmatpush.bf16.msra.mxu0 %v4185
    %4915 = vmatpush.bf16.msra.mxu0 %v4183
    %4916 = vmatpush.bf16.msra.mxu0 %v4181
    %4917 = vmatpush.bf16.msra.mxu0 %v4179
    %4918 = vmatmul.bf16.gmra.mxu0 %v3102
    %v4919 = vpop.f32.mrf.mxu0
    %v4920 = vadd.f32 %v4906, %v4919
    %v4921 = vpop.f32.mrf.mxu0
    %v4922 = vadd.f32 %v4908, %v4921
    %4923 = vdwg.mxu0
    %4924 = vmatpush.bf16.msra.mxu0 %v4209
    %4925 = vmatpush.bf16.msra.mxu0 %v4207
    %4926 = vmatpush.bf16.msra.mxu0 %v4205
    %4927 = vmatpush.bf16.msra.mxu0 %v4203
    %4928 = vmatpush.bf16.msra.mxu0 %v4201
    %4929 = vmatpush.bf16.msra.mxu0 %v4199
    %4930 = vmatpush.bf16.msra.mxu0 %v4197
    %4931 = vmatpush.bf16.msra.mxu0 %v4195
    %4932 = vmatmul.bf16.gmra.mxu0 %v3103
    %v4933 = vpop.f32.mrf.mxu0
    %v4934 = vadd.f32 %v4920, %v4933
    %v4935 = vpop.f32.mrf.mxu0
    %v4936 = vadd.f32 %v4922, %v4935
    %4937 = vdwg.mxu0
    %4938 = vmatpush.bf16.msra.mxu0 %v4225
    %4939 = vmatpush.bf16.msra.mxu0 %v4223
    %4940 = vmatpush.bf16.msra.mxu0 %v4221
    %4941 = vmatpush.bf16.msra.mxu0 %v4219
    %4942 = vmatpush.bf16.msra.mxu0 %v4217
    %4943 = vmatpush.bf16.msra.mxu0 %v4215
    %4944 = vmatpush.bf16.msra.mxu0 %v4213
    %4945 = vmatpush.bf16.msra.mxu0 %v4211
    %4946 = vmatmul.bf16.gmra.mxu0 %v3104
    %v4947 = vpop.f32.mrf.mxu0
    %v4948 = vadd.f32 %v4934, %v4947
    %v4949 = vpop.f32.mrf.mxu0
    %v4950 = vadd.f32 %v4936, %v4949
    %4951 = vdwg.mxu0
    %4952 = vmatpush.bf16.msra.mxu0 %v4241
    %4953 = vmatpush.bf16.msra.mxu0 %v4239
    %4954 = vmatpush.bf16.msra.mxu0 %v4237
    %4955 = vmatpush.bf16.msra.mxu0 %v4235
    %4956 = vmatpush.bf16.msra.mxu0 %v4233
    %4957 = vmatpush.bf16.msra.mxu0 %v4231
    %4958 = vmatpush.bf16.msra.mxu0 %v4229
    %4959 = vmatpush.bf16.msra.mxu0 %v4227
    %4960 = vmatmul.bf16.gmra.mxu0 %v3105
    %v4961 = vpop.f32.mrf.mxu0
    %v4962 = vadd.f32 %v4948, %v4961
    %v4963 = vpop.f32.mrf.mxu0
    %v4964 = vadd.f32 %v4950, %v4963
    %4965 = vdwg.mxu0
    %4966 = vmatpush.bf16.msra.mxu0 %v4257
    %4967 = vmatpush.bf16.msra.mxu0 %v4255
    %4968 = vmatpush.bf16.msra.mxu0 %v4253
    %4969 = vmatpush.bf16.msra.mxu0 %v4251
    %4970 = vmatpush.bf16.msra.mxu0 %v4249
    %4971 = vmatpush.bf16.msra.mxu0 %v4247
    %4972 = vmatpush.bf16.msra.mxu0 %v4245
    %4973 = vmatpush.bf16.msra.mxu0 %v4243
    %4974 = vmatmul.bf16.gmra.mxu0 %v3106
    %v4975 = vpop.f32.mrf.mxu0
    %v4976 = vadd.f32 %v4962, %v4975
    %v4977 = vpop.f32.mrf.mxu0
    %v4978 = vadd.f32 %v4964, %v4977
    %4979 = vdwg.mxu0
    %4980 = vmatpush.bf16.msra.mxu0 %v4273
    %4981 = vmatpush.bf16.msra.mxu0 %v4271
    %4982 = vmatpush.bf16.msra.mxu0 %v4269
    %4983 = vmatpush.bf16.msra.mxu0 %v4267
    %4984 = vmatpush.bf16.msra.mxu0 %v4265
    %4985 = vmatpush.bf16.msra.mxu0 %v4263
    %4986 = vmatpush.bf16.msra.mxu0 %v4261
    %4987 = vmatpush.bf16.msra.mxu0 %v4259
    %4988 = vmatmul.bf16.gmra.mxu0 %v3107
    %v4989 = vpop.f32.mrf.mxu0
    %v4990 = vadd.f32 %v4976, %v4989
    %v4991 = vpop.f32.mrf.mxu0
    %v4992 = vadd.f32 %v4978, %v4991
    %4993 = vdwg.mxu0
    %4994 = vmatpush.bf16.msra.mxu0 %v4289
    %4995 = vmatpush.bf16.msra.mxu0 %v4287
    %4996 = vmatpush.bf16.msra.mxu0 %v4285
    %4997 = vmatpush.bf16.msra.mxu0 %v4283
    %4998 = vmatpush.bf16.msra.mxu0 %v4281
    %4999 = vmatpush.bf16.msra.mxu0 %v4279
    %5000 = vmatpush.bf16.msra.mxu0 %v4277
    %5001 = vmatpush.bf16.msra.mxu0 %v4275
    %5002 = vmatmul.bf16.gmra.mxu0 %v3108
    %v5003 = vpop.f32.mrf.mxu0
    %v5004 = vadd.f32 %v4990, %v5003
    %v5005 = vpop.f32.mrf.mxu0
    %v5006 = vadd.f32 %v4992, %v5005
    %5007 = vdwg.mxu0
    %5008 = vmatpush.bf16.msra.mxu0 %v4305
    %5009 = vmatpush.bf16.msra.mxu0 %v4303
    %5010 = vmatpush.bf16.msra.mxu0 %v4301
    %5011 = vmatpush.bf16.msra.mxu0 %v4299
    %5012 = vmatpush.bf16.msra.mxu0 %v4297
    %5013 = vmatpush.bf16.msra.mxu0 %v4295
    %5014 = vmatpush.bf16.msra.mxu0 %v4293
    %5015 = vmatpush.bf16.msra.mxu0 %v4291
    %5016 = vmatmul.bf16.gmra.mxu0 %v3109
    %v5017 = vpop.f32.mrf.mxu0
    %v5018 = vadd.f32 %v5004, %v5017
    %v5019 = vpop.f32.mrf.mxu0
    %v5020 = vadd.f32 %v5006, %v5019
    %5021 = vdwg.mxu0
    %5022 = vmatpush.bf16.msra.mxu0 %v4321
    %5023 = vmatpush.bf16.msra.mxu0 %v4319
    %5024 = vmatpush.bf16.msra.mxu0 %v4317
    %5025 = vmatpush.bf16.msra.mxu0 %v4315
    %5026 = vmatpush.bf16.msra.mxu0 %v4313
    %5027 = vmatpush.bf16.msra.mxu0 %v4311
    %5028 = vmatpush.bf16.msra.mxu0 %v4309
    %5029 = vmatpush.bf16.msra.mxu0 %v4307
    %5030 = vmatmul.bf16.gmra.mxu0 %v3110
    %v5031 = vpop.f32.mrf.mxu0
    %v5032 = vadd.f32 %v5018, %v5031
    %v5033 = vpop.f32.mrf.mxu0
    %v5034 = vadd.f32 %v5020, %v5033
    %5035 = vdwg.mxu0
    %5036 = vmatpush.bf16.msra.mxu0 %v4337
    %5037 = vmatpush.bf16.msra.mxu0 %v4335
    %5038 = vmatpush.bf16.msra.mxu0 %v4333
    %5039 = vmatpush.bf16.msra.mxu0 %v4331
    %5040 = vmatpush.bf16.msra.mxu0 %v4329
    %5041 = vmatpush.bf16.msra.mxu0 %v4327
    %5042 = vmatpush.bf16.msra.mxu0 %v4325
    %5043 = vmatpush.bf16.msra.mxu0 %v4323
    %5044 = vmatmul.bf16.gmra.mxu0 %v3111
    %v5045 = vpop.f32.mrf.mxu0
    %v5046 = vadd.f32 %v5032, %v5045
    %v5047 = vpop.f32.mrf.mxu0
    %v5048 = vadd.f32 %v5034, %v5047
    %5049 = vdwg.mxu0
    %5050 = vmatpush.bf16.msra.mxu0 %v4353
    %5051 = vmatpush.bf16.msra.mxu0 %v4351
    %5052 = vmatpush.bf16.msra.mxu0 %v4349
    %5053 = vmatpush.bf16.msra.mxu0 %v4347
    %5054 = vmatpush.bf16.msra.mxu0 %v4345
    %5055 = vmatpush.bf16.msra.mxu0 %v4343
    %5056 = vmatpush.bf16.msra.mxu0 %v4341
    %5057 = vmatpush.bf16.msra.mxu0 %v4339
    %5058 = vmatmul.bf16.gmra.mxu0 %v3112
    %v5059 = vpop.f32.mrf.mxu0
    %v5060 = vadd.f32 %v5046, %v5059
    %v5061 = vpop.f32.mrf.mxu0
    %v5062 = vadd.f32 %v5048, %v5061
    %5063 = vdwg.mxu0
    %5064 = vmatpush.bf16.msra.mxu0 %v4369
    %5065 = vmatpush.bf16.msra.mxu0 %v4367
    %5066 = vmatpush.bf16.msra.mxu0 %v4365
    %5067 = vmatpush.bf16.msra.mxu0 %v4363
    %5068 = vmatpush.bf16.msra.mxu0 %v4361
    %5069 = vmatpush.bf16.msra.mxu0 %v4359
    %5070 = vmatpush.bf16.msra.mxu0 %v4357
    %5071 = vmatpush.bf16.msra.mxu0 %v4355
    %5072 = vmatmul.bf16.gmra.mxu0 %v3113
    %v5073 = vpop.f32.mrf.mxu0
    %v5074 = vadd.f32 %v5060, %v5073
    %v5075 = vpop.f32.mrf.mxu0
    %v5076 = vadd.f32 %v5062, %v5075
    %5077 = vdwg.mxu0
    %5078 = vmatpush.bf16.msra.mxu0 %v4385
    %5079 = vmatpush.bf16.msra.mxu0 %v4383
    %5080 = vmatpush.bf16.msra.mxu0 %v4381
    %5081 = vmatpush.bf16.msra.mxu0 %v4379
    %5082 = vmatpush.bf16.msra.mxu0 %v4377
    %5083 = vmatpush.bf16.msra.mxu0 %v4375
    %5084 = vmatpush.bf16.msra.mxu0 %v4373
    %5085 = vmatpush.bf16.msra.mxu0 %v4371
    %5086 = vmatmul.bf16.gmra.mxu0 %v3114
    %v5087 = vpop.f32.mrf.mxu0
    %v5088 = vadd.f32 %v5074, %v5087
    %v5089 = vpop.f32.mrf.mxu0
    %v5090 = vadd.f32 %v5076, %v5089
    %5091 = vdwg.mxu0
    %5092 = vmatpush.bf16.msra.mxu0 %v4401
    %5093 = vmatpush.bf16.msra.mxu0 %v4399
    %5094 = vmatpush.bf16.msra.mxu0 %v4397
    %5095 = vmatpush.bf16.msra.mxu0 %v4395
    %5096 = vmatpush.bf16.msra.mxu0 %v4393
    %5097 = vmatpush.bf16.msra.mxu0 %v4391
    %5098 = vmatpush.bf16.msra.mxu0 %v4389
    %5099 = vmatpush.bf16.msra.mxu0 %v4387
    %5100 = vmatmul.bf16.gmra.mxu0 %v3115
    %v5101 = vpop.f32.mrf.mxu0
    %v5102 = vadd.f32 %v5088, %v5101
    %v5103 = vpop.f32.mrf.mxu0
    %v5104 = vadd.f32 %v5090, %v5103
    %5105 = vdwg.mxu0
    %p5106 = scmp.eq.s32.totalorder 0, 0
    // Predicated region
    $region42: #{_lambda_.1} parent=1 // pred_check
      %p5107 = pneg %p5106
    $region43: #{_lambda_.1} parent=1 // pred_check_branch
      %5109 = sbr.rel (%p5107) target = $region45
    $region44: #{_lambda_.1} parent=1 // pred_region
      %5110 = vst [vmem:[#allocation2] sm:$0xff] 0.0
      %5111 = vst [vmem:[#allocation2 + $0x8] sm:$0xff] 0.0
      %5112 = vst [vmem:[#allocation2 + $0x10] sm:$0xff] 0.0
      %5113 = vst [vmem:[#allocation2 + $0x18] sm:$0xff] 0.0
      %5114 = vst [vmem:[#allocation2 + $0x20] sm:$0xff] 0.0
      %5115 = vst [vmem:[#allocation2 + $0x28] sm:$0xff] 0.0
      %5116 = vst [vmem:[#allocation2 + $0x30] sm:$0xff] 0.0
      %5117 = vst [vmem:[#allocation2 + $0x38] sm:$0xff] 0.0
      %5118 = vst [vmem:[#allocation2 + $0x40] sm:$0xff] 0.0
      %5119 = vst [vmem:[#allocation2 + $0x48] sm:$0xff] 0.0
      %5120 = vst [vmem:[#allocation2 + $0x50] sm:$0xff] 0.0
      %5121 = vst [vmem:[#allocation2 + $0x58] sm:$0xff] 0.0
      %5122 = vst [vmem:[#allocation2 + $0x60] sm:$0xff] 0.0
      %5123 = vst [vmem:[#allocation2 + $0x68] sm:$0xff] 0.0
      %5124 = vst [vmem:[#allocation2 + $0x70] sm:$0xff] 0.0
      %5125 = vst [vmem:[#allocation2 + $0x78] sm:$0xff] 0.0
      %5126 = vst [vmem:[#allocation2 + $0x80] sm:$0xff] 0.0
      %5127 = vst [vmem:[#allocation2 + $0x88] sm:$0xff] 0.0
      %5128 = vst [vmem:[#allocation2 + $0x90] sm:$0xff] 0.0
      %5129 = vst [vmem:[#allocation2 + $0x98] sm:$0xff] 0.0
      %5130 = vst [vmem:[#allocation2 + $0xa0] sm:$0xff] 0.0
      %5131 = vst [vmem:[#allocation2 + $0xa8] sm:$0xff] 0.0
      %5132 = vst [vmem:[#allocation2 + $0xb0] sm:$0xff] 0.0
      %5133 = vst [vmem:[#allocation2 + $0xb8] sm:$0xff] 0.0
      %5134 = vst [vmem:[#allocation2 + $0xc0] sm:$0xff] 0.0
      %5135 = vst [vmem:[#allocation2 + $0xc8] sm:$0xff] 0.0
      %5136 = vst [vmem:[#allocation2 + $0xd0] sm:$0xff] 0.0
      %5137 = vst [vmem:[#allocation2 + $0xd8] sm:$0xff] 0.0
      %5138 = vst [vmem:[#allocation2 + $0xe0] sm:$0xff] 0.0
      %5139 = vst [vmem:[#allocation2 + $0xe8] sm:$0xff] 0.0
      %5140 = vst [vmem:[#allocation2 + $0xf0] sm:$0xff] 0.0
      %5141 = vst [vmem:[#allocation2 + $0xf8] sm:$0xff] 0.0
      %5142 = vst [vmem:[#allocation2 + $0x100] sm:$0xff] 0.0
      %5143 = vst [vmem:[#allocation2 + $0x108] sm:$0xff] 0.0
      %5144 = vst [vmem:[#allocation2 + $0x110] sm:$0xff] 0.0
      %5145 = vst [vmem:[#allocation2 + $0x118] sm:$0xff] 0.0
      %5146 = vst [vmem:[#allocation2 + $0x120] sm:$0xff] 0.0
      %5147 = vst [vmem:[#allocation2 + $0x128] sm:$0xff] 0.0
      %5148 = vst [vmem:[#allocation2 + $0x130] sm:$0xff] 0.0
      %5149 = vst [vmem:[#allocation2 + $0x138] sm:$0xff] 0.0
      %5150 = vst [vmem:[#allocation2 + $0x140] sm:$0xff] 0.0
      %5151 = vst [vmem:[#allocation2 + $0x148] sm:$0xff] 0.0
      %5152 = vst [vmem:[#allocation2 + $0x150] sm:$0xff] 0.0
      %5153 = vst [vmem:[#allocation2 + $0x158] sm:$0xff] 0.0
      %5154 = vst [vmem:[#allocation2 + $0x160] sm:$0xff] 0.0
      %5155 = vst [vmem:[#allocation2 + $0x168] sm:$0xff] 0.0
      %5156 = vst [vmem:[#allocation2 + $0x170] sm:$0xff] 0.0
      %5157 = vst [vmem:[#allocation2 + $0x178] sm:$0xff] 0.0
      %5158 = vst [vmem:[#allocation2 + $0x180] sm:$0xff] 0.0
      %5159 = vst [vmem:[#allocation2 + $0x188] sm:$0xff] 0.0
      %5160 = vst [vmem:[#allocation2 + $0x190] sm:$0xff] 0.0
      %5161 = vst [vmem:[#allocation2 + $0x198] sm:$0xff] 0.0
      %5162 = vst [vmem:[#allocation2 + $0x1a0] sm:$0xff] 0.0
      %5163 = vst [vmem:[#allocation2 + $0x1a8] sm:$0xff] 0.0
      %5164 = vst [vmem:[#allocation2 + $0x1b0] sm:$0xff] 0.0
      %5165 = vst [vmem:[#allocation2 + $0x1b8] sm:$0xff] 0.0
      %5166 = vst [vmem:[#allocation2 + $0x1c0] sm:$0xff] 0.0
      %5167 = vst [vmem:[#allocation2 + $0x1c8] sm:$0xff] 0.0
      %5168 = vst [vmem:[#allocation2 + $0x1d0] sm:$0xff] 0.0
      %5169 = vst [vmem:[#allocation2 + $0x1d8] sm:$0xff] 0.0
      %5170 = vst [vmem:[#allocation2 + $0x1e0] sm:$0xff] 0.0
      %5171 = vst [vmem:[#allocation2 + $0x1e8] sm:$0xff] 0.0
      %5172 = vst [vmem:[#allocation2 + $0x1f0] sm:$0xff] 0.0
      %5173 = vst [vmem:[#allocation2 + $0x1f8] sm:$0xff] 0.0
      %v5174 = vlaneseq
      %vm5175 = vcmp.ge.s32.totalorder %v5174, 0
      %vm5176 = vcmp.lt.s32.totalorder %v5174, 256
      %vm5177 = vmand %vm5175, %vm5176
      %5178 = vst.msk [vmem:[#allocation3] sm:$0x3] %vm5177, 0.0
      %5179 = vst.msk [vmem:[#allocation4] sm:$0x3] %vm5177, 0.0
    $region45: #{_lambda_.1} parent=1 // pred_fallthru
      _
    %s5180 = sld [smem:[#allocation5]]
    %s5181 = smul.u32 0, 16
    %v5182 = vlaneseq
    %v5183 = vshrl.u32 %v5182, 7
    %v5184 = vadd.s32 %v5183, 8
    %v5185 = vstv %s5181
    %v5186 = vadd.s32 %v5185, %v5183
    %v5187 = vadd.s32 %v5185, %v5184
    %vm5188 = vcmp.lt.s32.totalorder %v5186, 2
    %vm5189 = vcmp.lt.s32.totalorder %v5187, 2
    %v5190 = vsel %vm5188, 1, 0
    %v5191 = vsel %vm5189, 1, 0
    %v5192 = vcvt.s32.f32 %v5190
    %v5193 = vcvt.s32.f32 %v5191
    %v5194 = vmul.f32 %v2272, %v5192
    %v5195 = vmul.f32 %v2496, %v5192
    %v5196 = vmul.f32 %v2274, %v5193
    %v5197 = vmul.f32 %v2498, %v5193
    %v5198 = vmul.f32 %v4878, %v5192
    %v5199 = vmul.f32 %v5102, %v5192
    %v5200 = vmul.f32 %v4880, %v5193
    %v5201 = vmul.f32 %v5104, %v5193
    %v5202 = vld [vmem:[#allocation3] sm:$0x3]
    %v5203 = vadd.f32 %v5194, %v5196
    %v5204 = vrot.slane %v5203, 4
    %v5205 = vadd.f32 %v5203, %v5204
    %v5206 = vrot.slane %v5205, 2
    %v5207 = vadd.f32 %v5205, %v5206
    %v5208 = vrot.slane %v5207, 1
    %v5209 = vadd.f32 %v5207, %v5208
    %v5210 = vadd.f32 %v5195, %v5197
    %v5211 = vrot.slane %v5210, 4
    %v5212 = vadd.f32 %v5210, %v5211
    %v5213 = vrot.slane %v5212, 2
    %v5214 = vadd.f32 %v5212, %v5213
    %v5215 = vrot.slane %v5214, 1
    %v5216 = vadd.f32 %v5214, %v5215
    %v5219 = vrot.slane %v5216, 7
    %vm5220 = vcmask 1040384
    %v5221 = vsel %vm5220, %v5209, %v5219
    %v5223 = vadd.f32 %v5202, %v5221
    %v5224 = vlaneseq
    %vm5225 = vcmp.ge.s32.totalorder %v5224, 0
    %vm5226 = vcmp.lt.s32.totalorder %v5224, 256
    %vm5227 = vmand %vm5225, %vm5226
    %5228 = vst.msk [vmem:[#allocation3] sm:$0x3] %vm5227, %v5223
    %v5229 = vld [vmem:[#allocation4] sm:$0x3]
    %v5230 = vadd.f32 %v5198, %v5200
    %v5231 = vrot.slane %v5230, 4
    %v5232 = vadd.f32 %v5230, %v5231
    %v5233 = vrot.slane %v5232, 2
    %v5234 = vadd.f32 %v5232, %v5233
    %v5235 = vrot.slane %v5234, 1
    %v5236 = vadd.f32 %v5234, %v5235
    %v5237 = vadd.f32 %v5199, %v5201
    %v5238 = vrot.slane %v5237, 4
    %v5239 = vadd.f32 %v5237, %v5238
    %v5240 = vrot.slane %v5239, 2
    %v5241 = vadd.f32 %v5239, %v5240
    %v5242 = vrot.slane %v5241, 1
    %v5243 = vadd.f32 %v5241, %v5242
    %v5246 = vrot.slane %v5243, 7
    %v5247 = vsel %vm5220, %v5236, %v5246
    %v5249 = vadd.f32 %v5229, %v5247
    %5250 = vst.msk [vmem:[#allocation4] sm:$0x3] %vm5227, %v5249
    %s5251 = sadd.f32 %s5180, 1.0
    %s5252 = ssub.f32 0.0, %s5251
    %v5253 = vstv %s5252
    %v5254 = vmul.f32 %v5198, %v5253
    %v5255 = vmul.f32 %v5199, %v5253
    %v5256 = vmul.f32 %v5200, %v5253
    %v5257 = vmul.f32 %v5201, %v5253
    %v5258 = vpack.c.bf16 %v5196, %v5194
    %v5259 = vpack.c.bf16 %v5197, %v5195
    %v5260 = vpack.c.bf16 %v5256, %v5254
    %v5261 = vpack.c.bf16 %v5257, %v5255
    %v5262 = vpack.c.bf16 %v5200, %v5198
    %v5263 = vpack.c.bf16 %v5201, %v5199
    %v5264 = vld [vmem:[#allocation2] sm:$0xff]
    %v5265 = vld [vmem:[#allocation2 + $0x8] sm:$0xff]
    %v5266 = vld [vmem:[#allocation2 + $0x10] sm:$0xff]
    %v5267 = vld [vmem:[#allocation2 + $0x18] sm:$0xff]
    %v5268 = vld [vmem:[#allocation2 + $0x20] sm:$0xff]
    %v5269 = vld [vmem:[#allocation2 + $0x28] sm:$0xff]
    %v5270 = vld [vmem:[#allocation2 + $0x30] sm:$0xff]
    %v5271 = vld [vmem:[#allocation2 + $0x38] sm:$0xff]
    %v5272 = vld [vmem:[#allocation2 + $0x40] sm:$0xff]
    %v5273 = vld [vmem:[#allocation2 + $0x48] sm:$0xff]
    %v5274 = vld [vmem:[#allocation2 + $0x50] sm:$0xff]
    %v5275 = vld [vmem:[#allocation2 + $0x58] sm:$0xff]
    %v5276 = vld [vmem:[#allocation2 + $0x60] sm:$0xff]
    %v5277 = vld [vmem:[#allocation2 + $0x68] sm:$0xff]
    %v5278 = vld [vmem:[#allocation2 + $0x70] sm:$0xff]
    %v5279 = vld [vmem:[#allocation2 + $0x78] sm:$0xff]
    %v5280 = vld [vmem:[#allocation2 + $0x80] sm:$0xff]
    %v5281 = vld [vmem:[#allocation2 + $0x88] sm:$0xff]
    %v5282 = vld [vmem:[#allocation2 + $0x90] sm:$0xff]
    %v5283 = vld [vmem:[#allocation2 + $0x98] sm:$0xff]
    %v5284 = vld [vmem:[#allocation2 + $0xa0] sm:$0xff]
    %v5285 = vld [vmem:[#allocation2 + $0xa8] sm:$0xff]
    %v5286 = vld [vmem:[#allocation2 + $0xb0] sm:$0xff]
    %v5287 = vld [vmem:[#allocation2 + $0xb8] sm:$0xff]
    %v5288 = vld [vmem:[#allocation2 + $0xc0] sm:$0xff]
    %v5289 = vld [vmem:[#allocation2 + $0xc8] sm:$0xff]
    %v5290 = vld [vmem:[#allocation2 + $0xd0] sm:$0xff]
    %v5291 = vld [vmem:[#allocation2 + $0xd8] sm:$0xff]
    %v5292 = vld [vmem:[#allocation2 + $0xe0] sm:$0xff]
    %v5293 = vld [vmem:[#allocation2 + $0xe8] sm:$0xff]
    %v5294 = vld [vmem:[#allocation2 + $0xf0] sm:$0xff]
    %v5295 = vld [vmem:[#allocation2 + $0xf8] sm:$0xff]
    %v5296 = vld [vmem:[#allocation2 + $0x100] sm:$0xff]
    %v5297 = vld [vmem:[#allocation2 + $0x108] sm:$0xff]
    %v5298 = vld [vmem:[#allocation2 + $0x110] sm:$0xff]
    %v5299 = vld [vmem:[#allocation2 + $0x118] sm:$0xff]
    %v5300 = vld [vmem:[#allocation2 + $0x120] sm:$0xff]
    %v5301 = vld [vmem:[#allocation2 + $0x128] sm:$0xff]
    %v5302 = vld [vmem:[#allocation2 + $0x130] sm:$0xff]
    %v5303 = vld [vmem:[#allocation2 + $0x138] sm:$0xff]
    %v5304 = vld [vmem:[#allocation2 + $0x140] sm:$0xff]
    %v5305 = vld [vmem:[#allocation2 + $0x148] sm:$0xff]
    %v5306 = vld [vmem:[#allocation2 + $0x150] sm:$0xff]
    %v5307 = vld [vmem:[#allocation2 + $0x158] sm:$0xff]
    %v5308 = vld [vmem:[#allocation2 + $0x160] sm:$0xff]
    %v5309 = vld [vmem:[#allocation2 + $0x168] sm:$0xff]
    %v5310 = vld [vmem:[#allocation2 + $0x170] sm:$0xff]
    %v5311 = vld [vmem:[#allocation2 + $0x178] sm:$0xff]
    %v5312 = vld [vmem:[#allocation2 + $0x180] sm:$0xff]
    %v5313 = vld [vmem:[#allocation2 + $0x188] sm:$0xff]
    %v5314 = vld [vmem:[#allocation2 + $0x190] sm:$0xff]
    %v5315 = vld [vmem:[#allocation2 + $0x198] sm:$0xff]
    %v5316 = vld [vmem:[#allocation2 + $0x1a0] sm:$0xff]
    %v5317 = vld [vmem:[#allocation2 + $0x1a8] sm:$0xff]
    %v5318 = vld [vmem:[#allocation2 + $0x1b0] sm:$0xff]
    %v5319 = vld [vmem:[#allocation2 + $0x1b8] sm:$0xff]
    %v5320 = vld [vmem:[#allocation2 + $0x1c0] sm:$0xff]
    %v5321 = vld [vmem:[#allocation2 + $0x1c8] sm:$0xff]
    %v5322 = vld [vmem:[#allocation2 + $0x1d0] sm:$0xff]
    %v5323 = vld [vmem:[#allocation2 + $0x1d8] sm:$0xff]
    %v5324 = vld [vmem:[#allocation2 + $0x1e0] sm:$0xff]
    %v5325 = vld [vmem:[#allocation2 + $0x1e8] sm:$0xff]
    %v5326 = vld [vmem:[#allocation2 + $0x1f0] sm:$0xff]
    %v5327 = vld [vmem:[#allocation2 + $0x1f8] sm:$0xff]
    %5328 = vxpose.binary.xlu0.c.b16.start [1/16] %v5259, %v5258, 128
    %5329 = vxpose.binary.xlu0.c.b16.cont [2/16] %v5261, %v5260, 128
    %5330 = vxpose.binary.xlu0.c.b16.cont [3/16] 0, 0, 128
    %5331 = vxpose.binary.xlu0.c.b16.cont [4/16] 0, 0, 128
    %5332 = vxpose.binary.xlu0.c.b16.cont [5/16] 0, 0, 128
    %5333 = vxpose.binary.xlu0.c.b16.cont [6/16] 0, 0, 128
    %5334 = vxpose.binary.xlu0.c.b16.cont [7/16] 0, 0, 128
    %5335 = vxpose.binary.xlu0.c.b16.end [8/16] 0, 0, 128
    %v5336 = vpop.trf.xlu0
    %v5337 = vpop.trf.xlu0
    %v5338 = vpop.trf.xlu0
    %v5339 = vpop.trf.xlu0
    %v5340 = vpop.trf.xlu0
    %v5341 = vpop.trf.xlu0
    %v5342 = vpop.trf.xlu0
    %v5343 = vpop.trf.xlu0
    %v5344 = vpop.trf.xlu0
    %v5345 = vpop.trf.xlu0
    %v5346 = vpop.trf.xlu0
    %v5347 = vpop.trf.xlu0
    %v5348 = vpop.trf.xlu0
    %v5349 = vpop.trf.xlu0
    %v5350 = vpop.trf.xlu0
    %v5351 = vpop.trf.xlu0
    %vm5352 = vcmask 261120
    %v5354 = vsel %vm5352, %v5336, 0
    %v5357 = vsel %vm5352, %v5338, 0
    %v5360 = vsel %vm5352, %v5340, 0
    %v5363 = vsel %vm5352, %v5342, 0
    %v5366 = vsel %vm5352, %v5344, 0
    %v5369 = vsel %vm5352, %v5346, 0
    %v5372 = vsel %vm5352, %v5348, 0
    %v5375 = vsel %vm5352, %v5350, 0
    %v5378 = vsel %vm5352, %v5337, 0
    %v5381 = vsel %vm5352, %v5339, 0
    %v5384 = vsel %vm5352, %v5341, 0
    %v5387 = vsel %vm5352, %v5343, 0
    %v5390 = vsel %vm5352, %v5345, 0
    %v5393 = vsel %vm5352, %v5347, 0
    %v5396 = vsel %vm5352, %v5349, 0
    %v5399 = vsel %vm5352, %v5351, 0
    %5401 = vmatpush.bf16.msra.mxu0 0
    %5402 = vmatpush.bf16.msra.mxu0 0
    %5403 = vmatpush.bf16.msra.mxu0 0
    %5404 = vmatpush.bf16.msra.mxu0 0
    %5405 = vmatpush.bf16.msra.mxu0 0
    %5406 = vmatpush.bf16.msra.mxu0 0
    %5407 = vmatpush.bf16.msra.mxu0 %v5262
    %5408 = vmatpush.bf16.msra.mxu0 %v5258
    %5409 = vmatmul.bf16.gmra.mxu0 %v5354
    %v5410 = vpop.f32.mrf.mxu0
    %v5411 = vadd.f32 0.0, %v5410
    %v5412 = vpop.f32.mrf.mxu0
    %v5413 = vadd.f32 0.0, %v5412
    %5414 = vmatmul.bf16.gmra.mxu0 %v5357
    %v5415 = vpop.f32.mrf.mxu0
    %v5416 = vadd.f32 0.0, %v5415
    %v5417 = vpop.f32.mrf.mxu0
    %v5418 = vadd.f32 0.0, %v5417
    %5419 = vmatmul.bf16.gmra.mxu0 %v5360
    %v5420 = vpop.f32.mrf.mxu0
    %v5421 = vadd.f32 0.0, %v5420
    %v5422 = vpop.f32.mrf.mxu0
    %v5423 = vadd.f32 0.0, %v5422
    %5424 = vmatmul.bf16.gmra.mxu0 %v5363
    %v5425 = vpop.f32.mrf.mxu0
    %v5426 = vadd.f32 0.0, %v5425
    %v5427 = vpop.f32.mrf.mxu0
    %v5428 = vadd.f32 0.0, %v5427
    %5429 = vmatmul.bf16.gmra.mxu0 %v5366
    %v5430 = vpop.f32.mrf.mxu0
    %v5431 = vadd.f32 0.0, %v5430
    %v5432 = vpop.f32.mrf.mxu0
    %v5433 = vadd.f32 0.0, %v5432
    %5434 = vmatmul.bf16.gmra.mxu0 %v5369
    %v5435 = vpop.f32.mrf.mxu0
    %v5436 = vadd.f32 0.0, %v5435
    %v5437 = vpop.f32.mrf.mxu0
    %v5438 = vadd.f32 0.0, %v5437
    %5439 = vmatmul.bf16.gmra.mxu0 %v5372
    %v5440 = vpop.f32.mrf.mxu0
    %v5441 = vadd.f32 0.0, %v5440
    %v5442 = vpop.f32.mrf.mxu0
    %v5443 = vadd.f32 0.0, %v5442
    %5444 = vmatmul.bf16.gmra.mxu0 %v5375
    %v5445 = vpop.f32.mrf.mxu0
    %v5446 = vadd.f32 0.0, %v5445
    %v5447 = vpop.f32.mrf.mxu0
    %v5448 = vadd.f32 0.0, %v5447
    %5449 = vmatmul.bf16.gmra.mxu0 %v5378
    %v5450 = vpop.f32.mrf.mxu0
    %v5451 = vadd.f32 0.0, %v5450
    %v5452 = vpop.f32.mrf.mxu0
    %v5453 = vadd.f32 0.0, %v5452
    %5454 = vmatmul.bf16.gmra.mxu0 %v5381
    %v5455 = vpop.f32.mrf.mxu0
    %v5456 = vadd.f32 0.0, %v5455
    %v5457 = vpop.f32.mrf.mxu0
    %v5458 = vadd.f32 0.0, %v5457
    %5459 = vmatmul.bf16.gmra.mxu0 %v5384
    %v5460 = vpop.f32.mrf.mxu0
    %v5461 = vadd.f32 0.0, %v5460
    %v5462 = vpop.f32.mrf.mxu0
    %v5463 = vadd.f32 0.0, %v5462
    %5464 = vmatmul.bf16.gmra.mxu0 %v5387
    %v5465 = vpop.f32.mrf.mxu0
    %v5466 = vadd.f32 0.0, %v5465
    %v5467 = vpop.f32.mrf.mxu0
    %v5468 = vadd.f32 0.0, %v5467
    %5469 = vmatmul.bf16.gmra.mxu0 %v5390
    %v5470 = vpop.f32.mrf.mxu0
    %v5471 = vadd.f32 0.0, %v5470
    %v5472 = vpop.f32.mrf.mxu0
    %v5473 = vadd.f32 0.0, %v5472
    %5474 = vmatmul.bf16.gmra.mxu0 %v5393
    %v5475 = vpop.f32.mrf.mxu0
    %v5476 = vadd.f32 0.0, %v5475
    %v5477 = vpop.f32.mrf.mxu0
    %v5478 = vadd.f32 0.0, %v5477
    %5479 = vmatmul.bf16.gmra.mxu0 %v5396
    %v5480 = vpop.f32.mrf.mxu0
    %v5481 = vadd.f32 0.0, %v5480
    %v5482 = vpop.f32.mrf.mxu0
    %v5483 = vadd.f32 0.0, %v5482
    %5484 = vmatmul.bf16.gmra.mxu0 %v5399
    %v5485 = vpop.f32.mrf.mxu0
    %v5486 = vadd.f32 0.0, %v5485
    %v5487 = vpop.f32.mrf.mxu0
    %v5488 = vadd.f32 0.0, %v5487
    %5489 = vdwg.mxu0
    %5490 = vmatpush.bf16.msra.mxu0 0
    %5491 = vmatpush.bf16.msra.mxu0 0
    %5492 = vmatpush.bf16.msra.mxu0 0
    %5493 = vmatpush.bf16.msra.mxu0 0
    %5494 = vmatpush.bf16.msra.mxu0 0
    %5495 = vmatpush.bf16.msra.mxu0 0
    %5496 = vmatpush.bf16.msra.mxu0 %v5263
    %5497 = vmatpush.bf16.msra.mxu0 %v5259
    %5498 = vmatmul.bf16.gmra.mxu0 %v5354
    %v5499 = vpop.f32.mrf.mxu0
    %v5500 = vadd.f32 0.0, %v5499
    %v5501 = vpop.f32.mrf.mxu0
    %v5502 = vadd.f32 0.0, %v5501
    %5503 = vmatmul.bf16.gmra.mxu0 %v5357
    %v5504 = vpop.f32.mrf.mxu0
    %v5505 = vadd.f32 0.0, %v5504
    %v5506 = vpop.f32.mrf.mxu0
    %v5507 = vadd.f32 0.0, %v5506
    %5508 = vmatmul.bf16.gmra.mxu0 %v5360
    %v5509 = vpop.f32.mrf.mxu0
    %v5510 = vadd.f32 0.0, %v5509
    %v5511 = vpop.f32.mrf.mxu0
    %v5512 = vadd.f32 0.0, %v5511
    %5513 = vmatmul.bf16.gmra.mxu0 %v5363
    %v5514 = vpop.f32.mrf.mxu0
    %v5515 = vadd.f32 0.0, %v5514
    %v5516 = vpop.f32.mrf.mxu0
    %v5517 = vadd.f32 0.0, %v5516
    %5518 = vmatmul.bf16.gmra.mxu0 %v5366
    %v5519 = vpop.f32.mrf.mxu0
    %v5520 = vadd.f32 0.0, %v5519
    %v5521 = vpop.f32.mrf.mxu0
    %v5522 = vadd.f32 0.0, %v5521
    %5523 = vmatmul.bf16.gmra.mxu0 %v5369
    %v5524 = vpop.f32.mrf.mxu0
    %v5525 = vadd.f32 0.0, %v5524
    %v5526 = vpop.f32.mrf.mxu0
    %v5527 = vadd.f32 0.0, %v5526
    %5528 = vmatmul.bf16.gmra.mxu0 %v5372
    %v5529 = vpop.f32.mrf.mxu0
    %v5530 = vadd.f32 0.0, %v5529
    %v5531 = vpop.f32.mrf.mxu0
    %v5532 = vadd.f32 0.0, %v5531
    %5533 = vmatmul.bf16.gmra.mxu0 %v5375
    %v5534 = vpop.f32.mrf.mxu0
    %v5535 = vadd.f32 0.0, %v5534
    %v5536 = vpop.f32.mrf.mxu0
    %v5537 = vadd.f32 0.0, %v5536
    %5538 = vmatmul.bf16.gmra.mxu0 %v5378
    %v5539 = vpop.f32.mrf.mxu0
    %v5540 = vadd.f32 0.0, %v5539
    %v5541 = vpop.f32.mrf.mxu0
    %v5542 = vadd.f32 0.0, %v5541
    %5543 = vmatmul.bf16.gmra.mxu0 %v5381
    %v5544 = vpop.f32.mrf.mxu0
    %v5545 = vadd.f32 0.0, %v5544
    %v5546 = vpop.f32.mrf.mxu0
    %v5547 = vadd.f32 0.0, %v5546
    %5548 = vmatmul.bf16.gmra.mxu0 %v5384
    %v5549 = vpop.f32.mrf.mxu0
    %v5550 = vadd.f32 0.0, %v5549
    %v5551 = vpop.f32.mrf.mxu0
    %v5552 = vadd.f32 0.0, %v5551
    %5553 = vmatmul.bf16.gmra.mxu0 %v5387
    %v5554 = vpop.f32.mrf.mxu0
    %v5555 = vadd.f32 0.0, %v5554
    %v5556 = vpop.f32.mrf.mxu0
    %v5557 = vadd.f32 0.0, %v5556
    %5558 = vmatmul.bf16.gmra.mxu0 %v5390
    %v5559 = vpop.f32.mrf.mxu0
    %v5560 = vadd.f32 0.0, %v5559
    %v5561 = vpop.f32.mrf.mxu0
    %v5562 = vadd.f32 0.0, %v5561
    %5563 = vmatmul.bf16.gmra.mxu0 %v5393
    %v5564 = vpop.f32.mrf.mxu0
    %v5565 = vadd.f32 0.0, %v5564
    %v5566 = vpop.f32.mrf.mxu0
    %v5567 = vadd.f32 0.0, %v5566
    %5568 = vmatmul.bf16.gmra.mxu0 %v5396
    %v5569 = vpop.f32.mrf.mxu0
    %v5570 = vadd.f32 0.0, %v5569
    %v5571 = vpop.f32.mrf.mxu0
    %v5572 = vadd.f32 0.0, %v5571
    %5573 = vmatmul.bf16.gmra.mxu0 %v5399
    %v5574 = vpop.f32.mrf.mxu0
    %v5575 = vadd.f32 0.0, %v5574
    %v5576 = vpop.f32.mrf.mxu0
    %v5577 = vadd.f32 0.0, %v5576
    %5578 = vdwg.mxu0
    %v5579 = vadd.f32 %v5264, %v5411
    %v5580 = vadd.f32 %v5265, %v5500
    %v5581 = vadd.f32 %v5266, %v5413
    %v5582 = vadd.f32 %v5267, %v5502
    %v5583 = vadd.f32 %v5268, %v5416
    %v5584 = vadd.f32 %v5269, %v5505
    %v5585 = vadd.f32 %v5270, %v5418
    %v5586 = vadd.f32 %v5271, %v5507
    %v5587 = vadd.f32 %v5272, %v5421
    %v5588 = vadd.f32 %v5273, %v5510
    %v5589 = vadd.f32 %v5274, %v5423
    %v5590 = vadd.f32 %v5275, %v5512
    %v5591 = vadd.f32 %v5276, %v5426
    %v5592 = vadd.f32 %v5277, %v5515
    %v5593 = vadd.f32 %v5278, %v5428
    %v5594 = vadd.f32 %v5279, %v5517
    %v5595 = vadd.f32 %v5280, %v5431
    %v5596 = vadd.f32 %v5281, %v5520
    %v5597 = vadd.f32 %v5282, %v5433
    %v5598 = vadd.f32 %v5283, %v5522
    %v5599 = vadd.f32 %v5284, %v5436
    %v5600 = vadd.f32 %v5285, %v5525
    %v5601 = vadd.f32 %v5286, %v5438
    %v5602 = vadd.f32 %v5287, %v5527
    %v5603 = vadd.f32 %v5288, %v5441
    %v5604 = vadd.f32 %v5289, %v5530
    %v5605 = vadd.f32 %v5290, %v5443
    %v5606 = vadd.f32 %v5291, %v5532
    %v5607 = vadd.f32 %v5292, %v5446
    %v5608 = vadd.f32 %v5293, %v5535
    %v5609 = vadd.f32 %v5294, %v5448
    %v5610 = vadd.f32 %v5295, %v5537
    %v5611 = vadd.f32 %v5296, %v5451
    %v5612 = vadd.f32 %v5297, %v5540
    %v5613 = vadd.f32 %v5298, %v5453
    %v5614 = vadd.f32 %v5299, %v5542
    %v5615 = vadd.f32 %v5300, %v5456
    %v5616 = vadd.f32 %v5301, %v5545
    %v5617 = vadd.f32 %v5302, %v5458
    %v5618 = vadd.f32 %v5303, %v5547
    %v5619 = vadd.f32 %v5304, %v5461
    %v5620 = vadd.f32 %v5305, %v5550
    %v5621 = vadd.f32 %v5306, %v5463
    %v5622 = vadd.f32 %v5307, %v5552
    %v5623 = vadd.f32 %v5308, %v5466
    %v5624 = vadd.f32 %v5309, %v5555
    %v5625 = vadd.f32 %v5310, %v5468
    %v5626 = vadd.f32 %v5311, %v5557
    %v5627 = vadd.f32 %v5312, %v5471
    %v5628 = vadd.f32 %v5313, %v5560
    %v5629 = vadd.f32 %v5314, %v5473
    %v5630 = vadd.f32 %v5315, %v5562
    %v5631 = vadd.f32 %v5316, %v5476
    %v5632 = vadd.f32 %v5317, %v5565
    %v5633 = vadd.f32 %v5318, %v5478
    %v5634 = vadd.f32 %v5319, %v5567
    %v5635 = vadd.f32 %v5320, %v5481
    %v5636 = vadd.f32 %v5321, %v5570
    %v5637 = vadd.f32 %v5322, %v5483
    %v5638 = vadd.f32 %v5323, %v5572
    %v5639 = vadd.f32 %v5324, %v5486
    %v5640 = vadd.f32 %v5325, %v5575
    %v5641 = vadd.f32 %v5326, %v5488
    %v5642 = vadd.f32 %v5327, %v5577
    %5643 = vst [vmem:[#allocation2] sm:$0xff] %v5579
    %5644 = vst [vmem:[#allocation2 + $0x8] sm:$0xff] %v5580
    %5645 = vst [vmem:[#allocation2 + $0x10] sm:$0xff] %v5581
    %5646 = vst [vmem:[#allocation2 + $0x18] sm:$0xff] %v5582
    %5647 = vst [vmem:[#allocation2 + $0x20] sm:$0xff] %v5583
    %5648 = vst [vmem:[#allocation2 + $0x28] sm:$0xff] %v5584
    %5649 = vst [vmem:[#allocation2 + $0x30] sm:$0xff] %v5585
    %5650 = vst [vmem:[#allocation2 + $0x38] sm:$0xff] %v5586
    %5651 = vst [vmem:[#allocation2 + $0x40] sm:$0xff] %v5587
    %5652 = vst [vmem:[#allocation2 + $0x48] sm:$0xff] %v5588
    %5653 = vst [vmem:[#allocation2 + $0x50] sm:$0xff] %v5589
    %5654 = vst [vmem:[#allocation2 + $0x58] sm:$0xff] %v5590
    %5655 = vst [vmem:[#allocation2 + $0x60] sm:$0xff] %v5591
    %5656 = vst [vmem:[#allocation2 + $0x68] sm:$0xff] %v5592
    %5657 = vst [vmem:[#allocation2 + $0x70] sm:$0xff] %v5593
    %5658 = vst [vmem:[#allocation2 + $0x78] sm:$0xff] %v5594
    %5659 = vst [vmem:[#allocation2 + $0x80] sm:$0xff] %v5595
    %5660 = vst [vmem:[#allocation2 + $0x88] sm:$0xff] %v5596
    %5661 = vst [vmem:[#allocation2 + $0x90] sm:$0xff] %v5597
    %5662 = vst [vmem:[#allocation2 + $0x98] sm:$0xff] %v5598
    %5663 = vst [vmem:[#allocation2 + $0xa0] sm:$0xff] %v5599
    %5664 = vst [vmem:[#allocation2 + $0xa8] sm:$0xff] %v5600
    %5665 = vst [vmem:[#allocation2 + $0xb0] sm:$0xff] %v5601
    %5666 = vst [vmem:[#allocation2 + $0xb8] sm:$0xff] %v5602
    %5667 = vst [vmem:[#allocation2 + $0xc0] sm:$0xff] %v5603
    %5668 = vst [vmem:[#allocation2 + $0xc8] sm:$0xff] %v5604
    %5669 = vst [vmem:[#allocation2 + $0xd0] sm:$0xff] %v5605
    %5670 = vst [vmem:[#allocation2 + $0xd8] sm:$0xff] %v5606
    %5671 = vst [vmem:[#allocation2 + $0xe0] sm:$0xff] %v5607
    %5672 = vst [vmem:[#allocation2 + $0xe8] sm:$0xff] %v5608
    %5673 = vst [vmem:[#allocation2 + $0xf0] sm:$0xff] %v5609
    %5674 = vst [vmem:[#allocation2 + $0xf8] sm:$0xff] %v5610
    %5675 = vst [vmem:[#allocation2 + $0x100] sm:$0xff] %v5611
    %5676 = vst [vmem:[#allocation2 + $0x108] sm:$0xff] %v5612
    %5677 = vst [vmem:[#allocation2 + $0x110] sm:$0xff] %v5613
    %5678 = vst [vmem:[#allocation2 + $0x118] sm:$0xff] %v5614
    %5679 = vst [vmem:[#allocation2 + $0x120] sm:$0xff] %v5615
    %5680 = vst [vmem:[#allocation2 + $0x128] sm:$0xff] %v5616
    %5681 = vst [vmem:[#allocation2 + $0x130] sm:$0xff] %v5617
    %5682 = vst [vmem:[#allocation2 + $0x138] sm:$0xff] %v5618
    %5683 = vst [vmem:[#allocation2 + $0x140] sm:$0xff] %v5619
    %5684 = vst [vmem:[#allocation2 + $0x148] sm:$0xff] %v5620
    %5685 = vst [vmem:[#allocation2 + $0x150] sm:$0xff] %v5621
    %5686 = vst [vmem:[#allocation2 + $0x158] sm:$0xff] %v5622
    %5687 = vst [vmem:[#allocation2 + $0x160] sm:$0xff] %v5623
    %5688 = vst [vmem:[#allocation2 + $0x168] sm:$0xff] %v5624
    %5689 = vst [vmem:[#allocation2 + $0x170] sm:$0xff] %v5625
    %5690 = vst [vmem:[#allocation2 + $0x178] sm:$0xff] %v5626
    %5691 = vst [vmem:[#allocation2 + $0x180] sm:$0xff] %v5627
    %5692 = vst [vmem:[#allocation2 + $0x188] sm:$0xff] %v5628
    %5693 = vst [vmem:[#allocation2 + $0x190] sm:$0xff] %v5629
    %5694 = vst [vmem:[#allocation2 + $0x198] sm:$0xff] %v5630
    %5695 = vst [vmem:[#allocation2 + $0x1a0] sm:$0xff] %v5631
    %5696 = vst [vmem:[#allocation2 + $0x1a8] sm:$0xff] %v5632
    %5697 = vst [vmem:[#allocation2 + $0x1b0] sm:$0xff] %v5633
    %5698 = vst [vmem:[#allocation2 + $0x1b8] sm:$0xff] %v5634
    %5699 = vst [vmem:[#allocation2 + $0x1c0] sm:$0xff] %v5635
    %5700 = vst [vmem:[#allocation2 + $0x1c8] sm:$0xff] %v5636
    %5701 = vst [vmem:[#allocation2 + $0x1d0] sm:$0xff] %v5637
    %5702 = vst [vmem:[#allocation2 + $0x1d8] sm:$0xff] %v5638
    %5703 = vst [vmem:[#allocation2 + $0x1e0] sm:$0xff] %v5639
    %5704 = vst [vmem:[#allocation2 + $0x1e8] sm:$0xff] %v5640
    %5705 = vst [vmem:[#allocation2 + $0x1f0] sm:$0xff] %v5641
    %5706 = vst [vmem:[#allocation2 + $0x1f8] sm:$0xff] %v5642
    // Predicated region
    $region46: #{_lambda_.1} parent=1 // pred_check
      %p5707 = pneg %p5106
    $region47: #{_lambda_.1} parent=1 // pred_check_branch
      %5709 = sbr.rel (%p5707) target = $region49
    $region48: #{_lambda_.1} parent=1 // pred_region
      %v5710 = vld [vmem:[#allocation3] sm:$0x3]
      %v5711 = vld [vmem:[#allocation4] sm:$0x3]
      %v5713 = vperm.slane %v5710, 0
      %v5714 = vperm.slane %v5710, 1
      %5717 = vxpose.xlu0.b32.start [1/16] %v5713, 128
      %5718 = vxpose.xlu0.b32.cont [2/16] 0.0, 128
      %5719 = vxpose.xlu0.b32.cont [3/16] 0.0, 128
      %5720 = vxpose.xlu0.b32.cont [4/16] 0.0, 128
      %5721 = vxpose.xlu0.b32.cont [5/16] 0.0, 128
      %5722 = vxpose.xlu0.b32.cont [6/16] 0.0, 128
      %5723 = vxpose.xlu0.b32.cont [7/16] 0.0, 128
      %5724 = vxpose.xlu0.b32.cont [8/16] 0.0, 128
      %5725 = vxpose.xlu0.b32.cont [9/16] 0.0, 128
      %5726 = vxpose.xlu0.b32.cont [10/16] 0.0, 128
      %5727 = vxpose.xlu0.b32.cont [11/16] 0.0, 128
      %5728 = vxpose.xlu0.b32.cont [12/16] 0.0, 128
      %5729 = vxpose.xlu0.b32.cont [13/16] 0.0, 128
      %5730 = vxpose.xlu0.b32.cont [14/16] 0.0, 128
      %5731 = vxpose.xlu0.b32.cont [15/16] 0.0, 128
      %5732 = vxpose.xlu0.b32.end [16/16] 0.0, 128
      %v5733 = vpop.trf.xlu0
      %v5734 = vpop.trf.xlu0
      %v5735 = vpop.trf.xlu0
      %v5736 = vpop.trf.xlu0
      %v5737 = vpop.trf.xlu0
      %v5738 = vpop.trf.xlu0
      %v5739 = vpop.trf.xlu0
      %v5740 = vpop.trf.xlu0
      %v5741 = vpop.trf.xlu0
      %v5742 = vpop.trf.xlu0
      %v5743 = vpop.trf.xlu0
      %v5744 = vpop.trf.xlu0
      %v5745 = vpop.trf.xlu0
      %v5746 = vpop.trf.xlu0
      %v5747 = vpop.trf.xlu0
      %v5748 = vpop.trf.xlu0
      %5749 = vxpose.xlu0.b32.start [1/16] %v5714, 128
      %5750 = vxpose.xlu0.b32.cont [2/16] 0.0, 128
      %5751 = vxpose.xlu0.b32.cont [3/16] 0.0, 128
      %5752 = vxpose.xlu0.b32.cont [4/16] 0.0, 128
      %5753 = vxpose.xlu0.b32.cont [5/16] 0.0, 128
      %5754 = vxpose.xlu0.b32.cont [6/16] 0.0, 128
      %5755 = vxpose.xlu0.b32.cont [7/16] 0.0, 128
      %5756 = vxpose.xlu0.b32.cont [8/16] 0.0, 128
      %5757 = vxpose.xlu0.b32.cont [9/16] 0.0, 128
      %5758 = vxpose.xlu0.b32.cont [10/16] 0.0, 128
      %5759 = vxpose.xlu0.b32.cont [11/16] 0.0, 128
      %5760 = vxpose.xlu0.b32.cont [12/16] 0.0, 128
      %5761 = vxpose.xlu0.b32.cont [13/16] 0.0, 128
      %5762 = vxpose.xlu0.b32.cont [14/16] 0.0, 128
      %5763 = vxpose.xlu0.b32.cont [15/16] 0.0, 128
      %5764 = vxpose.xlu0.b32.end [16/16] 0.0, 128
      %v5765 = vpop.trf.xlu0
      %v5766 = vpop.trf.xlu0
      %v5767 = vpop.trf.xlu0
      %v5768 = vpop.trf.xlu0
      %v5769 = vpop.trf.xlu0
      %v5770 = vpop.trf.xlu0
      %v5771 = vpop.trf.xlu0
      %v5772 = vpop.trf.xlu0
      %v5773 = vpop.trf.xlu0
      %v5774 = vpop.trf.xlu0
      %v5775 = vpop.trf.xlu0
      %v5776 = vpop.trf.xlu0
      %v5777 = vpop.trf.xlu0
      %v5778 = vpop.trf.xlu0
      %v5779 = vpop.trf.xlu0
      %v5780 = vpop.trf.xlu0
      %vm5781 = vcmask 7168
      %v5783 = vsel %vm5781, %v5733, 0
      %v5786 = vsel %vm5781, %v5734, 0
      %v5789 = vsel %vm5781, %v5735, 0
      %v5792 = vsel %vm5781, %v5736, 0
      %v5795 = vsel %vm5781, %v5737, 0
      %v5798 = vsel %vm5781, %v5738, 0
      %v5801 = vsel %vm5781, %v5739, 0
      %v5804 = vsel %vm5781, %v5740, 0
      %v5807 = vsel %vm5781, %v5741, 0
      %v5810 = vsel %vm5781, %v5742, 0
      %v5813 = vsel %vm5781, %v5743, 0
      %v5816 = vsel %vm5781, %v5744, 0
      %v5819 = vsel %vm5781, %v5745, 0
      %v5822 = vsel %vm5781, %v5746, 0
      %v5825 = vsel %vm5781, %v5747, 0
      %v5828 = vsel %vm5781, %v5748, 0
      %v5831 = vsel %vm5781, %v5765, 0
      %v5834 = vsel %vm5781, %v5766, 0
      %v5837 = vsel %vm5781, %v5767, 0
      %v5840 = vsel %vm5781, %v5768, 0
      %v5843 = vsel %vm5781, %v5769, 0
      %v5846 = vsel %vm5781, %v5770, 0
      %v5849 = vsel %vm5781, %v5771, 0
      %v5852 = vsel %vm5781, %v5772, 0
      %v5855 = vsel %vm5781, %v5773, 0
      %v5858 = vsel %vm5781, %v5774, 0
      %v5861 = vsel %vm5781, %v5775, 0
      %v5864 = vsel %vm5781, %v5776, 0
      %v5867 = vsel %vm5781, %v5777, 0
      %v5870 = vsel %vm5781, %v5778, 0
      %v5873 = vsel %vm5781, %v5779, 0
      %v5876 = vsel %vm5781, %v5780, 0
      %v5878 = vsel %vm5220, %v5713, 0
      %v5880 = vsel %vm5220, %v5714, 0
      %5882 = vmatpush.msra.mxu0 0.0
      %5883 = vmatpush.msra.mxu0 0.0
      %5884 = vmatpush.msra.mxu0 0.0
      %5885 = vmatpush.msra.mxu0 0.0
      %5886 = vmatpush.msra.mxu0 0.0
      %5887 = vmatpush.msra.mxu0 0.0
      %5888 = vmatpush.msra.mxu0 0.0
      %5889 = vmatpush.msra.mxu0 0.0
      %5890 = vmatpush.msra.mxu0 0.0
      %5891 = vmatpush.msra.mxu0 0.0
      %5892 = vmatpush.msra.mxu0 0.0
      %5893 = vmatpush.msra.mxu0 0.0
      %5894 = vmatpush.msra.mxu0 0.0
      %5895 = vmatpush.msra.mxu0 0.0
      %5896 = vmatpush.msra.mxu0 0.0
      %5897 = vmatpush.msra.mxu0 %v5878
      %5898 = vmatmul.f32.gmra.mxu0 %v5783
      %v5899 = vpop.f32.mrf.mxu0
      %v5900 = vadd.f32 0.0, %v5899
      %5901 = vmatmul.f32.gmra.mxu0 %v5786
      %v5902 = vpop.f32.mrf.mxu0
      %v5903 = vadd.f32 0.0, %v5902
      %5904 = vmatmul.f32.gmra.mxu0 %v5789
      %v5905 = vpop.f32.mrf.mxu0
      %v5906 = vadd.f32 0.0, %v5905
      %5907 = vmatmul.f32.gmra.mxu0 %v5792
      %v5908 = vpop.f32.mrf.mxu0
      %v5909 = vadd.f32 0.0, %v5908
      %5910 = vmatmul.f32.gmra.mxu0 %v5795
      %v5911 = vpop.f32.mrf.mxu0
      %v5912 = vadd.f32 0.0, %v5911
      %5913 = vmatmul.f32.gmra.mxu0 %v5798
      %v5914 = vpop.f32.mrf.mxu0
      %v5915 = vadd.f32 0.0, %v5914
      %5916 = vmatmul.f32.gmra.mxu0 %v5801
      %v5917 = vpop.f32.mrf.mxu0
      %v5918 = vadd.f32 0.0, %v5917
      %5919 = vmatmul.f32.gmra.mxu0 %v5804
      %v5920 = vpop.f32.mrf.mxu0
      %v5921 = vadd.f32 0.0, %v5920
      %5922 = vmatmul.f32.gmra.mxu0 %v5807
      %v5923 = vpop.f32.mrf.mxu0
      %v5924 = vadd.f32 0.0, %v5923
      %5925 = vmatmul.f32.gmra.mxu0 %v5810
      %v5926 = vpop.f32.mrf.mxu0
      %v5927 = vadd.f32 0.0, %v5926
      %5928 = vmatmul.f32.gmra.mxu0 %v5813
      %v5929 = vpop.f32.mrf.mxu0
      %v5930 = vadd.f32 0.0, %v5929
      %5931 = vmatmul.f32.gmra.mxu0 %v5816
      %v5932 = vpop.f32.mrf.mxu0
      %v5933 = vadd.f32 0.0, %v5932
      %5934 = vmatmul.f32.gmra.mxu0 %v5819
      %v5935 = vpop.f32.mrf.mxu0
      %v5936 = vadd.f32 0.0, %v5935
      %5937 = vmatmul.f32.gmra.mxu0 %v5822
      %v5938 = vpop.f32.mrf.mxu0
      %v5939 = vadd.f32 0.0, %v5938
      %5940 = vmatmul.f32.gmra.mxu0 %v5825
      %v5941 = vpop.f32.mrf.mxu0
      %v5942 = vadd.f32 0.0, %v5941
      %5943 = vmatmul.f32.gmra.mxu0 %v5828
      %v5944 = vpop.f32.mrf.mxu0
      %v5945 = vadd.f32 0.0, %v5944
      %5946 = vmatmul.f32.gmra.mxu0 %v5831
      %v5947 = vpop.f32.mrf.mxu0
      %v5948 = vadd.f32 0.0, %v5947
      %5949 = vmatmul.f32.gmra.mxu0 %v5834
      %v5950 = vpop.f32.mrf.mxu0
      %v5951 = vadd.f32 0.0, %v5950
      %5952 = vmatmul.f32.gmra.mxu0 %v5837
      %v5953 = vpop.f32.mrf.mxu0
      %v5954 = vadd.f32 0.0, %v5953
      %5955 = vmatmul.f32.gmra.mxu0 %v5840
      %v5956 = vpop.f32.mrf.mxu0
      %v5957 = vadd.f32 0.0, %v5956
      %5958 = vmatmul.f32.gmra.mxu0 %v5843
      %v5959 = vpop.f32.mrf.mxu0
      %v5960 = vadd.f32 0.0, %v5959
      %5961 = vmatmul.f32.gmra.mxu0 %v5846
      %v5962 = vpop.f32.mrf.mxu0
      %v5963 = vadd.f32 0.0, %v5962
      %5964 = vmatmul.f32.gmra.mxu0 %v5849
      %v5965 = vpop.f32.mrf.mxu0
      %v5966 = vadd.f32 0.0, %v5965
      %5967 = vmatmul.f32.gmra.mxu0 %v5852
      %v5968 = vpop.f32.mrf.mxu0
      %v5969 = vadd.f32 0.0, %v5968
      %5970 = vmatmul.f32.gmra.mxu0 %v5855
      %v5971 = vpop.f32.mrf.mxu0
      %v5972 = vadd.f32 0.0, %v5971
      %5973 = vmatmul.f32.gmra.mxu0 %v5858
      %v5974 = vpop.f32.mrf.mxu0
      %v5975 = vadd.f32 0.0, %v5974
      %5976 = vmatmul.f32.gmra.mxu0 %v5861
      %v5977 = vpop.f32.mrf.mxu0
      %v5978 = vadd.f32 0.0, %v5977
      %5979 = vmatmul.f32.gmra.mxu0 %v5864
      %v5980 = vpop.f32.mrf.mxu0
      %v5981 = vadd.f32 0.0, %v5980
      %5982 = vmatmul.f32.gmra.mxu0 %v5867
      %v5983 = vpop.f32.mrf.mxu0
      %v5984 = vadd.f32 0.0, %v5983
      %5985 = vmatmul.f32.gmra.mxu0 %v5870
      %v5986 = vpop.f32.mrf.mxu0
      %v5987 = vadd.f32 0.0, %v5986
      %5988 = vmatmul.f32.gmra.mxu0 %v5873
      %v5989 = vpop.f32.mrf.mxu0
      %v5990 = vadd.f32 0.0, %v5989
      %5991 = vmatmul.f32.gmra.mxu0 %v5876
      %v5992 = vpop.f32.mrf.mxu0
      %v5993 = vadd.f32 0.0, %v5992
      %5994 = vdwg.mxu0
      %5995 = vmatpush.msra.mxu0 0.0
      %5996 = vmatpush.msra.mxu0 0.0
      %5997 = vmatpush.msra.mxu0 0.0
      %5998 = vmatpush.msra.mxu0 0.0
      %5999 = vmatpush.msra.mxu0 0.0
      %6000 = vmatpush.msra.mxu0 0.0
      %6001 = vmatpush.msra.mxu0 0.0
      %6002 = vmatpush.msra.mxu0 0.0
      %6003 = vmatpush.msra.mxu0 0.0
      %6004 = vmatpush.msra.mxu0 0.0
      %6005 = vmatpush.msra.mxu0 0.0
      %6006 = vmatpush.msra.mxu0 0.0
      %6007 = vmatpush.msra.mxu0 0.0
      %6008 = vmatpush.msra.mxu0 0.0
      %6009 = vmatpush.msra.mxu0 0.0
      %6010 = vmatpush.msra.mxu0 %v5880
      %6011 = vmatmul.f32.gmra.mxu0 %v5783
      %v6012 = vpop.f32.mrf.mxu0
      %v6013 = vadd.f32 0.0, %v6012
      %6014 = vmatmul.f32.gmra.mxu0 %v5786
      %v6015 = vpop.f32.mrf.mxu0
      %v6016 = vadd.f32 0.0, %v6015
      %6017 = vmatmul.f32.gmra.mxu0 %v5789
      %v6018 = vpop.f32.mrf.mxu0
      %v6019 = vadd.f32 0.0, %v6018
      %6020 = vmatmul.f32.gmra.mxu0 %v5792
      %v6021 = vpop.f32.mrf.mxu0
      %v6022 = vadd.f32 0.0, %v6021
      %6023 = vmatmul.f32.gmra.mxu0 %v5795
      %v6024 = vpop.f32.mrf.mxu0
      %v6025 = vadd.f32 0.0, %v6024
      %6026 = vmatmul.f32.gmra.mxu0 %v5798
      %v6027 = vpop.f32.mrf.mxu0
      %v6028 = vadd.f32 0.0, %v6027
      %6029 = vmatmul.f32.gmra.mxu0 %v5801
      %v6030 = vpop.f32.mrf.mxu0
      %v6031 = vadd.f32 0.0, %v6030
      %6032 = vmatmul.f32.gmra.mxu0 %v5804
      %v6033 = vpop.f32.mrf.mxu0
      %v6034 = vadd.f32 0.0, %v6033
      %6035 = vmatmul.f32.gmra.mxu0 %v5807
      %v6036 = vpop.f32.mrf.mxu0
      %v6037 = vadd.f32 0.0, %v6036
      %6038 = vmatmul.f32.gmra.mxu0 %v5810
      %v6039 = vpop.f32.mrf.mxu0
      %v6040 = vadd.f32 0.0, %v6039
      %6041 = vmatmul.f32.gmra.mxu0 %v5813
      %v6042 = vpop.f32.mrf.mxu0
      %v6043 = vadd.f32 0.0, %v6042
      %6044 = vmatmul.f32.gmra.mxu0 %v5816
      %v6045 = vpop.f32.mrf.mxu0
      %v6046 = vadd.f32 0.0, %v6045
      %6047 = vmatmul.f32.gmra.mxu0 %v5819
      %v6048 = vpop.f32.mrf.mxu0
      %v6049 = vadd.f32 0.0, %v6048
      %6050 = vmatmul.f32.gmra.mxu0 %v5822
      %v6051 = vpop.f32.mrf.mxu0
      %v6052 = vadd.f32 0.0, %v6051
      %6053 = vmatmul.f32.gmra.mxu0 %v5825
      %v6054 = vpop.f32.mrf.mxu0
      %v6055 = vadd.f32 0.0, %v6054
      %6056 = vmatmul.f32.gmra.mxu0 %v5828
      %v6057 = vpop.f32.mrf.mxu0
      %v6058 = vadd.f32 0.0, %v6057
      %6059 = vmatmul.f32.gmra.mxu0 %v5831
      %v6060 = vpop.f32.mrf.mxu0
      %v6061 = vadd.f32 0.0, %v6060
      %6062 = vmatmul.f32.gmra.mxu0 %v5834
      %v6063 = vpop.f32.mrf.mxu0
      %v6064 = vadd.f32 0.0, %v6063
      %6065 = vmatmul.f32.gmra.mxu0 %v5837
      %v6066 = vpop.f32.mrf.mxu0
      %v6067 = vadd.f32 0.0, %v6066
      %6068 = vmatmul.f32.gmra.mxu0 %v5840
      %v6069 = vpop.f32.mrf.mxu0
      %v6070 = vadd.f32 0.0, %v6069
      %6071 = vmatmul.f32.gmra.mxu0 %v5843
      %v6072 = vpop.f32.mrf.mxu0
      %v6073 = vadd.f32 0.0, %v6072
      %6074 = vmatmul.f32.gmra.mxu0 %v5846
      %v6075 = vpop.f32.mrf.mxu0
      %v6076 = vadd.f32 0.0, %v6075
      %6077 = vmatmul.f32.gmra.mxu0 %v5849
      %v6078 = vpop.f32.mrf.mxu0
      %v6079 = vadd.f32 0.0, %v6078
      %6080 = vmatmul.f32.gmra.mxu0 %v5852
      %v6081 = vpop.f32.mrf.mxu0
      %v6082 = vadd.f32 0.0, %v6081
      %6083 = vmatmul.f32.gmra.mxu0 %v5855
      %v6084 = vpop.f32.mrf.mxu0
      %v6085 = vadd.f32 0.0, %v6084
      %6086 = vmatmul.f32.gmra.mxu0 %v5858
      %v6087 = vpop.f32.mrf.mxu0
      %v6088 = vadd.f32 0.0, %v6087
      %6089 = vmatmul.f32.gmra.mxu0 %v5861
      %v6090 = vpop.f32.mrf.mxu0
      %v6091 = vadd.f32 0.0, %v6090
      %6092 = vmatmul.f32.gmra.mxu0 %v5864
      %v6093 = vpop.f32.mrf.mxu0
      %v6094 = vadd.f32 0.0, %v6093
      %6095 = vmatmul.f32.gmra.mxu0 %v5867
      %v6096 = vpop.f32.mrf.mxu0
      %v6097 = vadd.f32 0.0, %v6096
      %6098 = vmatmul.f32.gmra.mxu0 %v5870
      %v6099 = vpop.f32.mrf.mxu0
      %v6100 = vadd.f32 0.0, %v6099
      %6101 = vmatmul.f32.gmra.mxu0 %v5873
      %v6102 = vpop.f32.mrf.mxu0
      %v6103 = vadd.f32 0.0, %v6102
      %6104 = vmatmul.f32.gmra.mxu0 %v5876
      %v6105 = vpop.f32.mrf.mxu0
      %v6106 = vadd.f32 0.0, %v6105
      %6107 = vdwg.mxu0
      %v6109 = vperm.slane %v5711, 0
      %v6110 = vperm.slane %v5711, 1
      %6113 = vxpose.xlu0.b32.start [1/16] %v6109, 128
      %6114 = vxpose.xlu0.b32.cont [2/16] 0.0, 128
      %6115 = vxpose.xlu0.b32.cont [3/16] 0.0, 128
      %6116 = vxpose.xlu0.b32.cont [4/16] 0.0, 128
      %6117 = vxpose.xlu0.b32.cont [5/16] 0.0, 128
      %6118 = vxpose.xlu0.b32.cont [6/16] 0.0, 128
      %6119 = vxpose.xlu0.b32.cont [7/16] 0.0, 128
      %6120 = vxpose.xlu0.b32.cont [8/16] 0.0, 128
      %6121 = vxpose.xlu0.b32.cont [9/16] 0.0, 128
      %6122 = vxpose.xlu0.b32.cont [10/16] 0.0, 128
      %6123 = vxpose.xlu0.b32.cont [11/16] 0.0, 128
      %6124 = vxpose.xlu0.b32.cont [12/16] 0.0, 128
      %6125 = vxpose.xlu0.b32.cont [13/16] 0.0, 128
      %6126 = vxpose.xlu0.b32.cont [14/16] 0.0, 128
      %6127 = vxpose.xlu0.b32.cont [15/16] 0.0, 128
      %6128 = vxpose.xlu0.b32.end [16/16] 0.0, 128
      %v6129 = vpop.trf.xlu0
      %v6130 = vpop.trf.xlu0
      %v6131 = vpop.trf.xlu0
      %v6132 = vpop.trf.xlu0
      %v6133 = vpop.trf.xlu0
      %v6134 = vpop.trf.xlu0
      %v6135 = vpop.trf.xlu0
      %v6136 = vpop.trf.xlu0
      %v6137 = vpop.trf.xlu0
      %v6138 = vpop.trf.xlu0
      %v6139 = vpop.trf.xlu0
      %v6140 = vpop.trf.xlu0
      %v6141 = vpop.trf.xlu0
      %v6142 = vpop.trf.xlu0
      %v6143 = vpop.trf.xlu0
      %v6144 = vpop.trf.xlu0
      %6145 = vxpose.xlu0.b32.start [1/16] %v6110, 128
      %6146 = vxpose.xlu0.b32.cont [2/16] 0.0, 128
      %6147 = vxpose.xlu0.b32.cont [3/16] 0.0, 128
      %6148 = vxpose.xlu0.b32.cont [4/16] 0.0, 128
      %6149 = vxpose.xlu0.b32.cont [5/16] 0.0, 128
      %6150 = vxpose.xlu0.b32.cont [6/16] 0.0, 128
      %6151 = vxpose.xlu0.b32.cont [7/16] 0.0, 128
      %6152 = vxpose.xlu0.b32.cont [8/16] 0.0, 128
      %6153 = vxpose.xlu0.b32.cont [9/16] 0.0, 128
      %6154 = vxpose.xlu0.b32.cont [10/16] 0.0, 128
      %6155 = vxpose.xlu0.b32.cont [11/16] 0.0, 128
      %6156 = vxpose.xlu0.b32.cont [12/16] 0.0, 128
      %6157 = vxpose.xlu0.b32.cont [13/16] 0.0, 128
      %6158 = vxpose.xlu0.b32.cont [14/16] 0.0, 128
      %6159 = vxpose.xlu0.b32.cont [15/16] 0.0, 128
      %6160 = vxpose.xlu0.b32.end [16/16] 0.0, 128
      %v6161 = vpop.trf.xlu0
      %v6162 = vpop.trf.xlu0
      %v6163 = vpop.trf.xlu0
      %v6164 = vpop.trf.xlu0
      %v6165 = vpop.trf.xlu0
      %v6166 = vpop.trf.xlu0
      %v6167 = vpop.trf.xlu0
      %v6168 = vpop.trf.xlu0
      %v6169 = vpop.trf.xlu0
      %v6170 = vpop.trf.xlu0
      %v6171 = vpop.trf.xlu0
      %v6172 = vpop.trf.xlu0
      %v6173 = vpop.trf.xlu0
      %v6174 = vpop.trf.xlu0
      %v6175 = vpop.trf.xlu0
      %v6176 = vpop.trf.xlu0
      %v6178 = vsel %vm5781, %v6129, 0
      %v6181 = vsel %vm5781, %v6130, 0
      %v6184 = vsel %vm5781, %v6131, 0
      %v6187 = vsel %vm5781, %v6132, 0
      %v6190 = vsel %vm5781, %v6133, 0
      %v6193 = vsel %vm5781, %v6134, 0
      %v6196 = vsel %vm5781, %v6135, 0
      %v6199 = vsel %vm5781, %v6136, 0
      %v6202 = vsel %vm5781, %v6137, 0
      %v6205 = vsel %vm5781, %v6138, 0
      %v6208 = vsel %vm5781, %v6139, 0
      %v6211 = vsel %vm5781, %v6140, 0
      %v6214 = vsel %vm5781, %v6141, 0
      %v6217 = vsel %vm5781, %v6142, 0
      %v6220 = vsel %vm5781, %v6143, 0
      %v6223 = vsel %vm5781, %v6144, 0
      %v6226 = vsel %vm5781, %v6161, 0
      %v6229 = vsel %vm5781, %v6162, 0
      %v6232 = vsel %vm5781, %v6163, 0
      %v6235 = vsel %vm5781, %v6164, 0
      %v6238 = vsel %vm5781, %v6165, 0
      %v6241 = vsel %vm5781, %v6166, 0
      %v6244 = vsel %vm5781, %v6167, 0
      %v6247 = vsel %vm5781, %v6168, 0
      %v6250 = vsel %vm5781, %v6169, 0
      %v6253 = vsel %vm5781, %v6170, 0
      %v6256 = vsel %vm5781, %v6171, 0
      %v6259 = vsel %vm5781, %v6172, 0
      %v6262 = vsel %vm5781, %v6173, 0
      %v6265 = vsel %vm5781, %v6174, 0
      %v6268 = vsel %vm5781, %v6175, 0
      %v6271 = vsel %vm5781, %v6176, 0
      %v6273 = vsel %vm5220, %v6109, 0
      %v6275 = vsel %vm5220, %v6110, 0
      %6277 = vmatpush.msra.mxu0 0.0
      %6278 = vmatpush.msra.mxu0 0.0
      %6279 = vmatpush.msra.mxu0 0.0
      %6280 = vmatpush.msra.mxu0 0.0
      %6281 = vmatpush.msra.mxu0 0.0
      %6282 = vmatpush.msra.mxu0 0.0
      %6283 = vmatpush.msra.mxu0 0.0
      %6284 = vmatpush.msra.mxu0 0.0
      %6285 = vmatpush.msra.mxu0 0.0
      %6286 = vmatpush.msra.mxu0 0.0
      %6287 = vmatpush.msra.mxu0 0.0
      %6288 = vmatpush.msra.mxu0 0.0
      %6289 = vmatpush.msra.mxu0 0.0
      %6290 = vmatpush.msra.mxu0 0.0
      %6291 = vmatpush.msra.mxu0 0.0
      %6292 = vmatpush.msra.mxu0 %v6273
      %6293 = vmatmul.f32.gmra.mxu0 %v6178
      %v6294 = vpop.f32.mrf.mxu0
      %v6295 = vadd.f32 0.0, %v6294
      %6296 = vmatmul.f32.gmra.mxu0 %v6181
      %v6297 = vpop.f32.mrf.mxu0
      %v6298 = vadd.f32 0.0, %v6297
      %6299 = vmatmul.f32.gmra.mxu0 %v6184
      %v6300 = vpop.f32.mrf.mxu0
      %v6301 = vadd.f32 0.0, %v6300
      %6302 = vmatmul.f32.gmra.mxu0 %v6187
      %v6303 = vpop.f32.mrf.mxu0
      %v6304 = vadd.f32 0.0, %v6303
      %6305 = vmatmul.f32.gmra.mxu0 %v6190
      %v6306 = vpop.f32.mrf.mxu0
      %v6307 = vadd.f32 0.0, %v6306
      %6308 = vmatmul.f32.gmra.mxu0 %v6193
      %v6309 = vpop.f32.mrf.mxu0
      %v6310 = vadd.f32 0.0, %v6309
      %6311 = vmatmul.f32.gmra.mxu0 %v6196
      %v6312 = vpop.f32.mrf.mxu0
      %v6313 = vadd.f32 0.0, %v6312
      %6314 = vmatmul.f32.gmra.mxu0 %v6199
      %v6315 = vpop.f32.mrf.mxu0
      %v6316 = vadd.f32 0.0, %v6315
      %6317 = vmatmul.f32.gmra.mxu0 %v6202
      %v6318 = vpop.f32.mrf.mxu0
      %v6319 = vadd.f32 0.0, %v6318
      %6320 = vmatmul.f32.gmra.mxu0 %v6205
      %v6321 = vpop.f32.mrf.mxu0
      %v6322 = vadd.f32 0.0, %v6321
      %6323 = vmatmul.f32.gmra.mxu0 %v6208
      %v6324 = vpop.f32.mrf.mxu0
      %v6325 = vadd.f32 0.0, %v6324
      %6326 = vmatmul.f32.gmra.mxu0 %v6211
      %v6327 = vpop.f32.mrf.mxu0
      %v6328 = vadd.f32 0.0, %v6327
      %6329 = vmatmul.f32.gmra.mxu0 %v6214
      %v6330 = vpop.f32.mrf.mxu0
      %v6331 = vadd.f32 0.0, %v6330
      %6332 = vmatmul.f32.gmra.mxu0 %v6217
      %v6333 = vpop.f32.mrf.mxu0
      %v6334 = vadd.f32 0.0, %v6333
      %6335 = vmatmul.f32.gmra.mxu0 %v6220
      %v6336 = vpop.f32.mrf.mxu0
      %v6337 = vadd.f32 0.0, %v6336
      %6338 = vmatmul.f32.gmra.mxu0 %v6223
      %v6339 = vpop.f32.mrf.mxu0
      %v6340 = vadd.f32 0.0, %v6339
      %6341 = vmatmul.f32.gmra.mxu0 %v6226
      %v6342 = vpop.f32.mrf.mxu0
      %v6343 = vadd.f32 0.0, %v6342
      %6344 = vmatmul.f32.gmra.mxu0 %v6229
      %v6345 = vpop.f32.mrf.mxu0
      %v6346 = vadd.f32 0.0, %v6345
      %6347 = vmatmul.f32.gmra.mxu0 %v6232
      %v6348 = vpop.f32.mrf.mxu0
      %v6349 = vadd.f32 0.0, %v6348
      %6350 = vmatmul.f32.gmra.mxu0 %v6235
      %v6351 = vpop.f32.mrf.mxu0
      %v6352 = vadd.f32 0.0, %v6351
      %6353 = vmatmul.f32.gmra.mxu0 %v6238
      %v6354 = vpop.f32.mrf.mxu0
      %v6355 = vadd.f32 0.0, %v6354
      %6356 = vmatmul.f32.gmra.mxu0 %v6241
      %v6357 = vpop.f32.mrf.mxu0
      %v6358 = vadd.f32 0.0, %v6357
      %6359 = vmatmul.f32.gmra.mxu0 %v6244
      %v6360 = vpop.f32.mrf.mxu0
      %v6361 = vadd.f32 0.0, %v6360
      %6362 = vmatmul.f32.gmra.mxu0 %v6247
      %v6363 = vpop.f32.mrf.mxu0
      %v6364 = vadd.f32 0.0, %v6363
      %6365 = vmatmul.f32.gmra.mxu0 %v6250
      %v6366 = vpop.f32.mrf.mxu0
      %v6367 = vadd.f32 0.0, %v6366
      %6368 = vmatmul.f32.gmra.mxu0 %v6253
      %v6369 = vpop.f32.mrf.mxu0
      %v6370 = vadd.f32 0.0, %v6369
      %6371 = vmatmul.f32.gmra.mxu0 %v6256
      %v6372 = vpop.f32.mrf.mxu0
      %v6373 = vadd.f32 0.0, %v6372
      %6374 = vmatmul.f32.gmra.mxu0 %v6259
      %v6375 = vpop.f32.mrf.mxu0
      %v6376 = vadd.f32 0.0, %v6375
      %6377 = vmatmul.f32.gmra.mxu0 %v6262
      %v6378 = vpop.f32.mrf.mxu0
      %v6379 = vadd.f32 0.0, %v6378
      %6380 = vmatmul.f32.gmra.mxu0 %v6265
      %v6381 = vpop.f32.mrf.mxu0
      %v6382 = vadd.f32 0.0, %v6381
      %6383 = vmatmul.f32.gmra.mxu0 %v6268
      %v6384 = vpop.f32.mrf.mxu0
      %v6385 = vadd.f32 0.0, %v6384
      %6386 = vmatmul.f32.gmra.mxu0 %v6271
      %v6387 = vpop.f32.mrf.mxu0
      %v6388 = vadd.f32 0.0, %v6387
      %6389 = vdwg.mxu0
      %6390 = vmatpush.msra.mxu0 0.0
      %6391 = vmatpush.msra.mxu0 0.0
      %6392 = vmatpush.msra.mxu0 0.0
      %6393 = vmatpush.msra.mxu0 0.0
      %6394 = vmatpush.msra.mxu0 0.0
      %6395 = vmatpush.msra.mxu0 0.0
      %6396 = vmatpush.msra.mxu0 0.0
      %6397 = vmatpush.msra.mxu0 0.0
      %6398 = vmatpush.msra.mxu0 0.0
      %6399 = vmatpush.msra.mxu0 0.0
      %6400 = vmatpush.msra.mxu0 0.0
      %6401 = vmatpush.msra.mxu0 0.0
      %6402 = vmatpush.msra.mxu0 0.0
      %6403 = vmatpush.msra.mxu0 0.0
      %6404 = vmatpush.msra.mxu0 0.0
      %6405 = vmatpush.msra.mxu0 %v6275
      %6406 = vmatmul.f32.gmra.mxu0 %v6178
      %v6407 = vpop.f32.mrf.mxu0
      %v6408 = vadd.f32 0.0, %v6407
      %6409 = vmatmul.f32.gmra.mxu0 %v6181
      %v6410 = vpop.f32.mrf.mxu0
      %v6411 = vadd.f32 0.0, %v6410
      %6412 = vmatmul.f32.gmra.mxu0 %v6184
      %v6413 = vpop.f32.mrf.mxu0
      %v6414 = vadd.f32 0.0, %v6413
      %6415 = vmatmul.f32.gmra.mxu0 %v6187
      %v6416 = vpop.f32.mrf.mxu0
      %v6417 = vadd.f32 0.0, %v6416
      %6418 = vmatmul.f32.gmra.mxu0 %v6190
      %v6419 = vpop.f32.mrf.mxu0
      %v6420 = vadd.f32 0.0, %v6419
      %6421 = vmatmul.f32.gmra.mxu0 %v6193
      %v6422 = vpop.f32.mrf.mxu0
      %v6423 = vadd.f32 0.0, %v6422
      %6424 = vmatmul.f32.gmra.mxu0 %v6196
      %v6425 = vpop.f32.mrf.mxu0
      %v6426 = vadd.f32 0.0, %v6425
      %6427 = vmatmul.f32.gmra.mxu0 %v6199
      %v6428 = vpop.f32.mrf.mxu0
      %v6429 = vadd.f32 0.0, %v6428
      %6430 = vmatmul.f32.gmra.mxu0 %v6202
      %v6431 = vpop.f32.mrf.mxu0
      %v6432 = vadd.f32 0.0, %v6431
      %6433 = vmatmul.f32.gmra.mxu0 %v6205
      %v6434 = vpop.f32.mrf.mxu0
      %v6435 = vadd.f32 0.0, %v6434
      %6436 = vmatmul.f32.gmra.mxu0 %v6208
      %v6437 = vpop.f32.mrf.mxu0
      %v6438 = vadd.f32 0.0, %v6437
      %6439 = vmatmul.f32.gmra.mxu0 %v6211
      %v6440 = vpop.f32.mrf.mxu0
      %v6441 = vadd.f32 0.0, %v6440
      %6442 = vmatmul.f32.gmra.mxu0 %v6214
      %v6443 = vpop.f32.mrf.mxu0
      %v6444 = vadd.f32 0.0, %v6443
      %6445 = vmatmul.f32.gmra.mxu0 %v6217
      %v6446 = vpop.f32.mrf.mxu0
      %v6447 = vadd.f32 0.0, %v6446
      %6448 = vmatmul.f32.gmra.mxu0 %v6220
      %v6449 = vpop.f32.mrf.mxu0
      %v6450 = vadd.f32 0.0, %v6449
      %6451 = vmatmul.f32.gmra.mxu0 %v6223
      %v6452 = vpop.f32.mrf.mxu0
      %v6453 = vadd.f32 0.0, %v6452
      %6454 = vmatmul.f32.gmra.mxu0 %v6226
      %v6455 = vpop.f32.mrf.mxu0
      %v6456 = vadd.f32 0.0, %v6455
      %6457 = vmatmul.f32.gmra.mxu0 %v6229
      %v6458 = vpop.f32.mrf.mxu0
      %v6459 = vadd.f32 0.0, %v6458
      %6460 = vmatmul.f32.gmra.mxu0 %v6232
      %v6461 = vpop.f32.mrf.mxu0
      %v6462 = vadd.f32 0.0, %v6461
      %6463 = vmatmul.f32.gmra.mxu0 %v6235
      %v6464 = vpop.f32.mrf.mxu0
      %v6465 = vadd.f32 0.0, %v6464
      %6466 = vmatmul.f32.gmra.mxu0 %v6238
      %v6467 = vpop.f32.mrf.mxu0
      %v6468 = vadd.f32 0.0, %v6467
      %6469 = vmatmul.f32.gmra.mxu0 %v6241
      %v6470 = vpop.f32.mrf.mxu0
      %v6471 = vadd.f32 0.0, %v6470
      %6472 = vmatmul.f32.gmra.mxu0 %v6244
      %v6473 = vpop.f32.mrf.mxu0
      %v6474 = vadd.f32 0.0, %v6473
      %6475 = vmatmul.f32.gmra.mxu0 %v6247
      %v6476 = vpop.f32.mrf.mxu0
      %v6477 = vadd.f32 0.0, %v6476
      %6478 = vmatmul.f32.gmra.mxu0 %v6250
      %v6479 = vpop.f32.mrf.mxu0
      %v6480 = vadd.f32 0.0, %v6479
      %6481 = vmatmul.f32.gmra.mxu0 %v6253
      %v6482 = vpop.f32.mrf.mxu0
      %v6483 = vadd.f32 0.0, %v6482
      %6484 = vmatmul.f32.gmra.mxu0 %v6256
      %v6485 = vpop.f32.mrf.mxu0
      %v6486 = vadd.f32 0.0, %v6485
      %6487 = vmatmul.f32.gmra.mxu0 %v6259
      %v6488 = vpop.f32.mrf.mxu0
      %v6489 = vadd.f32 0.0, %v6488
      %6490 = vmatmul.f32.gmra.mxu0 %v6262
      %v6491 = vpop.f32.mrf.mxu0
      %v6492 = vadd.f32 0.0, %v6491
      %6493 = vmatmul.f32.gmra.mxu0 %v6265
      %v6494 = vpop.f32.mrf.mxu0
      %v6495 = vadd.f32 0.0, %v6494
      %6496 = vmatmul.f32.gmra.mxu0 %v6268
      %v6497 = vpop.f32.mrf.mxu0
      %v6498 = vadd.f32 0.0, %v6497
      %6499 = vmatmul.f32.gmra.mxu0 %v6271
      %v6500 = vpop.f32.mrf.mxu0
      %v6501 = vadd.f32 0.0, %v6500
      %6502 = vdwg.mxu0
      %v6503 = vld [vmem:[#allocation2] sm:$0xff]
      %v6504 = vld [vmem:[#allocation2 + $0x8] sm:$0xff]
      %v6505 = vld [vmem:[#allocation2 + $0x10] sm:$0xff]
      %v6506 = vld [vmem:[#allocation2 + $0x18] sm:$0xff]
      %v6507 = vld [vmem:[#allocation2 + $0x20] sm:$0xff]
      %v6508 = vld [vmem:[#allocation2 + $0x28] sm:$0xff]
      %v6509 = vld [vmem:[#allocation2 + $0x30] sm:$0xff]
      %v6510 = vld [vmem:[#allocation2 + $0x38] sm:$0xff]
      %v6511 = vld [vmem:[#allocation2 + $0x40] sm:$0xff]
      %v6512 = vld [vmem:[#allocation2 + $0x48] sm:$0xff]
      %v6513 = vld [vmem:[#allocation2 + $0x50] sm:$0xff]
      %v6514 = vld [vmem:[#allocation2 + $0x58] sm:$0xff]
      %v6515 = vld [vmem:[#allocation2 + $0x60] sm:$0xff]
      %v6516 = vld [vmem:[#allocation2 + $0x68] sm:$0xff]
      %v6517 = vld [vmem:[#allocation2 + $0x70] sm:$0xff]
      %v6518 = vld [vmem:[#allocation2 + $0x78] sm:$0xff]
      %v6519 = vld [vmem:[#allocation2 + $0x80] sm:$0xff]
      %v6520 = vld [vmem:[#allocation2 + $0x88] sm:$0xff]
      %v6521 = vld [vmem:[#allocation2 + $0x90] sm:$0xff]
      %v6522 = vld [vmem:[#allocation2 + $0x98] sm:$0xff]
      %v6523 = vld [vmem:[#allocation2 + $0xa0] sm:$0xff]
      %v6524 = vld [vmem:[#allocation2 + $0xa8] sm:$0xff]
      %v6525 = vld [vmem:[#allocation2 + $0xb0] sm:$0xff]
      %v6526 = vld [vmem:[#allocation2 + $0xb8] sm:$0xff]
      %v6527 = vld [vmem:[#allocation2 + $0xc0] sm:$0xff]
      %v6528 = vld [vmem:[#allocation2 + $0xc8] sm:$0xff]
      %v6529 = vld [vmem:[#allocation2 + $0xd0] sm:$0xff]
      %v6530 = vld [vmem:[#allocation2 + $0xd8] sm:$0xff]
      %v6531 = vld [vmem:[#allocation2 + $0xe0] sm:$0xff]
      %v6532 = vld [vmem:[#allocation2 + $0xe8] sm:$0xff]
      %v6533 = vld [vmem:[#allocation2 + $0xf0] sm:$0xff]
      %v6534 = vld [vmem:[#allocation2 + $0xf8] sm:$0xff]
      %v6535 = vld [vmem:[#allocation2 + $0x100] sm:$0xff]
      %v6536 = vld [vmem:[#allocation2 + $0x108] sm:$0xff]
      %v6537 = vld [vmem:[#allocation2 + $0x110] sm:$0xff]
      %v6538 = vld [vmem:[#allocation2 + $0x118] sm:$0xff]
      %v6539 = vld [vmem:[#allocation2 + $0x120] sm:$0xff]
      %v6540 = vld [vmem:[#allocation2 + $0x128] sm:$0xff]
      %v6541 = vld [vmem:[#allocation2 + $0x130] sm:$0xff]
      %v6542 = vld [vmem:[#allocation2 + $0x138] sm:$0xff]
      %v6543 = vld [vmem:[#allocation2 + $0x140] sm:$0xff]
      %v6544 = vld [vmem:[#allocation2 + $0x148] sm:$0xff]
      %v6545 = vld [vmem:[#allocation2 + $0x150] sm:$0xff]
      %v6546 = vld [vmem:[#allocation2 + $0x158] sm:$0xff]
      %v6547 = vld [vmem:[#allocation2 + $0x160] sm:$0xff]
      %v6548 = vld [vmem:[#allocation2 + $0x168] sm:$0xff]
      %v6549 = vld [vmem:[#allocation2 + $0x170] sm:$0xff]
      %v6550 = vld [vmem:[#allocation2 + $0x178] sm:$0xff]
      %v6551 = vld [vmem:[#allocation2 + $0x180] sm:$0xff]
      %v6552 = vld [vmem:[#allocation2 + $0x188] sm:$0xff]
      %v6553 = vld [vmem:[#allocation2 + $0x190] sm:$0xff]
      %v6554 = vld [vmem:[#allocation2 + $0x198] sm:$0xff]
      %v6555 = vld [vmem:[#allocation2 + $0x1a0] sm:$0xff]
      %v6556 = vld [vmem:[#allocation2 + $0x1a8] sm:$0xff]
      %v6557 = vld [vmem:[#allocation2 + $0x1b0] sm:$0xff]
      %v6558 = vld [vmem:[#allocation2 + $0x1b8] sm:$0xff]
      %v6559 = vld [vmem:[#allocation2 + $0x1c0] sm:$0xff]
      %v6560 = vld [vmem:[#allocation2 + $0x1c8] sm:$0xff]
      %v6561 = vld [vmem:[#allocation2 + $0x1d0] sm:$0xff]
      %v6562 = vld [vmem:[#allocation2 + $0x1d8] sm:$0xff]
      %v6563 = vld [vmem:[#allocation2 + $0x1e0] sm:$0xff]
      %v6564 = vld [vmem:[#allocation2 + $0x1e8] sm:$0xff]
      %v6565 = vld [vmem:[#allocation2 + $0x1f0] sm:$0xff]
      %v6566 = vld [vmem:[#allocation2 + $0x1f8] sm:$0xff]
      %v6567 = vmul.f32 %v5900, 0.5
      %v6568 = vmul.f32 %v6013, 0.5
      %v6569 = vmul.f32 %v5903, 0.5
      %v6570 = vmul.f32 %v6016, 0.5
      %v6571 = vmul.f32 %v5906, 0.5
      %v6572 = vmul.f32 %v6019, 0.5
      %v6573 = vmul.f32 %v5909, 0.5
      %v6574 = vmul.f32 %v6022, 0.5
      %v6575 = vmul.f32 %v5912, 0.5
      %v6576 = vmul.f32 %v6025, 0.5
      %v6577 = vmul.f32 %v5915, 0.5
      %v6578 = vmul.f32 %v6028, 0.5
      %v6579 = vmul.f32 %v5918, 0.5
      %v6580 = vmul.f32 %v6031, 0.5
      %v6581 = vmul.f32 %v5921, 0.5
      %v6582 = vmul.f32 %v6034, 0.5
      %v6583 = vmul.f32 %v5924, 0.5
      %v6584 = vmul.f32 %v6037, 0.5
      %v6585 = vmul.f32 %v5927, 0.5
      %v6586 = vmul.f32 %v6040, 0.5
      %v6587 = vmul.f32 %v5930, 0.5
      %v6588 = vmul.f32 %v6043, 0.5
      %v6589 = vmul.f32 %v5933, 0.5
      %v6590 = vmul.f32 %v6046, 0.5
      %v6591 = vmul.f32 %v5936, 0.5
      %v6592 = vmul.f32 %v6049, 0.5
      %v6593 = vmul.f32 %v5939, 0.5
      %v6594 = vmul.f32 %v6052, 0.5
      %v6595 = vmul.f32 %v5942, 0.5
      %v6596 = vmul.f32 %v6055, 0.5
      %v6597 = vmul.f32 %v5945, 0.5
      %v6598 = vmul.f32 %v6058, 0.5
      %v6599 = vmul.f32 %v5948, 0.5
      %v6600 = vmul.f32 %v6061, 0.5
      %v6601 = vmul.f32 %v5951, 0.5
      %v6602 = vmul.f32 %v6064, 0.5
      %v6603 = vmul.f32 %v5954, 0.5
      %v6604 = vmul.f32 %v6067, 0.5
      %v6605 = vmul.f32 %v5957, 0.5
      %v6606 = vmul.f32 %v6070, 0.5
      %v6607 = vmul.f32 %v5960, 0.5
      %v6608 = vmul.f32 %v6073, 0.5
      %v6609 = vmul.f32 %v5963, 0.5
      %v6610 = vmul.f32 %v6076, 0.5
      %v6611 = vmul.f32 %v5966, 0.5
      %v6612 = vmul.f32 %v6079, 0.5
      %v6613 = vmul.f32 %v5969, 0.5
      %v6614 = vmul.f32 %v6082, 0.5
      %v6615 = vmul.f32 %v5972, 0.5
      %v6616 = vmul.f32 %v6085, 0.5
      %v6617 = vmul.f32 %v5975, 0.5
      %v6618 = vmul.f32 %v6088, 0.5
      %v6619 = vmul.f32 %v5978, 0.5
      %v6620 = vmul.f32 %v6091, 0.5
      %v6621 = vmul.f32 %v5981, 0.5
      %v6622 = vmul.f32 %v6094, 0.5
      %v6623 = vmul.f32 %v5984, 0.5
      %v6624 = vmul.f32 %v6097, 0.5
      %v6625 = vmul.f32 %v5987, 0.5
      %v6626 = vmul.f32 %v6100, 0.5
      %v6627 = vmul.f32 %v5990, 0.5
      %v6628 = vmul.f32 %v6103, 0.5
      %v6629 = vmul.f32 %v5993, 0.5
      %v6630 = vmul.f32 %v6106, 0.5
      %v6631 = vsub.f32 %v6503, %v6567
      %v6632 = vsub.f32 %v6504, %v6568
      %v6633 = vsub.f32 %v6505, %v6569
      %v6634 = vsub.f32 %v6506, %v6570
      %v6635 = vsub.f32 %v6507, %v6571
      %v6636 = vsub.f32 %v6508, %v6572
      %v6637 = vsub.f32 %v6509, %v6573
      %v6638 = vsub.f32 %v6510, %v6574
      %v6639 = vsub.f32 %v6511, %v6575
      %v6640 = vsub.f32 %v6512, %v6576
      %v6641 = vsub.f32 %v6513, %v6577
      %v6642 = vsub.f32 %v6514, %v6578
      %v6643 = vsub.f32 %v6515, %v6579
      %v6644 = vsub.f32 %v6516, %v6580
      %v6645 = vsub.f32 %v6517, %v6581
      %v6646 = vsub.f32 %v6518, %v6582
      %v6647 = vsub.f32 %v6519, %v6583
      %v6648 = vsub.f32 %v6520, %v6584
      %v6649 = vsub.f32 %v6521, %v6585
      %v6650 = vsub.f32 %v6522, %v6586
      %v6651 = vsub.f32 %v6523, %v6587
      %v6652 = vsub.f32 %v6524, %v6588
      %v6653 = vsub.f32 %v6525, %v6589
      %v6654 = vsub.f32 %v6526, %v6590
      %v6655 = vsub.f32 %v6527, %v6591
      %v6656 = vsub.f32 %v6528, %v6592
      %v6657 = vsub.f32 %v6529, %v6593
      %v6658 = vsub.f32 %v6530, %v6594
      %v6659 = vsub.f32 %v6531, %v6595
      %v6660 = vsub.f32 %v6532, %v6596
      %v6661 = vsub.f32 %v6533, %v6597
      %v6662 = vsub.f32 %v6534, %v6598
      %v6663 = vsub.f32 %v6535, %v6599
      %v6664 = vsub.f32 %v6536, %v6600
      %v6665 = vsub.f32 %v6537, %v6601
      %v6666 = vsub.f32 %v6538, %v6602
      %v6667 = vsub.f32 %v6539, %v6603
      %v6668 = vsub.f32 %v6540, %v6604
      %v6669 = vsub.f32 %v6541, %v6605
      %v6670 = vsub.f32 %v6542, %v6606
      %v6671 = vsub.f32 %v6543, %v6607
      %v6672 = vsub.f32 %v6544, %v6608
      %v6673 = vsub.f32 %v6545, %v6609
      %v6674 = vsub.f32 %v6546, %v6610
      %v6675 = vsub.f32 %v6547, %v6611
      %v6676 = vsub.f32 %v6548, %v6612
      %v6677 = vsub.f32 %v6549, %v6613
      %v6678 = vsub.f32 %v6550, %v6614
      %v6679 = vsub.f32 %v6551, %v6615
      %v6680 = vsub.f32 %v6552, %v6616
      %v6681 = vsub.f32 %v6553, %v6617
      %v6682 = vsub.f32 %v6554, %v6618
      %v6683 = vsub.f32 %v6555, %v6619
      %v6684 = vsub.f32 %v6556, %v6620
      %v6685 = vsub.f32 %v6557, %v6621
      %v6686 = vsub.f32 %v6558, %v6622
      %v6687 = vsub.f32 %v6559, %v6623
      %v6688 = vsub.f32 %v6560, %v6624
      %v6689 = vsub.f32 %v6561, %v6625
      %v6690 = vsub.f32 %v6562, %v6626
      %v6691 = vsub.f32 %v6563, %v6627
      %v6692 = vsub.f32 %v6564, %v6628
      %v6693 = vsub.f32 %v6565, %v6629
      %v6694 = vsub.f32 %v6566, %v6630
      %v6695 = vrcp.pop 2.0
      %v6696 = vmul.f32 2.0, %v6695
      %v6697 = vsub.f32 1.0, %v6696
      %v6698 = vmul.f32 %v6695, %v6697
      %v6699 = vadd.f32 %v6695, %v6698
      %vm6700 = vweird.f32 %v6695
      %v6701 = vsel %vm6700, %v6695, %v6699
      %s6702 = vtos %v6701
      %s6703 = smul.f32 %s5251, %s6702
      %v6704 = vstv %s6703
      %v6705 = vmul.f32 %v6295, %v6704
      %v6706 = vmul.f32 %v6408, %v6704
      %v6707 = vmul.f32 %v6298, %v6704
      %v6708 = vmul.f32 %v6411, %v6704
      %v6709 = vmul.f32 %v6301, %v6704
      %v6710 = vmul.f32 %v6414, %v6704
      %v6711 = vmul.f32 %v6304, %v6704
      %v6712 = vmul.f32 %v6417, %v6704
      %v6713 = vmul.f32 %v6307, %v6704
      %v6714 = vmul.f32 %v6420, %v6704
      %v6715 = vmul.f32 %v6310, %v6704
      %v6716 = vmul.f32 %v6423, %v6704
      %v6717 = vmul.f32 %v6313, %v6704
      %v6718 = vmul.f32 %v6426, %v6704
      %v6719 = vmul.f32 %v6316, %v6704
      %v6720 = vmul.f32 %v6429, %v6704
      %v6721 = vmul.f32 %v6319, %v6704
      %v6722 = vmul.f32 %v6432, %v6704
      %v6723 = vmul.f32 %v6322, %v6704
      %v6724 = vmul.f32 %v6435, %v6704
      %v6725 = vmul.f32 %v6325, %v6704
      %v6726 = vmul.f32 %v6438, %v6704
      %v6727 = vmul.f32 %v6328, %v6704
      %v6728 = vmul.f32 %v6441, %v6704
      %v6729 = vmul.f32 %v6331, %v6704
      %v6730 = vmul.f32 %v6444, %v6704
      %v6731 = vmul.f32 %v6334, %v6704
      %v6732 = vmul.f32 %v6447, %v6704
      %v6733 = vmul.f32 %v6337, %v6704
      %v6734 = vmul.f32 %v6450, %v6704
      %v6735 = vmul.f32 %v6340, %v6704
      %v6736 = vmul.f32 %v6453, %v6704
      %v6737 = vmul.f32 %v6343, %v6704
      %v6738 = vmul.f32 %v6456, %v6704
      %v6739 = vmul.f32 %v6346, %v6704
      %v6740 = vmul.f32 %v6459, %v6704
      %v6741 = vmul.f32 %v6349, %v6704
      %v6742 = vmul.f32 %v6462, %v6704
      %v6743 = vmul.f32 %v6352, %v6704
      %v6744 = vmul.f32 %v6465, %v6704
      %v6745 = vmul.f32 %v6355, %v6704
      %v6746 = vmul.f32 %v6468, %v6704
      %v6747 = vmul.f32 %v6358, %v6704
      %v6748 = vmul.f32 %v6471, %v6704
      %v6749 = vmul.f32 %v6361, %v6704
      %v6750 = vmul.f32 %v6474, %v6704
      %v6751 = vmul.f32 %v6364, %v6704
      %v6752 = vmul.f32 %v6477, %v6704
      %v6753 = vmul.f32 %v6367, %v6704
      %v6754 = vmul.f32 %v6480, %v6704
      %v6755 = vmul.f32 %v6370, %v6704
      %v6756 = vmul.f32 %v6483, %v6704
      %v6757 = vmul.f32 %v6373, %v6704
      %v6758 = vmul.f32 %v6486, %v6704
      %v6759 = vmul.f32 %v6376, %v6704
      %v6760 = vmul.f32 %v6489, %v6704
      %v6761 = vmul.f32 %v6379, %v6704
      %v6762 = vmul.f32 %v6492, %v6704
      %v6763 = vmul.f32 %v6382, %v6704
      %v6764 = vmul.f32 %v6495, %v6704
      %v6765 = vmul.f32 %v6385, %v6704
      %v6766 = vmul.f32 %v6498, %v6704
      %v6767 = vmul.f32 %v6388, %v6704
      %v6768 = vmul.f32 %v6501, %v6704
      %v6769 = vadd.f32 %v6631, %v6705
      %v6770 = vadd.f32 %v6632, %v6706
      %v6771 = vadd.f32 %v6633, %v6707
      %v6772 = vadd.f32 %v6634, %v6708
      %v6773 = vadd.f32 %v6635, %v6709
      %v6774 = vadd.f32 %v6636, %v6710
      %v6775 = vadd.f32 %v6637, %v6711
      %v6776 = vadd.f32 %v6638, %v6712
      %v6777 = vadd.f32 %v6639, %v6713
      %v6778 = vadd.f32 %v6640, %v6714
      %v6779 = vadd.f32 %v6641, %v6715
      %v6780 = vadd.f32 %v6642, %v6716
      %v6781 = vadd.f32 %v6643, %v6717
      %v6782 = vadd.f32 %v6644, %v6718
      %v6783 = vadd.f32 %v6645, %v6719
      %v6784 = vadd.f32 %v6646, %v6720
      %v6785 = vadd.f32 %v6647, %v6721
      %v6786 = vadd.f32 %v6648, %v6722
      %v6787 = vadd.f32 %v6649, %v6723
      %v6788 = vadd.f32 %v6650, %v6724
      %v6789 = vadd.f32 %v6651, %v6725
      %v6790 = vadd.f32 %v6652, %v6726
      %v6791 = vadd.f32 %v6653, %v6727
      %v6792 = vadd.f32 %v6654, %v6728
      %v6793 = vadd.f32 %v6655, %v6729
      %v6794 = vadd.f32 %v6656, %v6730
      %v6795 = vadd.f32 %v6657, %v6731
      %v6796 = vadd.f32 %v6658, %v6732
      %v6797 = vadd.f32 %v6659, %v6733
      %v6798 = vadd.f32 %v6660, %v6734
      %v6799 = vadd.f32 %v6661, %v6735
      %v6800 = vadd.f32 %v6662, %v6736
      %v6801 = vadd.f32 %v6663, %v6737
      %v6802 = vadd.f32 %v6664, %v6738
      %v6803 = vadd.f32 %v6665, %v6739
      %v6804 = vadd.f32 %v6666, %v6740
      %v6805 = vadd.f32 %v6667, %v6741
      %v6806 = vadd.f32 %v6668, %v6742
      %v6807 = vadd.f32 %v6669, %v6743
      %v6808 = vadd.f32 %v6670, %v6744
      %v6809 = vadd.f32 %v6671, %v6745
      %v6810 = vadd.f32 %v6672, %v6746
      %v6811 = vadd.f32 %v6673, %v6747
      %v6812 = vadd.f32 %v6674, %v6748
      %v6813 = vadd.f32 %v6675, %v6749
      %v6814 = vadd.f32 %v6676, %v6750
      %v6815 = vadd.f32 %v6677, %v6751
      %v6816 = vadd.f32 %v6678, %v6752
      %v6817 = vadd.f32 %v6679, %v6753
      %v6818 = vadd.f32 %v6680, %v6754
      %v6819 = vadd.f32 %v6681, %v6755
      %v6820 = vadd.f32 %v6682, %v6756
      %v6821 = vadd.f32 %v6683, %v6757
      %v6822 = vadd.f32 %v6684, %v6758
      %v6823 = vadd.f32 %v6685, %v6759
      %v6824 = vadd.f32 %v6686, %v6760
      %v6825 = vadd.f32 %v6687, %v6761
      %v6826 = vadd.f32 %v6688, %v6762
      %v6827 = vadd.f32 %v6689, %v6763
      %v6828 = vadd.f32 %v6690, %v6764
      %v6829 = vadd.f32 %v6691, %v6765
      %v6830 = vadd.f32 %v6692, %v6766
      %v6831 = vadd.f32 %v6693, %v6767
      %v6832 = vadd.f32 %v6694, %v6768
      %v6833 = vmul.f32 %v6769, %v6769
      %v6834 = vmul.f32 %v6770, %v6770
      %v6835 = vmul.f32 %v6771, %v6771
      %v6836 = vmul.f32 %v6772, %v6772
      %v6837 = vmul.f32 %v6773, %v6773
      %v6838 = vmul.f32 %v6774, %v6774
      %v6839 = vmul.f32 %v6775, %v6775
      %v6840 = vmul.f32 %v6776, %v6776
      %v6841 = vmul.f32 %v6777, %v6777
      %v6842 = vmul.f32 %v6778, %v6778
      %v6843 = vmul.f32 %v6779, %v6779
      %v6844 = vmul.f32 %v6780, %v6780
      %v6845 = vmul.f32 %v6781, %v6781
      %v6846 = vmul.f32 %v6782, %v6782
      %v6847 = vmul.f32 %v6783, %v6783
      %v6848 = vmul.f32 %v6784, %v6784
      %v6849 = vmul.f32 %v6785, %v6785
      %v6850 = vmul.f32 %v6786, %v6786
      %v6851 = vmul.f32 %v6787, %v6787
      %v6852 = vmul.f32 %v6788, %v6788
      %v6853 = vmul.f32 %v6789, %v6789
      %v6854 = vmul.f32 %v6790, %v6790
      %v6855 = vmul.f32 %v6791, %v6791
      %v6856 = vmul.f32 %v6792, %v6792
      %v6857 = vmul.f32 %v6793, %v6793
      %v6858 = vmul.f32 %v6794, %v6794
      %v6859 = vmul.f32 %v6795, %v6795
      %v6860 = vmul.f32 %v6796, %v6796
      %v6861 = vmul.f32 %v6797, %v6797
      %v6862 = vmul.f32 %v6798, %v6798
      %v6863 = vmul.f32 %v6799, %v6799
      %v6864 = vmul.f32 %v6800, %v6800
      %v6865 = vmul.f32 %v6801, %v6801
      %v6866 = vmul.f32 %v6802, %v6802
      %v6867 = vmul.f32 %v6803, %v6803
      %v6868 = vmul.f32 %v6804, %v6804
      %v6869 = vmul.f32 %v6805, %v6805
      %v6870 = vmul.f32 %v6806, %v6806
      %v6871 = vmul.f32 %v6807, %v6807
      %v6872 = vmul.f32 %v6808, %v6808
      %v6873 = vmul.f32 %v6809, %v6809
      %v6874 = vmul.f32 %v6810, %v6810
      %v6875 = vmul.f32 %v6811, %v6811
      %v6876 = vmul.f32 %v6812, %v6812
      %v6877 = vmul.f32 %v6813, %v6813
      %v6878 = vmul.f32 %v6814, %v6814
      %v6879 = vmul.f32 %v6815, %v6815
      %v6880 = vmul.f32 %v6816, %v6816
      %v6881 = vmul.f32 %v6817, %v6817
      %v6882 = vmul.f32 %v6818, %v6818
      %v6883 = vmul.f32 %v6819, %v6819
      %v6884 = vmul.f32 %v6820, %v6820
      %v6885 = vmul.f32 %v6821, %v6821
      %v6886 = vmul.f32 %v6822, %v6822
      %v6887 = vmul.f32 %v6823, %v6823
      %v6888 = vmul.f32 %v6824, %v6824
      %v6889 = vmul.f32 %v6825, %v6825
      %v6890 = vmul.f32 %v6826, %v6826
      %v6891 = vmul.f32 %v6827, %v6827
      %v6892 = vmul.f32 %v6828, %v6828
      %v6893 = vmul.f32 %v6829, %v6829
      %v6894 = vmul.f32 %v6830, %v6830
      %v6895 = vmul.f32 %v6831, %v6831
      %v6896 = vmul.f32 %v6832, %v6832
      %v6897 = vadd.f32 %v6833, %v6834
      %v6898 = vadd.f32 %v6897, %v6835
      %v6899 = vadd.f32 %v6898, %v6836
      %v6900 = vadd.f32 %v6899, %v6837
      %v6901 = vadd.f32 %v6900, %v6838
      %v6902 = vadd.f32 %v6901, %v6839
      %v6903 = vadd.f32 %v6902, %v6840
      %v6904 = vadd.f32 %v6903, %v6841
      %v6905 = vadd.f32 %v6904, %v6842
      %v6906 = vadd.f32 %v6905, %v6843
      %v6907 = vadd.f32 %v6906, %v6844
      %v6908 = vadd.f32 %v6907, %v6845
      %v6909 = vadd.f32 %v6908, %v6846
      %v6910 = vadd.f32 %v6909, %v6847
      %v6911 = vadd.f32 %v6910, %v6848
      %v6912 = vadd.f32 %v6911, %v6849
      %v6913 = vadd.f32 %v6912, %v6850
      %v6914 = vadd.f32 %v6913, %v6851
      %v6915 = vadd.f32 %v6914, %v6852
      %v6916 = vadd.f32 %v6915, %v6853
      %v6917 = vadd.f32 %v6916, %v6854
      %v6918 = vadd.f32 %v6917, %v6855
      %v6919 = vadd.f32 %v6918, %v6856
      %v6920 = vadd.f32 %v6919, %v6857
      %v6921 = vadd.f32 %v6920, %v6858
      %v6922 = vadd.f32 %v6921, %v6859
      %v6923 = vadd.f32 %v6922, %v6860
      %v6924 = vadd.f32 %v6923, %v6861
      %v6925 = vadd.f32 %v6924, %v6862
      %v6926 = vadd.f32 %v6925, %v6863
      %v6927 = vadd.f32 %v6926, %v6864
      %v6928 = vadd.f32 %v6927, %v6865
      %v6929 = vadd.f32 %v6928, %v6866
      %v6930 = vadd.f32 %v6929, %v6867
      %v6931 = vadd.f32 %v6930, %v6868
      %v6932 = vadd.f32 %v6931, %v6869
      %v6933 = vadd.f32 %v6932, %v6870
      %v6934 = vadd.f32 %v6933, %v6871
      %v6935 = vadd.f32 %v6934, %v6872
      %v6936 = vadd.f32 %v6935, %v6873
      %v6937 = vadd.f32 %v6936, %v6874
      %v6938 = vadd.f32 %v6937, %v6875
      %v6939 = vadd.f32 %v6938, %v6876
      %v6940 = vadd.f32 %v6939, %v6877
      %v6941 = vadd.f32 %v6940, %v6878
      %v6942 = vadd.f32 %v6941, %v6879
      %v6943 = vadd.f32 %v6942, %v6880
      %v6944 = vadd.f32 %v6943, %v6881
      %v6945 = vadd.f32 %v6944, %v6882
      %v6946 = vadd.f32 %v6945, %v6883
      %v6947 = vadd.f32 %v6946, %v6884
      %v6948 = vadd.f32 %v6947, %v6885
      %v6949 = vadd.f32 %v6948, %v6886
      %v6950 = vadd.f32 %v6949, %v6887
      %v6951 = vadd.f32 %v6950, %v6888
      %v6952 = vadd.f32 %v6951, %v6889
      %v6953 = vadd.f32 %v6952, %v6890
      %v6954 = vadd.f32 %v6953, %v6891
      %v6955 = vadd.f32 %v6954, %v6892
      %v6956 = vadd.f32 %v6955, %v6893
      %v6957 = vadd.f32 %v6956, %v6894
      %v6958 = vadd.f32 %v6957, %v6895
      %v6959 = vadd.f32 %v6958, %v6896
      %6960 = vadd.xlane.f32.xlu0 %v6959
      %v6961 = vpop.xlane.xlu0 %6960
      %v6962 = vrot.slane %v6961, 4
      %v6963 = vadd.f32 %v6961, %v6962
      %v6964 = vrot.slane %v6963, 2
      %v6965 = vadd.f32 %v6963, %v6964
      %v6966 = vrot.slane %v6965, 1
      %v6967 = vadd.f32 %v6965, %v6966
      %s6968 = vtos %v6967
      %v6969 = vstv %s6968
      %v6970 = vrsqrt.pop %v6969
      %v6971 = vmul.f32 %v6970, %v6969
      %v6972 = vmul.f32 %v6971, %v6970
      %v6973 = vmul.f32 0.5, %v6972
      %v6974 = vsub.f32 1.5, %v6973
      %v6975 = vmul.f32 %v6970, %v6974
      %v6976 = vmul.f32 %v6969, %v6975
      %vm6977 = vcmp.eq.f32.partialorder %v6969, inf
      %v6978 = vsel %vm6977, %v6969, %v6976
      %vm6979 = vcmp.eq.f32.partialorder %v6969, 0.0
      %v6980 = vand.u32 %v6969, 2147483648
      %v6981 = vsel %vm6979, %v6980, %v6978
      %v6982 = vmul.f32 %v6981, 3.8146973e-06
      %vm6983 = vcmask 0
      %6984 = vst.msk [vmem:[#allocation9] sm:$0x1] %vm6983, %v6982
    $region49: #{_lambda_.1} parent=1 // pred_fallthru
      _
    // Predicated region
    $region50: #{_lambda_.1} parent=1 // pred_check
      _
    $region51: #{_lambda_.1} parent=1 // pred_check_branch
      %6986 = sbr.rel (0) target = $region53
    $region52: #{_lambda_.1} parent=1 // pred_region
      _
    $region53: #{_lambda_.1} parent=1 // pred_fallthru
      _
    // Predicated region
    $region54: #{_lambda_.1} parent=1 // pred_check
      _
    $region55: #{_lambda_.1} parent=1 // pred_check_branch
      %6988 = sbr.rel (0) target = $region57
    $region56: #{_lambda_.1} parent=1 // pred_region
      %6990 = vsyncadd [#allocation8], 0
      %s6992 = sshll.u32 [#allocation9], 4
      %s6993 = int_to_ptr.vmem [resolvable:$true] %s6992
      %s6994 = sshll.u32 %s10, 4
      %s6995 = int_to_ptr.hbm [resolvable:$true] %s6994
      %6997 = dma.vmem_to_hbm [thread:$0]  %s6993, 16, %s6995, [#allocation8]
    $region57: #{_lambda_.1} parent=1 // pred_fallthru
      _
    // Predicated region
    $region58: #{_lambda_.1} parent=1 // pred_check
      _
    $region59: #{_lambda_.1} parent=1 // pred_check_branch
      %6999 = sbr.rel (0) target = $region61
    $region60: #{_lambda_.1} parent=1 // pred_region
      _
    $region61: #{_lambda_.1} parent=1 // pred_fallthru
      _
    // Predicated region
    $region62: #{_lambda_.1} parent=1 // pred_check
      _
    $region63: #{_lambda_.1} parent=1 // pred_check_branch
      %7001 = sbr.rel (0) target = $region65
    $region64: #{_lambda_.1} parent=1 // pred_region
      %7003 = dma.done [#allocation8], 16
    $region65: #{_lambda_.1} parent=1 // pred_fallthru
      _
    %7004 = vsyncpa [#allocation7], 1
    %7005 = vsyncpa [#allocation8], 1

</llo_original>
